<compile_context>
chip_gen: v7x
topology: tpu7x:2x2x1
jax: 0.10.0
libtpu: 0.0.40
codegen_flags: <defaults>
</compile_context>

<pallas_src>
import jax
import jax.numpy as jnp
from jax.experimental import pallas as pl
from jax.experimental.pallas import tpu as pltpu

# ---------------- model hyper-parameters (match the PyTorch __init__) ----------
H_K_SZS = [2, 2, 2, 2, 2, 1, 1]
H_DILS = [1, 2, 4, 8, 16, 1, 1]
K2_DILS = tuple(d for k, d in zip(H_K_SZS, H_DILS) if k == 2)   # (1, 2, 4, 8, 16)
N_K2 = len(K2_DILS)                                              # 5
N_K1 = sum(1 for k in H_K_SZS if k == 1)                         # 2


# ------------------------------- Pallas kernel ---------------------------------
def _seq_classifier_kernel(
    x_ref,                     # (C_in, T)       f32
    wf_ref, bf_ref,            # (C, C_in) [mm dtype], (C, 1) f32
    wk2p_ref, wk2c_ref,        # (5, 2C, C) taps at t-dil / t
    bk2_ref,                   # (5, 2C, 1)
    wk1_ref, bk1_ref,          # (2, 2C, C), (2, 2C, 1)
    wpost_ref, bpost_ref,      # (4, C, C), (4, C, 1)  [last_1x1 ++ classifier]
    out_ref,                   # (C, T)          f32
):
    f32 = jnp.float32

    def mm(w, a):
        # MXU matmul: activations cast to the weight dtype (f32 or bf16),
        # accumulation always f32.
        return jnp.dot(w, a.astype(w.dtype), preferred_element_type=f32)

    x = x_ref[...]                                          # (C_in, T)

    # front_1x1: Conv1d(input_ch, e_ch, 1)
    h = mm(wf_ref[...], x) + bf_ref[...]                    # (C, T) f32
    C, T = h.shape

    # single (1, T) time-index row, broadcast in the per-layer mask (1 vreg)
    t_idx = jax.lax.broadcasted_iota(jnp.int32, (1, T), 1)

    # HighwayDCBlock: 5 causal dilated k=2 highway layers.
    # output[t] = Wprev @ h[t-dil] + Wcur @ h[t] + b  (left-zero padded / causal)
    for l, dil in enumerate(K2_DILS):
        rolled = pltpu.roll(h, shift=dil, axis=1)           # XLU lane rotate
        h_shift = jnp.where(t_idx < dil, 0.0, rolled)       # causal zero-pad mask
        conv = mm(wk2p_ref[l], h_shift) + mm(wk2c_ref[l], h) + bk2_ref[l]
        sig = jax.nn.sigmoid(conv[:C])
        h = h + sig * (conv[C:] - h)                        # highway combine

    # HighwayDCBlock: 2 k=1 highway layers
    for l in range(N_K1):
        conv = mm(wk1_ref[l], h) + bk1_ref[l]
        sig = jax.nn.sigmoid(conv[:C])
        h = h + sig * (conv[C:] - h)

    # last_1x1: Conv1d -> ReLU -> Conv1d -> ReLU
    h = jnp.maximum(mm(wpost_ref[0], h) + bpost_ref[0], 0.0)
    h = jnp.maximum(mm(wpost_ref[1], h) + bpost_ref[1], 0.0)
    # classifier: Conv1d -> ReLU -> Conv1d
    h = jnp.maximum(mm(wpost_ref[2], h) + bpost_ref[2], 0.0)
    out_ref[...] = mm(wpost_ref[3], h) + bpost_ref[3]


# ------------------------------- wrapper ----------------------------------------
def prepare_params(params, use_bf16_matmul=False):
    """One-time (outside the hot jit path) cast of matmul weights. Biases stay f32."""
    mm_dtype = jnp.bfloat16 if use_bf16_matmul else jnp.float32
    p = dict(params)
    for k in ("wf", "wk2p", "wk2c", "wk1", "wpost"):
        p[k] = params[k].astype(mm_dtype)
    return p


@jax.jit
def seq_classifier_forward(x, params):
    B, C_in, T = x.shape
    C = params["bf"].shape[0]
    n_k2 = params["wk2p"].shape[0]
    n_k1 = params["wk1"].shape[0]

    const2 = lambda b: (0, 0)
    const3 = lambda b: (0, 0, 0)

    # advisory cost estimate so XLA sizes/schedules the custom call sensibly
    flops_per_seq = (
        2 * C * C_in * T
        + n_k2 * 2 * (2 * (2 * C) * C * T)     # two (2C,C)@(C,T) matmuls per layer
        + n_k1 * (2 * (2 * C) * C * T)
        + 4 * (2 * C * C * T)
    )
    weight_bytes = sum(int(v.size) * v.dtype.itemsize for v in params.values())
    cost = pl.CostEstimate(
        flops=B * flops_per_seq,
        transcendentals=B * (n_k2 + n_k1) * C * T,
        bytes_accessed=4 * B * (C_in * T + C * T) + weight_bytes,
    )

    out = pl.pallas_call(
        _seq_classifier_kernel,
        out_shape=jax.ShapeDtypeStruct((B, C, T), jnp.float32),
        grid=(B,),
        in_specs=[
            # per-sequence activation block; batch dim squeezed out of the kernel ref
            pl.BlockSpec((None, C_in, T), lambda b: (b, 0, 0)),
            # weights: constant index_map -> DMA'd once, VMEM-resident across grid
            pl.BlockSpec((C, C_in), const2),
            pl.BlockSpec((C, 1), const2),
            pl.BlockSpec((n_k2, 2 * C, C), const3),
            pl.BlockSpec((n_k2, 2 * C, C), const3),
            pl.BlockSpec((n_k2, 2 * C, 1), const3),
            pl.BlockSpec((n_k1, 2 * C, C), const3),
            pl.BlockSpec((n_k1, 2 * C, 1), const3),
            pl.BlockSpec((4, C, C), const3),
            pl.BlockSpec((4, C, 1), const3),
        ],
        out_specs=pl.BlockSpec((None, C, T), lambda b: (b, 0, 0)),
        compiler_params=pltpu.CompilerParams(
            dimension_semantics=("parallel",)),   # shard sequences across v7x's 2 TCs
        cost_estimate=cost,
    )(x, params["wf"], params["bf"],
      params["wk2p"], params["wk2c"], params["bk2"],
      params["wk1"], params["bk1"],
      params["wpost"], params["bpost"])

    # .squeeze(1) in PyTorch: only squeezes if the channel dim is 1.
    if out.shape[1] == 1:
        out = jnp.squeeze(out, axis=1)
    return out


# ----------------------- deterministic parameter init ---------------------------
def init_params(key, input_ch, e_ch):
    C = e_ch
    ks = list(jax.random.split(key, 9))

    def u(k, shape, fan_in):
        bound = 1.0 / jnp.sqrt(jnp.float32(fan_in))
        return jax.random.uniform(k, shape, jnp.float32, -bound, bound)

    return {
        "wf": u(ks[0], (C, input_ch), input_ch),
        "bf": u(ks[1], (C, 1), input_ch),
        # k=2 highway taps: wk2p is the t-dil tap (PyTorch weight[:,:,0]),
        # wk2c is the t tap (weight[:,:,1]).
        "wk2p": u(ks[2], (N_K2, 2 * C, C), 2 * C),
        "wk2c": u(ks[3], (N_K2, 2 * C, C), 2 * C),
        "bk2": u(ks[4], (N_K2, 2 * C, 1), 2 * C),
        # k=1 highway layers
        "wk1": u(ks[5], (N_K1, 2 * C, C), C),
        "bk1": u(ks[6], (N_K1, 2 * C, 1), C),
        # stacked 1x1 tail: [last_1x1.conv1, last_1x1.conv2, classifier.conv1, classifier.conv2]
        "wpost": u(ks[7], (4, C, C), C),
        "bpost": u(ks[8], (4, C, 1), C),
    }


# --------------------------- pure-JAX reference ----------------------------------
def reference_forward(x, params, matmul_dtype=jnp.float32):
    def mm(w, a):
        return jnp.dot(w.astype(matmul_dtype), a.astype(matmul_dtype),
                       preferred_element_type=jnp.float32)

    def one(xb):                                   # xb: (C_in, T)
        h = mm(params["wf"], xb) + params["bf"]
        C, T = h.shape
        for l, dil in enumerate(K2_DILS):
            h_pad = jnp.pad(h, ((0, 0), (dil, 0)))[:, :T]      # causal left pad
            conv = (mm(params["wk2p"][l], h_pad) + mm(params["wk2c"][l], h)
                    + params["bk2"][l])
            sig = jax.nn.sigmoid(conv[:C])
            h = sig * conv[C:] + (1.0 - sig) * h
        for l in range(N_K1):
            conv = mm(params["wk1"][l], h) + params["bk1"][l]
            sig = jax.nn.sigmoid(conv[:C])
            h = sig * conv[C:] + (1.0 - sig) * h
        h = jax.nn.relu(mm(params["wpost"][0], h) + params["bpost"][0])
        h = jax.nn.relu(mm(params["wpost"][1], h) + params["bpost"][1])
        h = jax.nn.relu(mm(params["wpost"][2], h) + params["bpost"][2])
        h = mm(params["wpost"][3], h) + params["bpost"][3]
        return h

    out = jax.vmap(one)(x)
    if out.shape[1] == 1:
        out = jnp.squeeze(out, axis=1)
    return out


# --------------------------------- main ------------------------------------------
if __name__ == "__main__":
    B, INPUT_CH, E_CH, T = 2, 4, 32, 128

    key = jax.random.PRNGKey(0)
    k_x, k_p = jax.random.split(key)
    x = jax.random.normal(k_x, (B, INPUT_CH, T), jnp.float32)
    params = init_params(k_p, INPUT_CH, E_CH)

    # f32 path (matches PyTorch numerics)
    params_f32 = prepare_params(params, use_bf16_matmul=False)
    out = jax.block_until_ready(seq_classifier_forward(x, params_f32))
    ref = jax.block_until_ready(reference_forward(x, params))
    assert out.shape == ref.shape == (B, E_CH, T), (out.shape, ref.shape)
    assert jnp.allclose(out, ref, atol=1e-4, rtol=1e-4), \
        float(jnp.max(jnp.abs(out - ref)))

    # bf16-matmul fast path (valid on v5e/v6e/v7x MXUs), checked vs bf16 reference
    params_bf16 = prepare_params(params, use_bf16_matmul=True)
    out_bf = jax.block_until_ready(seq_classifier_forward(x, params_bf16))
    ref_bf = jax.block_until_ready(
        reference_forward(x, params, matmul_dtype=jnp.bfloat16))
    assert out_bf.shape == (B, E_CH, T)
    assert jnp.allclose(out_bf, ref_bf, atol=1e-2, rtol=1e-2), \
        float(jnp.max(jnp.abs(out_bf - ref_bf)))

    print("KERNEL_OK")
</pallas_src>

<mosaic_0001>
module attributes {stable_mosaic.version = 11 : i64} {
  func.func @_seq_classifier_kernel(%arg0: i32, %arg1: memref<1x4x128xf32, #tpu.memory_space<vmem>>, %arg2: memref<32x4xf32, #tpu.memory_space<vmem>>, %arg3: memref<32x1xf32, #tpu.memory_space<vmem>>, %arg4: memref<5x64x32xf32, #tpu.memory_space<vmem>>, %arg5: memref<5x64x32xf32, #tpu.memory_space<vmem>>, %arg6: memref<5x64x1xf32, #tpu.memory_space<vmem>>, %arg7: memref<2x64x32xf32, #tpu.memory_space<vmem>>, %arg8: memref<2x64x1xf32, #tpu.memory_space<vmem>>, %arg9: memref<4x32x32xf32, #tpu.memory_space<vmem>>, %arg10: memref<4x32x1xf32, #tpu.memory_space<vmem>>, %arg11: memref<1x32x128xf32, #tpu.memory_space<vmem>>) attributes {dimension_semantics = [#tpu.dimension_semantics<parallel>], iteration_bounds = array<i64: 2>, scalar_prefetch = 0 : i64, scratch_operands = 0 : i64, tpu.core_type = #tpu.core_type<tc>, window_params = [{transform_indices = @transform_0, window_bounds = array<i64: 1, 4, 128>}, {pipeline_mode = #tpu.pipeline_mode<synchronous>, transform_indices = @transform_1, window_bounds = array<i64: 32, 4>}, {pipeline_mode = #tpu.pipeline_mode<synchronous>, transform_indices = @transform_2, window_bounds = array<i64: 32, 1>}, {pipeline_mode = #tpu.pipeline_mode<synchronous>, transform_indices = @transform_3, window_bounds = array<i64: 5, 64, 32>}, {pipeline_mode = #tpu.pipeline_mode<synchronous>, transform_indices = @transform_4, window_bounds = array<i64: 5, 64, 32>}, {pipeline_mode = #tpu.pipeline_mode<synchronous>, transform_indices = @transform_5, window_bounds = array<i64: 5, 64, 1>}, {pipeline_mode = #tpu.pipeline_mode<synchronous>, transform_indices = @transform_6, window_bounds = array<i64: 2, 64, 32>}, {pipeline_mode = #tpu.pipeline_mode<synchronous>, transform_indices = @transform_7, window_bounds = array<i64: 2, 64, 1>}, {pipeline_mode = #tpu.pipeline_mode<synchronous>, transform_indices = @transform_8, window_bounds = array<i64: 4, 32, 32>}, {pipeline_mode = #tpu.pipeline_mode<synchronous>, transform_indices = @transform_9, window_bounds = array<i64: 4, 32, 1>}, {transform_indices = @transform_10, window_bounds = array<i64: 1, 32, 128>}]} {
    %c0 = arith.constant 0 : index
    %c0_0 = arith.constant 0 : index
    %c0_1 = arith.constant 0 : index
    %0 = vector.load %arg1[%c0, %c0_0, %c0_1] : memref<1x4x128xf32, #tpu.memory_space<vmem>>, vector<1x4x128xf32>
    %1 = vector.shape_cast %0 : vector<1x4x128xf32> to vector<4x128xf32>
    %c0_2 = arith.constant 0 : index
    %c0_3 = arith.constant 0 : index
    %2 = vector.load %arg2[%c0_2, %c0_3] : memref<32x4xf32, #tpu.memory_space<vmem>>, vector<32x4xf32>
    %cst = arith.constant dense<0.000000e+00> : vector<32x128xf32>
    %3 = tpu.matmul %2, %1, %cst {dimension_numbers = #tpu.dot_dimension_numbers<[1], [0], [0], [1], [0, 0, 1, 1], [], []>} : vector<32x4xf32>, vector<4x128xf32>, vector<32x128xf32> -> vector<32x128xf32>
    %c0_4 = arith.constant 0 : index
    %c0_5 = arith.constant 0 : index
    %4 = vector.load %arg3[%c0_4, %c0_5] : memref<32x1xf32, #tpu.memory_space<vmem>>, vector<32x1xf32>
    %5 = vector.broadcast %4 : vector<32x1xf32> to vector<32x128xf32>
    %6 = arith.addf %3, %5 : vector<32x128xf32>
    %7 = tpu.iota {dimensions = array<i32: 1>} : vector<1x128xi32>
    %c1_i32 = arith.constant 1 : i32
    %8 = tpu.dynamic_rotate %6 by %c1_i32 dim 1 : vector<32x128xf32>, i32 -> vector<32x128xf32>
    %c1_i32_6 = arith.constant 1 : i32
    %9 = vector.broadcast %c1_i32_6 : i32 to vector<1x128xi32>
    %10 = arith.cmpi slt, %7, %9 : vector<1x128xi32>
    %cst_7 = arith.constant 0.000000e+00 : f32
    %11 = vector.shape_cast %10 : vector<1x128xi1> to vector<1x128xi1>
    %12 = vector.broadcast %11 : vector<1x128xi1> to vector<32x128xi1>
    %13 = vector.broadcast %cst_7 : f32 to vector<32x128xf32>
    %14 = arith.select %12, %13, %8 : vector<32x128xi1>, vector<32x128xf32>
    %c0_8 = arith.constant 0 : index
    %c0_9 = arith.constant 0 : index
    %c0_10 = arith.constant 0 : index
    %15 = vector.load %arg4[%c0_8, %c0_9, %c0_10] : memref<5x64x32xf32, #tpu.memory_space<vmem>>, vector<1x64x32xf32>
    %16 = vector.shape_cast %15 : vector<1x64x32xf32> to vector<64x32xf32>
    %cst_11 = arith.constant dense<0.000000e+00> : vector<64x128xf32>
    %17 = tpu.matmul %16, %14, %cst_11 {dimension_numbers = #tpu.dot_dimension_numbers<[1], [0], [0], [1], [0, 0, 1, 1], [], []>} : vector<64x32xf32>, vector<32x128xf32>, vector<64x128xf32> -> vector<64x128xf32>
    %c0_12 = arith.constant 0 : index
    %c0_13 = arith.constant 0 : index
    %c0_14 = arith.constant 0 : index
    %18 = vector.load %arg5[%c0_12, %c0_13, %c0_14] : memref<5x64x32xf32, #tpu.memory_space<vmem>>, vector<1x64x32xf32>
    %19 = vector.shape_cast %18 : vector<1x64x32xf32> to vector<64x32xf32>
    %cst_15 = arith.constant dense<0.000000e+00> : vector<64x128xf32>
    %20 = tpu.matmul %19, %6, %cst_15 {dimension_numbers = #tpu.dot_dimension_numbers<[1], [0], [0], [1], [0, 0, 1, 1], [], []>} : vector<64x32xf32>, vector<32x128xf32>, vector<64x128xf32> -> vector<64x128xf32>
    %21 = arith.addf %17, %20 : vector<64x128xf32>
    %c0_16 = arith.constant 0 : index
    %c0_17 = arith.constant 0 : index
    %c0_18 = arith.constant 0 : index
    %22 = vector.load %arg6[%c0_16, %c0_17, %c0_18] : memref<5x64x1xf32, #tpu.memory_space<vmem>>, vector<1x64x1xf32>
    %23 = vector.shape_cast %22 : vector<1x64x1xf32> to vector<64x1xf32>
    %24 = vector.broadcast %23 : vector<64x1xf32> to vector<64x128xf32>
    %25 = arith.addf %21, %24 : vector<64x128xf32>
    %26 = vector.extract_strided_slice %25 {offsets = [0, 0], sizes = [32, 128], strides = [1, 1]} : vector<64x128xf32> to vector<32x128xf32>
    %27 = arith.negf %26 : vector<32x128xf32>
    %28 = math.exp %27 : vector<32x128xf32>
    %cst_19 = arith.constant 1.000000e+00 : f32
    %29 = vector.broadcast %cst_19 : f32 to vector<32x128xf32>
    %30 = arith.addf %29, %28 : vector<32x128xf32>
    %31 = arith.divf %29, %30 : vector<32x128xf32>
    %32 = vector.extract_strided_slice %25 {offsets = [32, 0], sizes = [32, 128], strides = [1, 1]} : vector<64x128xf32> to vector<32x128xf32>
    %33 = arith.subf %32, %6 : vector<32x128xf32>
    %34 = arith.mulf %31, %33 : vector<32x128xf32>
    %35 = arith.addf %6, %34 : vector<32x128xf32>
    %c2_i32 = arith.constant 2 : i32
    %36 = tpu.dynamic_rotate %35 by %c2_i32 dim 1 : vector<32x128xf32>, i32 -> vector<32x128xf32>
    %c2_i32_20 = arith.constant 2 : i32
    %37 = vector.broadcast %c2_i32_20 : i32 to vector<1x128xi32>
    %38 = arith.cmpi slt, %7, %37 : vector<1x128xi32>
    %cst_21 = arith.constant 0.000000e+00 : f32
    %39 = vector.shape_cast %38 : vector<1x128xi1> to vector<1x128xi1>
    %40 = vector.broadcast %39 : vector<1x128xi1> to vector<32x128xi1>
    %41 = vector.broadcast %cst_21 : f32 to vector<32x128xf32>
    %42 = arith.select %40, %41, %36 : vector<32x128xi1>, vector<32x128xf32>
    %c1 = arith.constant 1 : index
    %c0_22 = arith.constant 0 : index
    %c0_23 = arith.constant 0 : index
    %43 = vector.load %arg4[%c1, %c0_22, %c0_23] : memref<5x64x32xf32, #tpu.memory_space<vmem>>, vector<1x64x32xf32>
    %44 = vector.shape_cast %43 : vector<1x64x32xf32> to vector<64x32xf32>
    %cst_24 = arith.constant dense<0.000000e+00> : vector<64x128xf32>
    %45 = tpu.matmul %44, %42, %cst_24 {dimension_numbers = #tpu.dot_dimension_numbers<[1], [0], [0], [1], [0, 0, 1, 1], [], []>} : vector<64x32xf32>, vector<32x128xf32>, vector<64x128xf32> -> vector<64x128xf32>
    %c1_25 = arith.constant 1 : index
    %c0_26 = arith.constant 0 : index
    %c0_27 = arith.constant 0 : index
    %46 = vector.load %arg5[%c1_25, %c0_26, %c0_27] : memref<5x64x32xf32, #tpu.memory_space<vmem>>, vector<1x64x32xf32>
    %47 = vector.shape_cast %46 : vector<1x64x32xf32> to vector<64x32xf32>
    %cst_28 = arith.constant dense<0.000000e+00> : vector<64x128xf32>
    %48 = tpu.matmul %47, %35, %cst_28 {dimension_numbers = #tpu.dot_dimension_numbers<[1], [0], [0], [1], [0, 0, 1, 1], [], []>} : vector<64x32xf32>, vector<32x128xf32>, vector<64x128xf32> -> vector<64x128xf32>
    %49 = arith.addf %45, %48 : vector<64x128xf32>
    %c1_29 = arith.constant 1 : index
    %c0_30 = arith.constant 0 : index
    %c0_31 = arith.constant 0 : index
    %50 = vector.load %arg6[%c1_29, %c0_30, %c0_31] : memref<5x64x1xf32, #tpu.memory_space<vmem>>, vector<1x64x1xf32>
    %51 = vector.shape_cast %50 : vector<1x64x1xf32> to vector<64x1xf32>
    %52 = vector.broadcast %51 : vector<64x1xf32> to vector<64x128xf32>
    %53 = arith.addf %49, %52 : vector<64x128xf32>
    %54 = vector.extract_strided_slice %53 {offsets = [0, 0], sizes = [32, 128], strides = [1, 1]} : vector<64x128xf32> to vector<32x128xf32>
    %55 = arith.negf %54 : vector<32x128xf32>
    %56 = math.exp %55 : vector<32x128xf32>
    %cst_32 = arith.constant 1.000000e+00 : f32
    %57 = vector.broadcast %cst_32 : f32 to vector<32x128xf32>
    %58 = arith.addf %57, %56 : vector<32x128xf32>
    %59 = arith.divf %57, %58 : vector<32x128xf32>
    %60 = vector.extract_strided_slice %53 {offsets = [32, 0], sizes = [32, 128], strides = [1, 1]} : vector<64x128xf32> to vector<32x128xf32>
    %61 = arith.subf %60, %35 : vector<32x128xf32>
    %62 = arith.mulf %59, %61 : vector<32x128xf32>
    %63 = arith.addf %35, %62 : vector<32x128xf32>
    %c4_i32 = arith.constant 4 : i32
    %64 = tpu.dynamic_rotate %63 by %c4_i32 dim 1 : vector<32x128xf32>, i32 -> vector<32x128xf32>
    %c4_i32_33 = arith.constant 4 : i32
    %65 = vector.broadcast %c4_i32_33 : i32 to vector<1x128xi32>
    %66 = arith.cmpi slt, %7, %65 : vector<1x128xi32>
    %cst_34 = arith.constant 0.000000e+00 : f32
    %67 = vector.shape_cast %66 : vector<1x128xi1> to vector<1x128xi1>
    %68 = vector.broadcast %67 : vector<1x128xi1> to vector<32x128xi1>
    %69 = vector.broadcast %cst_34 : f32 to vector<32x128xf32>
    %70 = arith.select %68, %69, %64 : vector<32x128xi1>, vector<32x128xf32>
    %c2 = arith.constant 2 : index
    %c0_35 = arith.constant 0 : index
    %c0_36 = arith.constant 0 : index
    %71 = vector.load %arg4[%c2, %c0_35, %c0_36] : memref<5x64x32xf32, #tpu.memory_space<vmem>>, vector<1x64x32xf32>
    %72 = vector.shape_cast %71 : vector<1x64x32xf32> to vector<64x32xf32>
    %cst_37 = arith.constant dense<0.000000e+00> : vector<64x128xf32>
    %73 = tpu.matmul %72, %70, %cst_37 {dimension_numbers = #tpu.dot_dimension_numbers<[1], [0], [0], [1], [0, 0, 1, 1], [], []>} : vector<64x32xf32>, vector<32x128xf32>, vector<64x128xf32> -> vector<64x128xf32>
    %c2_38 = arith.constant 2 : index
    %c0_39 = arith.constant 0 : index
    %c0_40 = arith.constant 0 : index
    %74 = vector.load %arg5[%c2_38, %c0_39, %c0_40] : memref<5x64x32xf32, #tpu.memory_space<vmem>>, vector<1x64x32xf32>
    %75 = vector.shape_cast %74 : vector<1x64x32xf32> to vector<64x32xf32>
    %cst_41 = arith.constant dense<0.000000e+00> : vector<64x128xf32>
    %76 = tpu.matmul %75, %63, %cst_41 {dimension_numbers = #tpu.dot_dimension_numbers<[1], [0], [0], [1], [0, 0, 1, 1], [], []>} : vector<64x32xf32>, vector<32x128xf32>, vector<64x128xf32> -> vector<64x128xf32>
    %77 = arith.addf %73, %76 : vector<64x128xf32>
    %c2_42 = arith.constant 2 : index
    %c0_43 = arith.constant 0 : index
    %c0_44 = arith.constant 0 : index
    %78 = vector.load %arg6[%c2_42, %c0_43, %c0_44] : memref<5x64x1xf32, #tpu.memory_space<vmem>>, vector<1x64x1xf32>
    %79 = vector.shape_cast %78 : vector<1x64x1xf32> to vector<64x1xf32>
    %80 = vector.broadcast %79 : vector<64x1xf32> to vector<64x128xf32>
    %81 = arith.addf %77, %80 : vector<64x128xf32>
    %82 = vector.extract_strided_slice %81 {offsets = [0, 0], sizes = [32, 128], strides = [1, 1]} : vector<64x128xf32> to vector<32x128xf32>
    %83 = arith.negf %82 : vector<32x128xf32>
    %84 = math.exp %83 : vector<32x128xf32>
    %cst_45 = arith.constant 1.000000e+00 : f32
    %85 = vector.broadcast %cst_45 : f32 to vector<32x128xf32>
    %86 = arith.addf %85, %84 : vector<32x128xf32>
    %87 = arith.divf %85, %86 : vector<32x128xf32>
    %88 = vector.extract_strided_slice %81 {offsets = [32, 0], sizes = [32, 128], strides = [1, 1]} : vector<64x128xf32> to vector<32x128xf32>
    %89 = arith.subf %88, %63 : vector<32x128xf32>
    %90 = arith.mulf %87, %89 : vector<32x128xf32>
    %91 = arith.addf %63, %90 : vector<32x128xf32>
    %c8_i32 = arith.constant 8 : i32
    %92 = tpu.dynamic_rotate %91 by %c8_i32 dim 1 : vector<32x128xf32>, i32 -> vector<32x128xf32>
    %c8_i32_46 = arith.constant 8 : i32
    %93 = vector.broadcast %c8_i32_46 : i32 to vector<1x128xi32>
    %94 = arith.cmpi slt, %7, %93 : vector<1x128xi32>
    %cst_47 = arith.constant 0.000000e+00 : f32
    %95 = vector.shape_cast %94 : vector<1x128xi1> to vector<1x128xi1>
    %96 = vector.broadcast %95 : vector<1x128xi1> to vector<32x128xi1>
    %97 = vector.broadcast %cst_47 : f32 to vector<32x128xf32>
    %98 = arith.select %96, %97, %92 : vector<32x128xi1>, vector<32x128xf32>
    %c3 = arith.constant 3 : index
    %c0_48 = arith.constant 0 : index
    %c0_49 = arith.constant 0 : index
    %99 = vector.load %arg4[%c3, %c0_48, %c0_49] : memref<5x64x32xf32, #tpu.memory_space<vmem>>, vector<1x64x32xf32>
    %100 = vector.shape_cast %99 : vector<1x64x32xf32> to vector<64x32xf32>
    %cst_50 = arith.constant dense<0.000000e+00> : vector<64x128xf32>
    %101 = tpu.matmul %100, %98, %cst_50 {dimension_numbers = #tpu.dot_dimension_numbers<[1], [0], [0], [1], [0, 0, 1, 1], [], []>} : vector<64x32xf32>, vector<32x128xf32>, vector<64x128xf32> -> vector<64x128xf32>
    %c3_51 = arith.constant 3 : index
    %c0_52 = arith.constant 0 : index
    %c0_53 = arith.constant 0 : index
    %102 = vector.load %arg5[%c3_51, %c0_52, %c0_53] : memref<5x64x32xf32, #tpu.memory_space<vmem>>, vector<1x64x32xf32>
    %103 = vector.shape_cast %102 : vector<1x64x32xf32> to vector<64x32xf32>
    %cst_54 = arith.constant dense<0.000000e+00> : vector<64x128xf32>
    %104 = tpu.matmul %103, %91, %cst_54 {dimension_numbers = #tpu.dot_dimension_numbers<[1], [0], [0], [1], [0, 0, 1, 1], [], []>} : vector<64x32xf32>, vector<32x128xf32>, vector<64x128xf32> -> vector<64x128xf32>
    %105 = arith.addf %101, %104 : vector<64x128xf32>
    %c3_55 = arith.constant 3 : index
    %c0_56 = arith.constant 0 : index
    %c0_57 = arith.constant 0 : index
    %106 = vector.load %arg6[%c3_55, %c0_56, %c0_57] : memref<5x64x1xf32, #tpu.memory_space<vmem>>, vector<1x64x1xf32>
    %107 = vector.shape_cast %106 : vector<1x64x1xf32> to vector<64x1xf32>
    %108 = vector.broadcast %107 : vector<64x1xf32> to vector<64x128xf32>
    %109 = arith.addf %105, %108 : vector<64x128xf32>
    %110 = vector.extract_strided_slice %109 {offsets = [0, 0], sizes = [32, 128], strides = [1, 1]} : vector<64x128xf32> to vector<32x128xf32>
    %111 = arith.negf %110 : vector<32x128xf32>
    %112 = math.exp %111 : vector<32x128xf32>
    %cst_58 = arith.constant 1.000000e+00 : f32
    %113 = vector.broadcast %cst_58 : f32 to vector<32x128xf32>
    %114 = arith.addf %113, %112 : vector<32x128xf32>
    %115 = arith.divf %113, %114 : vector<32x128xf32>
    %116 = vector.extract_strided_slice %109 {offsets = [32, 0], sizes = [32, 128], strides = [1, 1]} : vector<64x128xf32> to vector<32x128xf32>
    %117 = arith.subf %116, %91 : vector<32x128xf32>
    %118 = arith.mulf %115, %117 : vector<32x128xf32>
    %119 = arith.addf %91, %118 : vector<32x128xf32>
    %c16_i32 = arith.constant 16 : i32
    %120 = tpu.dynamic_rotate %119 by %c16_i32 dim 1 : vector<32x128xf32>, i32 -> vector<32x128xf32>
    %c16_i32_59 = arith.constant 16 : i32
    %121 = vector.broadcast %c16_i32_59 : i32 to vector<1x128xi32>
    %122 = arith.cmpi slt, %7, %121 : vector<1x128xi32>
    %cst_60 = arith.constant 0.000000e+00 : f32
    %123 = vector.shape_cast %122 : vector<1x128xi1> to vector<1x128xi1>
    %124 = vector.broadcast %123 : vector<1x128xi1> to vector<32x128xi1>
    %125 = vector.broadcast %cst_60 : f32 to vector<32x128xf32>
    %126 = arith.select %124, %125, %120 : vector<32x128xi1>, vector<32x128xf32>
    %c4 = arith.constant 4 : index
    %c0_61 = arith.constant 0 : index
    %c0_62 = arith.constant 0 : index
    %127 = vector.load %arg4[%c4, %c0_61, %c0_62] : memref<5x64x32xf32, #tpu.memory_space<vmem>>, vector<1x64x32xf32>
    %128 = vector.shape_cast %127 : vector<1x64x32xf32> to vector<64x32xf32>
    %cst_63 = arith.constant dense<0.000000e+00> : vector<64x128xf32>
    %129 = tpu.matmul %128, %126, %cst_63 {dimension_numbers = #tpu.dot_dimension_numbers<[1], [0], [0], [1], [0, 0, 1, 1], [], []>} : vector<64x32xf32>, vector<32x128xf32>, vector<64x128xf32> -> vector<64x128xf32>
    %c4_64 = arith.constant 4 : index
    %c0_65 = arith.constant 0 : index
    %c0_66 = arith.constant 0 : index
    %130 = vector.load %arg5[%c4_64, %c0_65, %c0_66] : memref<5x64x32xf32, #tpu.memory_space<vmem>>, vector<1x64x32xf32>
    %131 = vector.shape_cast %130 : vector<1x64x32xf32> to vector<64x32xf32>
    %cst_67 = arith.constant dense<0.000000e+00> : vector<64x128xf32>
    %132 = tpu.matmul %131, %119, %cst_67 {dimension_numbers = #tpu.dot_dimension_numbers<[1], [0], [0], [1], [0, 0, 1, 1], [], []>} : vector<64x32xf32>, vector<32x128xf32>, vector<64x128xf32> -> vector<64x128xf32>
    %133 = arith.addf %129, %132 : vector<64x128xf32>
    %c4_68 = arith.constant 4 : index
    %c0_69 = arith.constant 0 : index
    %c0_70 = arith.constant 0 : index
    %134 = vector.load %arg6[%c4_68, %c0_69, %c0_70] : memref<5x64x1xf32, #tpu.memory_space<vmem>>, vector<1x64x1xf32>
    %135 = vector.shape_cast %134 : vector<1x64x1xf32> to vector<64x1xf32>
    %136 = vector.broadcast %135 : vector<64x1xf32> to vector<64x128xf32>
    %137 = arith.addf %133, %136 : vector<64x128xf32>
    %138 = vector.extract_strided_slice %137 {offsets = [0, 0], sizes = [32, 128], strides = [1, 1]} : vector<64x128xf32> to vector<32x128xf32>
    %139 = arith.negf %138 : vector<32x128xf32>
    %140 = math.exp %139 : vector<32x128xf32>
    %cst_71 = arith.constant 1.000000e+00 : f32
    %141 = vector.broadcast %cst_71 : f32 to vector<32x128xf32>
    %142 = arith.addf %141, %140 : vector<32x128xf32>
    %143 = arith.divf %141, %142 : vector<32x128xf32>
    %144 = vector.extract_strided_slice %137 {offsets = [32, 0], sizes = [32, 128], strides = [1, 1]} : vector<64x128xf32> to vector<32x128xf32>
    %145 = arith.subf %144, %119 : vector<32x128xf32>
    %146 = arith.mulf %143, %145 : vector<32x128xf32>
    %147 = arith.addf %119, %146 : vector<32x128xf32>
    %c0_72 = arith.constant 0 : index
    %c0_73 = arith.constant 0 : index
    %c0_74 = arith.constant 0 : index
    %148 = vector.load %arg7[%c0_72, %c0_73, %c0_74] : memref<2x64x32xf32, #tpu.memory_space<vmem>>, vector<1x64x32xf32>
    %149 = vector.shape_cast %148 : vector<1x64x32xf32> to vector<64x32xf32>
    %cst_75 = arith.constant dense<0.000000e+00> : vector<64x128xf32>
    %150 = tpu.matmul %149, %147, %cst_75 {dimension_numbers = #tpu.dot_dimension_numbers<[1], [0], [0], [1], [0, 0, 1, 1], [], []>} : vector<64x32xf32>, vector<32x128xf32>, vector<64x128xf32> -> vector<64x128xf32>
    %c0_76 = arith.constant 0 : index
    %c0_77 = arith.constant 0 : index
    %c0_78 = arith.constant 0 : index
    %151 = vector.load %arg8[%c0_76, %c0_77, %c0_78] : memref<2x64x1xf32, #tpu.memory_space<vmem>>, vector<1x64x1xf32>
    %152 = vector.shape_cast %151 : vector<1x64x1xf32> to vector<64x1xf32>
    %153 = vector.broadcast %152 : vector<64x1xf32> to vector<64x128xf32>
    %154 = arith.addf %150, %153 : vector<64x128xf32>
    %155 = vector.extract_strided_slice %154 {offsets = [0, 0], sizes = [32, 128], strides = [1, 1]} : vector<64x128xf32> to vector<32x128xf32>
    %156 = arith.negf %155 : vector<32x128xf32>
    %157 = math.exp %156 : vector<32x128xf32>
    %cst_79 = arith.constant 1.000000e+00 : f32
    %158 = vector.broadcast %cst_79 : f32 to vector<32x128xf32>
    %159 = arith.addf %158, %157 : vector<32x128xf32>
    %160 = arith.divf %158, %159 : vector<32x128xf32>
    %161 = vector.extract_strided_slice %154 {offsets = [32, 0], sizes = [32, 128], strides = [1, 1]} : vector<64x128xf32> to vector<32x128xf32>
    %162 = arith.subf %161, %147 : vector<32x128xf32>
    %163 = arith.mulf %160, %162 : vector<32x128xf32>
    %164 = arith.addf %147, %163 : vector<32x128xf32>
    %c1_80 = arith.constant 1 : index
    %c0_81 = arith.constant 0 : index
    %c0_82 = arith.constant 0 : index
    %165 = vector.load %arg7[%c1_80, %c0_81, %c0_82] : memref<2x64x32xf32, #tpu.memory_space<vmem>>, vector<1x64x32xf32>
    %166 = vector.shape_cast %165 : vector<1x64x32xf32> to vector<64x32xf32>
    %cst_83 = arith.constant dense<0.000000e+00> : vector<64x128xf32>
    %167 = tpu.matmul %166, %164, %cst_83 {dimension_numbers = #tpu.dot_dimension_numbers<[1], [0], [0], [1], [0, 0, 1, 1], [], []>} : vector<64x32xf32>, vector<32x128xf32>, vector<64x128xf32> -> vector<64x128xf32>
    %c1_84 = arith.constant 1 : index
    %c0_85 = arith.constant 0 : index
    %c0_86 = arith.constant 0 : index
    %168 = vector.load %arg8[%c1_84, %c0_85, %c0_86] : memref<2x64x1xf32, #tpu.memory_space<vmem>>, vector<1x64x1xf32>
    %169 = vector.shape_cast %168 : vector<1x64x1xf32> to vector<64x1xf32>
    %170 = vector.broadcast %169 : vector<64x1xf32> to vector<64x128xf32>
    %171 = arith.addf %167, %170 : vector<64x128xf32>
    %172 = vector.extract_strided_slice %171 {offsets = [0, 0], sizes = [32, 128], strides = [1, 1]} : vector<64x128xf32> to vector<32x128xf32>
    %173 = arith.negf %172 : vector<32x128xf32>
    %174 = math.exp %173 : vector<32x128xf32>
    %cst_87 = arith.constant 1.000000e+00 : f32
    %175 = vector.broadcast %cst_87 : f32 to vector<32x128xf32>
    %176 = arith.addf %175, %174 : vector<32x128xf32>
    %177 = arith.divf %175, %176 : vector<32x128xf32>
    %178 = vector.extract_strided_slice %171 {offsets = [32, 0], sizes = [32, 128], strides = [1, 1]} : vector<64x128xf32> to vector<32x128xf32>
    %179 = arith.subf %178, %164 : vector<32x128xf32>
    %180 = arith.mulf %177, %179 : vector<32x128xf32>
    %181 = arith.addf %164, %180 : vector<32x128xf32>
    %c0_88 = arith.constant 0 : index
    %c0_89 = arith.constant 0 : index
    %c0_90 = arith.constant 0 : index
    %182 = vector.load %arg9[%c0_88, %c0_89, %c0_90] : memref<4x32x32xf32, #tpu.memory_space<vmem>>, vector<1x32x32xf32>
    %183 = vector.shape_cast %182 : vector<1x32x32xf32> to vector<32x32xf32>
    %cst_91 = arith.constant dense<0.000000e+00> : vector<32x128xf32>
    %184 = tpu.matmul %183, %181, %cst_91 {dimension_numbers = #tpu.dot_dimension_numbers<[1], [0], [0], [1], [0, 0, 1, 1], [], []>} : vector<32x32xf32>, vector<32x128xf32>, vector<32x128xf32> -> vector<32x128xf32>
    %c0_92 = arith.constant 0 : index
    %c0_93 = arith.constant 0 : index
    %c0_94 = arith.constant 0 : index
    %185 = vector.load %arg10[%c0_92, %c0_93, %c0_94] : memref<4x32x1xf32, #tpu.memory_space<vmem>>, vector<1x32x1xf32>
    %186 = vector.shape_cast %185 : vector<1x32x1xf32> to vector<32x1xf32>
    %187 = vector.broadcast %186 : vector<32x1xf32> to vector<32x128xf32>
    %188 = arith.addf %184, %187 : vector<32x128xf32>
    %cst_95 = arith.constant 0.000000e+00 : f32
    %189 = vector.broadcast %cst_95 : f32 to vector<32x128xf32>
    %190 = arith.maximumf %188, %189 : vector<32x128xf32>
    %c1_96 = arith.constant 1 : index
    %c0_97 = arith.constant 0 : index
    %c0_98 = arith.constant 0 : index
    %191 = vector.load %arg9[%c1_96, %c0_97, %c0_98] : memref<4x32x32xf32, #tpu.memory_space<vmem>>, vector<1x32x32xf32>
    %192 = vector.shape_cast %191 : vector<1x32x32xf32> to vector<32x32xf32>
    %cst_99 = arith.constant dense<0.000000e+00> : vector<32x128xf32>
    %193 = tpu.matmul %192, %190, %cst_99 {dimension_numbers = #tpu.dot_dimension_numbers<[1], [0], [0], [1], [0, 0, 1, 1], [], []>} : vector<32x32xf32>, vector<32x128xf32>, vector<32x128xf32> -> vector<32x128xf32>
    %c1_100 = arith.constant 1 : index
    %c0_101 = arith.constant 0 : index
    %c0_102 = arith.constant 0 : index
    %194 = vector.load %arg10[%c1_100, %c0_101, %c0_102] : memref<4x32x1xf32, #tpu.memory_space<vmem>>, vector<1x32x1xf32>
    %195 = vector.shape_cast %194 : vector<1x32x1xf32> to vector<32x1xf32>
    %196 = vector.broadcast %195 : vector<32x1xf32> to vector<32x128xf32>
    %197 = arith.addf %193, %196 : vector<32x128xf32>
    %cst_103 = arith.constant 0.000000e+00 : f32
    %198 = vector.broadcast %cst_103 : f32 to vector<32x128xf32>
    %199 = arith.maximumf %197, %198 : vector<32x128xf32>
    %c2_104 = arith.constant 2 : index
    %c0_105 = arith.constant 0 : index
    %c0_106 = arith.constant 0 : index
    %200 = vector.load %arg9[%c2_104, %c0_105, %c0_106] : memref<4x32x32xf32, #tpu.memory_space<vmem>>, vector<1x32x32xf32>
    %201 = vector.shape_cast %200 : vector<1x32x32xf32> to vector<32x32xf32>
    %cst_107 = arith.constant dense<0.000000e+00> : vector<32x128xf32>
    %202 = tpu.matmul %201, %199, %cst_107 {dimension_numbers = #tpu.dot_dimension_numbers<[1], [0], [0], [1], [0, 0, 1, 1], [], []>} : vector<32x32xf32>, vector<32x128xf32>, vector<32x128xf32> -> vector<32x128xf32>
    %c2_108 = arith.constant 2 : index
    %c0_109 = arith.constant 0 : index
    %c0_110 = arith.constant 0 : index
    %203 = vector.load %arg10[%c2_108, %c0_109, %c0_110] : memref<4x32x1xf32, #tpu.memory_space<vmem>>, vector<1x32x1xf32>
    %204 = vector.shape_cast %203 : vector<1x32x1xf32> to vector<32x1xf32>
    %205 = vector.broadcast %204 : vector<32x1xf32> to vector<32x128xf32>
    %206 = arith.addf %202, %205 : vector<32x128xf32>
    %cst_111 = arith.constant 0.000000e+00 : f32
    %207 = vector.broadcast %cst_111 : f32 to vector<32x128xf32>
    %208 = arith.maximumf %206, %207 : vector<32x128xf32>
    %c3_112 = arith.constant 3 : index
    %c0_113 = arith.constant 0 : index
    %c0_114 = arith.constant 0 : index
    %209 = vector.load %arg9[%c3_112, %c0_113, %c0_114] : memref<4x32x32xf32, #tpu.memory_space<vmem>>, vector<1x32x32xf32>
    %210 = vector.shape_cast %209 : vector<1x32x32xf32> to vector<32x32xf32>
    %cst_115 = arith.constant dense<0.000000e+00> : vector<32x128xf32>
    %211 = tpu.matmul %210, %208, %cst_115 {dimension_numbers = #tpu.dot_dimension_numbers<[1], [0], [0], [1], [0, 0, 1, 1], [], []>} : vector<32x32xf32>, vector<32x128xf32>, vector<32x128xf32> -> vector<32x128xf32>
    %c3_116 = arith.constant 3 : index
    %c0_117 = arith.constant 0 : index
    %c0_118 = arith.constant 0 : index
    %212 = vector.load %arg10[%c3_116, %c0_117, %c0_118] : memref<4x32x1xf32, #tpu.memory_space<vmem>>, vector<1x32x1xf32>
    %213 = vector.shape_cast %212 : vector<1x32x1xf32> to vector<32x1xf32>
    %214 = vector.broadcast %213 : vector<32x1xf32> to vector<32x128xf32>
    %215 = arith.addf %211, %214 : vector<32x128xf32>
    %c0_119 = arith.constant 0 : index
    %c0_120 = arith.constant 0 : index
    %c0_121 = arith.constant 0 : index
    %216 = vector.load %arg11[%c0_119, %c0_120, %c0_121] : memref<1x32x128xf32, #tpu.memory_space<vmem>>, vector<1x32x128xf32>
    %217 = vector.shape_cast %216 : vector<1x32x128xf32> to vector<32x128xf32>
    %218 = vector.shape_cast %215 : vector<32x128xf32> to vector<1x32x128xf32>
    tpu.vector_store %arg11[%c0_119, %c0_120, %c0_121], %218 {strides = array<i32>} : memref<1x32x128xf32, #tpu.memory_space<vmem>>, vector<1x32x128xf32>,
    return
  }
  func.func @transform_0(%arg0: i32) -> (i32, i32, i32) {
    %c0_i32 = arith.constant 0 : i32
    %c0_i32_0 = arith.constant 0 : i32
    %c0_i32_1 = arith.constant 0 : i32
    return %arg0, %c0_i32, %c0_i32_0 : i32, i32, i32
  }
  func.func @transform_1(%arg0: i32) -> (i32, i32) {
    %c0_i32 = arith.constant 0 : i32
    %c0_i32_0 = arith.constant 0 : i32
    %c0_i32_1 = arith.constant 0 : i32
    return %c0_i32, %c0_i32_0 : i32, i32
  }
  func.func @transform_2(%arg0: i32) -> (i32, i32) {
    %c0_i32 = arith.constant 0 : i32
    %c0_i32_0 = arith.constant 0 : i32
    %c0_i32_1 = arith.constant 0 : i32
    return %c0_i32, %c0_i32_0 : i32, i32
  }
  func.func @transform_3(%arg0: i32) -> (i32, i32, i32) {
    %c0_i32 = arith.constant 0 : i32
    %c0_i32_0 = arith.constant 0 : i32
    %c0_i32_1 = arith.constant 0 : i32
    %c0_i32_2 = arith.constant 0 : i32
    return %c0_i32, %c0_i32_0, %c0_i32_1 : i32, i32, i32
  }
  func.func @transform_4(%arg0: i32) -> (i32, i32, i32) {
    %c0_i32 = arith.constant 0 : i32
    %c0_i32_0 = arith.constant 0 : i32
    %c0_i32_1 = arith.constant 0 : i32
    %c0_i32_2 = arith.constant 0 : i32
    return %c0_i32, %c0_i32_0, %c0_i32_1 : i32, i32, i32
  }
  func.func @transform_5(%arg0: i32) -> (i32, i32, i32) {
    %c0_i32 = arith.constant 0 : i32
    %c0_i32_0 = arith.constant 0 : i32
    %c0_i32_1 = arith.constant 0 : i32
    %c0_i32_2 = arith.constant 0 : i32
    return %c0_i32, %c0_i32_0, %c0_i32_1 : i32, i32, i32
  }
  func.func @transform_6(%arg0: i32) -> (i32, i32, i32) {
    %c0_i32 = arith.constant 0 : i32
    %c0_i32_0 = arith.constant 0 : i32
    %c0_i32_1 = arith.constant 0 : i32
    %c0_i32_2 = arith.constant 0 : i32
    return %c0_i32, %c0_i32_0, %c0_i32_1 : i32, i32, i32
  }
  func.func @transform_7(%arg0: i32) -> (i32, i32, i32) {
    %c0_i32 = arith.constant 0 : i32
    %c0_i32_0 = arith.constant 0 : i32
    %c0_i32_1 = arith.constant 0 : i32
    %c0_i32_2 = arith.constant 0 : i32
    return %c0_i32, %c0_i32_0, %c0_i32_1 : i32, i32, i32
  }
  func.func @transform_8(%arg0: i32) -> (i32, i32, i32) {
    %c0_i32 = arith.constant 0 : i32
    %c0_i32_0 = arith.constant 0 : i32
    %c0_i32_1 = arith.constant 0 : i32
    %c0_i32_2 = arith.constant 0 : i32
    return %c0_i32, %c0_i32_0, %c0_i32_1 : i32, i32, i32
  }
  func.func @transform_9(%arg0: i32) -> (i32, i32, i32) {
    %c0_i32 = arith.constant 0 : i32
    %c0_i32_0 = arith.constant 0 : i32
    %c0_i32_1 = arith.constant 0 : i32
    %c0_i32_2 = arith.constant 0 : i32
    return %c0_i32, %c0_i32_0, %c0_i32_1 : i32, i32, i32
  }
  func.func @transform_10(%arg0: i32) -> (i32, i32, i32) {
    %c0_i32 = arith.constant 0 : i32
    %c0_i32_0 = arith.constant 0 : i32
    %c0_i32_1 = arith.constant 0 : i32
    return %arg0, %c0_i32, %c0_i32_0 : i32, i32, i32
  }
}

</mosaic_0001>

<llo_original>
// kernel: seq_classifier_forward.1
$region0: #{seq_classifier_forward.1}
  #allocation0 [shape = 'u32[]', space=smem, size = 0x4, offset = 0x4, fixed_abs, tag = 'smem constant byte address 0x4 - core index']
  #allocation1 [shape = 'u32[144,128]{1,0:T(1,128)}', space=vmem, size = 0x12000, scoped, tag = 'internal scratch']
  %s0 = inlined_call_operand.vmem [shape: f32[2,4,128], index: 0, kind: input, shape index: {}]
  %s1 = inlined_call_operand.vmem [shape: f32[32,4], index: 1, kind: input, shape index: {}]
  %s2 = inlined_call_operand.vmem [shape: f32[32,1], index: 2, kind: input, shape index: {}]
  %s3 = inlined_call_operand.vmem [shape: f32[5,64,32], index: 3, kind: input, shape index: {}]
  %s4 = inlined_call_operand.vmem [shape: f32[5,64,32], index: 4, kind: input, shape index: {}]
  %s5 = inlined_call_operand.vmem [shape: f32[5,64,1], index: 5, kind: input, shape index: {}]
  %s6 = inlined_call_operand.vmem [shape: f32[2,64,32], index: 6, kind: input, shape index: {}]
  %s7 = inlined_call_operand.vmem [shape: f32[2,64,1], index: 7, kind: input, shape index: {}]
  %s8 = inlined_call_operand.vmem [shape: f32[4,32,32], index: 8, kind: input, shape index: {}]
  %s9 = inlined_call_operand.vmem [shape: f32[4,32,1], index: 9, kind: input, shape index: {}]
  %s10 = inlined_call_operand.hbm [shape: f32[2,32,128], index: 10, kind: output, shape index: {}]
  %s11 = sld [smem:[#allocation0]]
  $region73: #{seq_classifier_forward.1} parent=0
    _
  %s13 = ssub.s32 1, %s11
  %s14 = scalar_select 0, %s13, %s11
  $region1: #{seq_classifier_forward.1} parent=0
    #allocation2 [shape = 'u8[32768]{0}', space=vmem, size = 0x8000, scoped, tag = 'output window, operand 0']
    #allocation3 [shape = 's32[2]{0}', space=sflag, size = 0x8, scoped, tag = 'scoped memory for seq_classifier_forward.1']
    %15 = vsyncpa [#allocation3], 0
    %s16 = scalar_lea.sflag [#allocation3], 1
    %17 = vsyncpa %s16, 0
    loop: start=0, step=1, limit=4
    $region2: #{seq_classifier_forward.1} parent=1 // loop_pre_header
      _
    $region3: #{seq_classifier_forward.1} parent=1 // loop_header
      %s19 = sphi 0, %s23
      %p20 = scmp.ge.s32.totalorder %s19, 4
      %s29 = sphi 0, %s31
      %s32 = sphi 0, %s29
      %s33 = sphi 0, %s32
      %s49 = sphi 0, %s33
      %s53 = sphi 0, %s53
      %s55 = sphi 0, %s53
      %s56 = sphi 0, %s55
      %s70 = sphi 0, %s56
      %s74 = sphi 0, %s74
      %s76 = sphi 0, %s74
      %s77 = sphi 0, %s76
      %s91 = sphi 0, %s77
      %s95 = sphi 0, %s95
      %s97 = sphi 0, %s95
      %s98 = sphi 0, %s97
      %s112 = sphi 0, %s98
      %s116 = sphi 0, %s116
      %s118 = sphi 0, %s116
      %s119 = sphi 0, %s118
      %s133 = sphi 0, %s119
      %s137 = sphi 0, %s137
      %s139 = sphi 0, %s137
      %s140 = sphi 0, %s139
      %s154 = sphi 0, %s140
      %s158 = sphi 0, %s158
      %s160 = sphi 0, %s158
      %s161 = sphi 0, %s160
      %s175 = sphi 0, %s161
      %s179 = sphi 0, %s179
      %s181 = sphi 0, %s179
      %s182 = sphi 0, %s181
      %s196 = sphi 0, %s182
      %s200 = sphi 0, %s200
      %s202 = sphi 0, %s200
      %s203 = sphi 0, %s202
      %s217 = sphi 0, %s203
      %s221 = sphi 0, %s221
      %s223 = sphi 0, %s221
      %s224 = sphi 0, %s223
      %s238 = sphi 0, %s224
      %s244 = sphi 0, %s246
      %s247 = sphi 0, %s244
      %s248 = sphi 0, %s247
      %s264 = sphi 0, %s248
    $region4: #{seq_classifier_forward.1} parent=1 // loop_header_branch
      %22 = sbr.rel (%p20) target = $region8
    $region5: #{seq_classifier_forward.1} parent=1 // loop_body
      %s24 = ssub.s32 %s19, 1
      %s25 = ssub.s32 %s19, 2
      %s26 = sadd.s32 %s19, 1
      %s27 = ssub.s32 %s19, %s26
      %p28 = scmp.eq.s32.totalorder %s27, 0
      %s30 = sadd.s32 %s29, 1
      %s31 = scalar_select %p28, %s29, %s30
      %p34 = pneg %p28
      %p35 = scmp.eq.s32.totalorder %s19, 1
      %p36 = por %p34, %p35
      %p37 = scmp.ne.s32.totalorder %s29, %s32
      %p38 = scmp.eq.s32.totalorder %s19, 0
      %p39 = por %p37, %p38
      %p40 = scmp.ne.s32.totalorder %s29, %s32
      %p41 = scmp.eq.s32.totalorder %s24, 1
      %p42 = por %p40, %p41
      %p43 = scmp.ne.s32.totalorder %s32, %s33
      %p44 = scmp.eq.s32.totalorder %s24, 0
      %p45 = por %p43, %p44
      %p46 = scmp.ne.s32.totalorder %s32, %s33
      %p47 = scmp.eq.s32.totalorder %s25, 1
      %p48 = por %p46, %p47
      %p50 = scmp.ne.s32.totalorder %s33, %s49
      %p51 = scmp.eq.s32.totalorder %s25, 0
      %p52 = por %p50, %p51
      %s54 = sadd.s32 %s53, 1
      %p57 = scmp.eq.s32.totalorder %s19, 1
      %p58 = scmp.ne.s32.totalorder %s53, %s55
      %p59 = scmp.eq.s32.totalorder %s19, 0
      %p60 = por %p58, %p59
      %p61 = scmp.ne.s32.totalorder %s53, %s55
      %p62 = scmp.eq.s32.totalorder %s24, 1
      %p63 = por %p61, %p62
      %p64 = scmp.ne.s32.totalorder %s55, %s56
      %p65 = scmp.eq.s32.totalorder %s24, 0
      %p66 = por %p64, %p65
      %p67 = scmp.ne.s32.totalorder %s55, %s56
      %p68 = scmp.eq.s32.totalorder %s25, 1
      %p69 = por %p67, %p68
      %p71 = scmp.ne.s32.totalorder %s56, %s70
      %p72 = scmp.eq.s32.totalorder %s25, 0
      %p73 = por %p71, %p72
      %s75 = sadd.s32 %s74, 1
      %p78 = scmp.eq.s32.totalorder %s19, 1
      %p79 = scmp.ne.s32.totalorder %s74, %s76
      %p80 = scmp.eq.s32.totalorder %s19, 0
      %p81 = por %p79, %p80
      %p82 = scmp.ne.s32.totalorder %s74, %s76
      %p83 = scmp.eq.s32.totalorder %s24, 1
      %p84 = por %p82, %p83
      %p85 = scmp.ne.s32.totalorder %s76, %s77
      %p86 = scmp.eq.s32.totalorder %s24, 0
      %p87 = por %p85, %p86
      %p88 = scmp.ne.s32.totalorder %s76, %s77
      %p89 = scmp.eq.s32.totalorder %s25, 1
      %p90 = por %p88, %p89
      %p92 = scmp.ne.s32.totalorder %s77, %s91
      %p93 = scmp.eq.s32.totalorder %s25, 0
      %p94 = por %p92, %p93
      %s96 = sadd.s32 %s95, 1
      %p99 = scmp.eq.s32.totalorder %s19, 1
      %p100 = scmp.ne.s32.totalorder %s95, %s97
      %p101 = scmp.eq.s32.totalorder %s19, 0
      %p102 = por %p100, %p101
      %p103 = scmp.ne.s32.totalorder %s95, %s97
      %p104 = scmp.eq.s32.totalorder %s24, 1
      %p105 = por %p103, %p104
      %p106 = scmp.ne.s32.totalorder %s97, %s98
      %p107 = scmp.eq.s32.totalorder %s24, 0
      %p108 = por %p106, %p107
      %p109 = scmp.ne.s32.totalorder %s97, %s98
      %p110 = scmp.eq.s32.totalorder %s25, 1
      %p111 = por %p109, %p110
      %p113 = scmp.ne.s32.totalorder %s98, %s112
      %p114 = scmp.eq.s32.totalorder %s25, 0
      %p115 = por %p113, %p114
      %s117 = sadd.s32 %s116, 1
      %p120 = scmp.eq.s32.totalorder %s19, 1
      %p121 = scmp.ne.s32.totalorder %s116, %s118
      %p122 = scmp.eq.s32.totalorder %s19, 0
      %p123 = por %p121, %p122
      %p124 = scmp.ne.s32.totalorder %s116, %s118
      %p125 = scmp.eq.s32.totalorder %s24, 1
      %p126 = por %p124, %p125
      %p127 = scmp.ne.s32.totalorder %s118, %s119
      %p128 = scmp.eq.s32.totalorder %s24, 0
      %p129 = por %p127, %p128
      %p130 = scmp.ne.s32.totalorder %s118, %s119
      %p131 = scmp.eq.s32.totalorder %s25, 1
      %p132 = por %p130, %p131
      %p134 = scmp.ne.s32.totalorder %s119, %s133
      %p135 = scmp.eq.s32.totalorder %s25, 0
      %p136 = por %p134, %p135
      %s138 = sadd.s32 %s137, 1
      %p141 = scmp.eq.s32.totalorder %s19, 1
      %p142 = scmp.ne.s32.totalorder %s137, %s139
      %p143 = scmp.eq.s32.totalorder %s19, 0
      %p144 = por %p142, %p143
      %p145 = scmp.ne.s32.totalorder %s137, %s139
      %p146 = scmp.eq.s32.totalorder %s24, 1
      %p147 = por %p145, %p146
      %p148 = scmp.ne.s32.totalorder %s139, %s140
      %p149 = scmp.eq.s32.totalorder %s24, 0
      %p150 = por %p148, %p149
      %p151 = scmp.ne.s32.totalorder %s139, %s140
      %p152 = scmp.eq.s32.totalorder %s25, 1
      %p153 = por %p151, %p152
      %p155 = scmp.ne.s32.totalorder %s140, %s154
      %p156 = scmp.eq.s32.totalorder %s25, 0
      %p157 = por %p155, %p156
      %s159 = sadd.s32 %s158, 1
      %p162 = scmp.eq.s32.totalorder %s19, 1
      %p163 = scmp.ne.s32.totalorder %s158, %s160
      %p164 = scmp.eq.s32.totalorder %s19, 0
      %p165 = por %p163, %p164
      %p166 = scmp.ne.s32.totalorder %s158, %s160
      %p167 = scmp.eq.s32.totalorder %s24, 1
      %p168 = por %p166, %p167
      %p169 = scmp.ne.s32.totalorder %s160, %s161
      %p170 = scmp.eq.s32.totalorder %s24, 0
      %p171 = por %p169, %p170
      %p172 = scmp.ne.s32.totalorder %s160, %s161
      %p173 = scmp.eq.s32.totalorder %s25, 1
      %p174 = por %p172, %p173
      %p176 = scmp.ne.s32.totalorder %s161, %s175
      %p177 = scmp.eq.s32.totalorder %s25, 0
      %p178 = por %p176, %p177
      %s180 = sadd.s32 %s179, 1
      %p183 = scmp.eq.s32.totalorder %s19, 1
      %p184 = scmp.ne.s32.totalorder %s179, %s181
      %p185 = scmp.eq.s32.totalorder %s19, 0
      %p186 = por %p184, %p185
      %p187 = scmp.ne.s32.totalorder %s179, %s181
      %p188 = scmp.eq.s32.totalorder %s24, 1
      %p189 = por %p187, %p188
      %p190 = scmp.ne.s32.totalorder %s181, %s182
      %p191 = scmp.eq.s32.totalorder %s24, 0
      %p192 = por %p190, %p191
      %p193 = scmp.ne.s32.totalorder %s181, %s182
      %p194 = scmp.eq.s32.totalorder %s25, 1
      %p195 = por %p193, %p194
      %p197 = scmp.ne.s32.totalorder %s182, %s196
      %p198 = scmp.eq.s32.totalorder %s25, 0
      %p199 = por %p197, %p198
      %s201 = sadd.s32 %s200, 1
      %p204 = scmp.eq.s32.totalorder %s19, 1
      %p205 = scmp.ne.s32.totalorder %s200, %s202
      %p206 = scmp.eq.s32.totalorder %s19, 0
      %p207 = por %p205, %p206
      %p208 = scmp.ne.s32.totalorder %s200, %s202
      %p209 = scmp.eq.s32.totalorder %s24, 1
      %p210 = por %p208, %p209
      %p211 = scmp.ne.s32.totalorder %s202, %s203
      %p212 = scmp.eq.s32.totalorder %s24, 0
      %p213 = por %p211, %p212
      %p214 = scmp.ne.s32.totalorder %s202, %s203
      %p215 = scmp.eq.s32.totalorder %s25, 1
      %p216 = por %p214, %p215
      %p218 = scmp.ne.s32.totalorder %s203, %s217
      %p219 = scmp.eq.s32.totalorder %s25, 0
      %p220 = por %p218, %p219
      %s222 = sadd.s32 %s221, 1
      %p225 = scmp.eq.s32.totalorder %s19, 1
      %p226 = scmp.ne.s32.totalorder %s221, %s223
      %p227 = scmp.eq.s32.totalorder %s19, 0
      %p228 = por %p226, %p227
      %p229 = scmp.ne.s32.totalorder %s221, %s223
      %p230 = scmp.eq.s32.totalorder %s24, 1
      %p231 = por %p229, %p230
      %p232 = scmp.ne.s32.totalorder %s223, %s224
      %p233 = scmp.eq.s32.totalorder %s24, 0
      %p234 = por %p232, %p233
      %p235 = scmp.ne.s32.totalorder %s223, %s224
      %p236 = scmp.eq.s32.totalorder %s25, 1
      %p237 = por %p235, %p236
      %p239 = scmp.ne.s32.totalorder %s224, %s238
      %p240 = scmp.eq.s32.totalorder %s25, 0
      %p241 = por %p239, %p240
      %s242 = ssub.s32 %s19, %s26
      %p243 = scmp.eq.s32.totalorder %s242, 0
      %s245 = sadd.s32 %s244, 1
      %s246 = scalar_select %p243, %s244, %s245
      %p249 = pneg %p243
      %p250 = scmp.eq.s32.totalorder %s19, 1
      %p251 = por %p249, %p250
      %p252 = scmp.ne.s32.totalorder %s244, %s247
      %p253 = scmp.eq.s32.totalorder %s19, 0
      %p254 = por %p252, %p253
      %p255 = scmp.ne.s32.totalorder %s244, %s247
      %p256 = scmp.eq.s32.totalorder %s24, 1
      %p257 = por %p255, %p256
      %p258 = scmp.ne.s32.totalorder %s247, %s248
      %p259 = scmp.eq.s32.totalorder %s24, 0
      %p260 = por %p258, %p259
      %p261 = scmp.ne.s32.totalorder %s247, %s248
      %p262 = scmp.eq.s32.totalorder %s25, 1
      %p263 = por %p261, %p262
      %p265 = scmp.ne.s32.totalorder %s248, %s264
      %p266 = scmp.eq.s32.totalorder %s25, 0
      %p267 = por %p265, %p266
      %p268 = scmp.le.s32.totalorder 1, %s19
      %p269 = scmp.lt.s32.totalorder %s19, 3
      %p270 = pnand %p268, %p269
      %p271 = pneg %p270
      // Predicated region
      $region9: #{seq_classifier_forward.1} parent=5 // pred_check
        _
      $region10: #{seq_classifier_forward.1} parent=5 // pred_check_branch
        %273 = sbr.rel (%p270) target = $region12
      $region11: #{seq_classifier_forward.1} parent=5 // pred_region
        %s274 = ssub.s32 %s19, 1
        // Predicated region
        $region13: #{seq_classifier_forward.1} parent=11 // pred_check
          %p275 = pneg %p66
        $region14: #{seq_classifier_forward.1} parent=11 // pred_check_branch
          %277 = sbr.rel (%p275) target = $region16
        $region15: #{seq_classifier_forward.1} parent=11 // pred_region
          _
        $region16: #{seq_classifier_forward.1} parent=11 // pred_fallthru
          _
        // Predicated region
        $region17: #{seq_classifier_forward.1} parent=11 // pred_check
          %p278 = pneg %p87
        $region18: #{seq_classifier_forward.1} parent=11 // pred_check_branch
          %280 = sbr.rel (%p278) target = $region20
        $region19: #{seq_classifier_forward.1} parent=11 // pred_region
          _
        $region20: #{seq_classifier_forward.1} parent=11 // pred_fallthru
          _
        // Predicated region
        $region21: #{seq_classifier_forward.1} parent=11 // pred_check
          %p281 = pneg %p108
        $region22: #{seq_classifier_forward.1} parent=11 // pred_check_branch
          %283 = sbr.rel (%p281) target = $region24
        $region23: #{seq_classifier_forward.1} parent=11 // pred_region
          _
        $region24: #{seq_classifier_forward.1} parent=11 // pred_fallthru
          _
        // Predicated region
        $region25: #{seq_classifier_forward.1} parent=11 // pred_check
          %p284 = pneg %p129
        $region26: #{seq_classifier_forward.1} parent=11 // pred_check_branch
          %286 = sbr.rel (%p284) target = $region28
        $region27: #{seq_classifier_forward.1} parent=11 // pred_region
          _
        $region28: #{seq_classifier_forward.1} parent=11 // pred_fallthru
          _
        // Predicated region
        $region29: #{seq_classifier_forward.1} parent=11 // pred_check
          %p287 = pneg %p150
        $region30: #{seq_classifier_forward.1} parent=11 // pred_check_branch
          %289 = sbr.rel (%p287) target = $region32
        $region31: #{seq_classifier_forward.1} parent=11 // pred_region
          _
        $region32: #{seq_classifier_forward.1} parent=11 // pred_fallthru
          _
        // Predicated region
        $region33: #{seq_classifier_forward.1} parent=11 // pred_check
          %p290 = pneg %p171
        $region34: #{seq_classifier_forward.1} parent=11 // pred_check_branch
          %292 = sbr.rel (%p290) target = $region36
        $region35: #{seq_classifier_forward.1} parent=11 // pred_region
          _
        $region36: #{seq_classifier_forward.1} parent=11 // pred_fallthru
          _
        // Predicated region
        $region37: #{seq_classifier_forward.1} parent=11 // pred_check
          %p293 = pneg %p192
        $region38: #{seq_classifier_forward.1} parent=11 // pred_check_branch
          %295 = sbr.rel (%p293) target = $region40
        $region39: #{seq_classifier_forward.1} parent=11 // pred_region
          _
        $region40: #{seq_classifier_forward.1} parent=11 // pred_fallthru
          _
        // Predicated region
        $region41: #{seq_classifier_forward.1} parent=11 // pred_check
          %p296 = pneg %p213
        $region42: #{seq_classifier_forward.1} parent=11 // pred_check_branch
          %298 = sbr.rel (%p296) target = $region44
        $region43: #{seq_classifier_forward.1} parent=11 // pred_region
          _
        $region44: #{seq_classifier_forward.1} parent=11 // pred_fallthru
          _
        // Predicated region
        $region45: #{seq_classifier_forward.1} parent=11 // pred_check
          %p299 = pneg %p234
        $region46: #{seq_classifier_forward.1} parent=11 // pred_check_branch
          %301 = sbr.rel (%p299) target = $region48
        $region47: #{seq_classifier_forward.1} parent=11 // pred_region
          _
        $region48: #{seq_classifier_forward.1} parent=11 // pred_fallthru
          _
      $region12: #{seq_classifier_forward.1} parent=5 // pred_fallthru
        _
      %p302 = scmp.lt.s32.totalorder %s19, 2
      // Predicated region
      $region49: #{seq_classifier_forward.1} parent=5 // pred_check
        %p303 = pneg %p302
      $region50: #{seq_classifier_forward.1} parent=5 // pred_check_branch
        %305 = sbr.rel (%p303) target = $region52
      $region51: #{seq_classifier_forward.1} parent=5 // pred_region
        // Predicated region
        $region53: #{seq_classifier_forward.1} parent=51 // pred_check
          %p306 = pneg %p39
        $region54: #{seq_classifier_forward.1} parent=51 // pred_check_branch
          %308 = sbr.rel (%p306) target = $region56
        $region55: #{seq_classifier_forward.1} parent=51 // pred_region
          %p309 = scmp.lt.s32.totalorder %s19, 1
          %s310 = scalar_select %p309, %s19, 1
          %s311 = smul.addr %s310, 4
          %s312 = scalar_lea.vmem %s0, %s311
        $region56: #{seq_classifier_forward.1} parent=51 // pred_fallthru
          _
      $region52: #{seq_classifier_forward.1} parent=5 // pred_fallthru
        _
      %p313 = scmp.le.s32.totalorder 1, %s19
      %p314 = scmp.lt.s32.totalorder %s19, 3
      %p315 = pnand %p313, %p314
      %p316 = pneg %p315
      // Predicated region
      $region57: #{seq_classifier_forward.1} parent=5 // pred_check
        _
      $region58: #{seq_classifier_forward.1} parent=5 // pred_check_branch
        %318 = sbr.rel (%p315) target = $region60
      $region59: #{seq_classifier_forward.1} parent=5 // pred_region
        %s319 = ssub.s32 %s19, 1
        %p320 = scmp.lt.s32.totalorder %s24, 1
        %s321 = scalar_select %p320, %s24, 1
        %s322 = smul.addr %s321, 4
        %s323 = scalar_lea.vmem %s0, %s322
        %p324 = pneg %p45
        %p325 = pneg %p42
        %p326 = pneg %p66
        %p327 = pneg %p63
        %p328 = pneg %p87
        %p329 = pneg %p84
        %p330 = pneg %p108
        %p331 = pneg %p105
        %p332 = pneg %p129
        %p333 = pneg %p126
        %p334 = pneg %p150
        %p335 = pneg %p147
        %p336 = pneg %p171
        %p337 = pneg %p168
        %p338 = pneg %p192
        %p339 = pneg %p189
        %p340 = pneg %p213
        %p341 = pneg %p210
        %p342 = pneg %p234
        %p343 = pneg %p231
        %p344 = pneg %p260
        %p345 = pneg %p257
        %s346 = sand.u32 %s247, 1
        %s347 = scalar_lea.sflag [#allocation3], %s346
        %s348 = sand.u32 %s247, 1
        %s349 = smul.addr %s348, 32
        %s350 = scalar_lea.vmem [#allocation2], %s349
        %p351 = scmp.lt.s32.totalorder %s24, 1
        %s352 = scalar_select %p351, %s24, 1
        %s353 = smul.addr %s352, 4
        %s354 = scalar_lea.vmem %s0, %s353
        %v355 = vld [vmem:[%s354] sm:$0xf]
        %v356 = vld [vmem:[%s1] sm:$0xff]
        %v357 = vld [vmem:[%s1 + $0x8] sm:$0xff]
        %v358 = vld [vmem:[%s1 + $0x10] sm:$0xff]
        %v359 = vld [vmem:[%s1 + $0x18] sm:$0xff]
        %v360 = vld [vmem:[%s2] sm:$0xff]
        %v361 = vld [vmem:[%s2 + $0x8] sm:$0xff]
        %v362 = vld [vmem:[%s2 + $0x10] sm:$0xff]
        %v363 = vld [vmem:[%s2 + $0x18] sm:$0xff]
        %365 = vset.pattern.permute.xlu0 0
        %366 = vperm.xlu0 %365, %v360
        %v367 = vpop.permute.xlu0 %366
        %370 = vset.pattern.permute.xlu0 0
        %371 = vperm.xlu0 %370, %v361
        %v372 = vpop.permute.xlu0 %371
        %375 = vset.pattern.permute.xlu0 0
        %376 = vperm.xlu0 %375, %v362
        %v377 = vpop.permute.xlu0 %376
        %380 = vset.pattern.permute.xlu0 0
        %381 = vperm.xlu0 %380, %v363
        %v382 = vpop.permute.xlu0 %381
        %vm384 = vcmask 31744
        %v386 = vsel %vm384, %v356, 0
        %v389 = vsel %vm384, %v357, 0
        %v392 = vsel %vm384, %v358, 0
        %v395 = vsel %vm384, %v359, 0
        %vm397 = vcmask 1043456
        %v399 = vsel %vm397, %v355, 0
        %401 = vmatprep.subr.mxu0 0.0
        %402 = vmatpush1.msra.mxu0 %v399
        %403 = vmatprep.subr.mxu0 0.0
        %404 = vmatpush1.msra.mxu0 0.0
        %405 = vmatprep.subr.mxu0 0.0
        %406 = vmatpush1.msra.mxu0 0.0
        %407 = vmatprep.subr.mxu0 0.0
        %408 = vmatpush1.msra.mxu0 0.0
        %409 = vmatprep.subr.mxu0 0.0
        %410 = vmatpush1.msra.mxu0 0.0
        %411 = vmatprep.subr.mxu0 0.0
        %412 = vmatpush1.msra.mxu0 0.0
        %413 = vmatprep.subr.mxu0 0.0
        %414 = vmatpush1.msra.mxu0 0.0
        %415 = vmatprep.subr.mxu0 0.0
        %416 = vmatpush1.msra.mxu0 0.0
        %417 = vmatprep.subr.mxu0 0.0
        %418 = vmatpush1.msra.mxu0 0.0
        %419 = vmatprep.subr.mxu0 0.0
        %420 = vmatpush1.msra.mxu0 0.0
        %421 = vmatprep.subr.mxu0 0.0
        %422 = vmatpush1.msra.mxu0 0.0
        %423 = vmatprep.subr.mxu0 0.0
        %424 = vmatpush1.msra.mxu0 0.0
        %425 = vmatprep.subr.mxu0 0.0
        %426 = vmatpush1.msra.mxu0 0.0
        %427 = vmatprep.subr.mxu0 0.0
        %428 = vmatpush1.msra.mxu0 0.0
        %429 = vmatprep.subr.mxu0 0.0
        %430 = vmatpush1.msra.mxu0 0.0
        %431 = vmatprep.subr.mxu0 0.0
        %432 = vmatpush1.msra.mxu0 0.0
        %433 = vmatprep.subr.mxu0 0.0
        %434 = vmatpush1.msra.mxu0 0.0
        %435 = vmatprep.subr.mxu0 0.0
        %436 = vmatpush1.msra.mxu0 0.0
        %437 = vmatprep.subr.mxu0 0.0
        %438 = vmatpush1.msra.mxu0 0.0
        %439 = vmatprep.subr.mxu0 0.0
        %440 = vmatpush1.msra.mxu0 0.0
        %441 = vmatprep.subr.mxu0 0.0
        %442 = vmatpush1.msra.mxu0 0.0
        %443 = vmatprep.subr.mxu0 0.0
        %444 = vmatpush1.msra.mxu0 0.0
        %445 = vmatprep.subr.mxu0 0.0
        %446 = vmatpush1.msra.mxu0 0.0
        %447 = vmatprep.subr.mxu0 0.0
        %448 = vmatpush1.msra.mxu0 0.0
        %449 = vmatprep.subr.mxu0 0.0
        %450 = vmatpush1.msra.mxu0 0.0
        %451 = vmatprep.subr.mxu0 0.0
        %452 = vmatpush1.msra.mxu0 0.0
        %453 = vmatprep.subr.mxu0 0.0
        %454 = vmatpush1.msra.mxu0 0.0
        %455 = vmatprep.subr.mxu0 0.0
        %456 = vmatpush1.msra.mxu0 0.0
        %457 = vmatprep.subr.mxu0 0.0
        %458 = vmatpush1.msra.mxu0 0.0
        %459 = vmatprep.subr.mxu0 0.0
        %460 = vmatpush1.msra.mxu0 0.0
        %461 = vmatprep.subr.mxu0 0.0
        %462 = vmatpush1.msra.mxu0 0.0
        %463 = vmatprep.subr.mxu0 0.0
        %464 = vmatpush1.msra.mxu0 0.0
        %465 = vmatprep.mubr.f32.mxu0 0.0
        %466 = vmatmul.mubr.f32.gmra.mrb[0].mxu0 %v386
        %v467 = vpop.f32.mrb[0].mxu0
        %v468 = vadd.f32 %v367, %v467
        %v469 = vpop.f32.mrb[0].mxu0
        %470 = vmatprep.mubr.f32.mxu0 0.0
        %471 = vmatmul.mubr.f32.gmra.mrb[0].mxu0 %v389
        %v472 = vpop.f32.mrb[0].mxu0
        %v473 = vadd.f32 %v372, %v472
        %v474 = vpop.f32.mrb[0].mxu0
        %475 = vmatprep.mubr.f32.mxu0 0.0
        %476 = vmatmul.mubr.f32.gmra.mrb[0].mxu0 %v392
        %v477 = vpop.f32.mrb[0].mxu0
        %v478 = vadd.f32 %v377, %v477
        %v479 = vpop.f32.mrb[0].mxu0
        %480 = vmatprep.mubr.f32.mxu0 0.0
        %481 = vmatmul.mubr.f32.gmra.mrb[0].mxu0 %v395
        %v482 = vpop.f32.mrb[0].mxu0
        %v483 = vadd.f32 %v382, %v482
        %v484 = vpop.f32.mrb[0].mxu0
        %485 = vdwg.mxu0
        %v486 = vlaneseq
        %v487 = vand.u32 %v486, 127
        %488 = vrot.lane.b32.xlu0 %v468, 1
        %v489 = vpop.permute.xlu0 %488
        %490 = vrot.lane.b32.xlu0 %v473, 1
        %v491 = vpop.permute.xlu0 %490
        %492 = vrot.lane.b32.xlu0 %v478, 1
        %v493 = vpop.permute.xlu0 %492
        %494 = vrot.lane.b32.xlu0 %v483, 1
        %v495 = vpop.permute.xlu0 %494
        %vm496 = vcmp.lt.s32.totalorder %v487, 1
        %v497 = vsel %vm496, 1, 0
        %vm498 = vcmp.eq.s32.totalorder %v497, 1
        %v499 = vsel %vm498, 0.0, %v489
        %v500 = vsel %vm498, 0.0, %v491
        %v501 = vsel %vm498, 0.0, %v493
        %v502 = vsel %vm498, 0.0, %v495
        %v503 = vld [vmem:[%s3] sm:$0xff]
        %v504 = vld [vmem:[%s3 + $0x8] sm:$0xff]
        %v505 = vld [vmem:[%s3 + $0x10] sm:$0xff]
        %v506 = vld [vmem:[%s3 + $0x18] sm:$0xff]
        %v507 = vld [vmem:[%s3 + $0x20] sm:$0xff]
        %v508 = vld [vmem:[%s3 + $0x28] sm:$0xff]
        %v509 = vld [vmem:[%s3 + $0x30] sm:$0xff]
        %v510 = vld [vmem:[%s3 + $0x38] sm:$0xff]
        %v511 = vld [vmem:[%s4] sm:$0xff]
        %v512 = vld [vmem:[%s4 + $0x8] sm:$0xff]
        %v513 = vld [vmem:[%s4 + $0x10] sm:$0xff]
        %v514 = vld [vmem:[%s4 + $0x18] sm:$0xff]
        %v515 = vld [vmem:[%s4 + $0x20] sm:$0xff]
        %v516 = vld [vmem:[%s4 + $0x28] sm:$0xff]
        %v517 = vld [vmem:[%s4 + $0x30] sm:$0xff]
        %v518 = vld [vmem:[%s4 + $0x38] sm:$0xff]
        %vm519 = vcmask 261120
        %v521 = vsel %vm519, %v511, 0
        %v524 = vsel %vm519, %v512, 0
        %v527 = vsel %vm519, %v513, 0
        %v530 = vsel %vm519, %v514, 0
        %v533 = vsel %vm519, %v515, 0
        %v536 = vsel %vm519, %v516, 0
        %v539 = vsel %vm519, %v517, 0
        %v542 = vsel %vm519, %v518, 0
        %544 = vmatprep.subr.mxu0 0.0
        %545 = vmatpush1.msra.mxu0 %v468
        %546 = vmatprep.subr.mxu0 0.0
        %547 = vmatpush1.msra.mxu0 %v473
        %548 = vmatprep.subr.mxu0 0.0
        %549 = vmatpush1.msra.mxu0 %v478
        %550 = vmatprep.subr.mxu0 0.0
        %551 = vmatpush1.msra.mxu0 %v483
        %552 = vmatprep.subr.mxu0 0.0
        %553 = vmatpush1.msra.mxu0 0.0
        %554 = vmatprep.subr.mxu0 0.0
        %555 = vmatpush1.msra.mxu0 0.0
        %556 = vmatprep.subr.mxu0 0.0
        %557 = vmatpush1.msra.mxu0 0.0
        %558 = vmatprep.subr.mxu0 0.0
        %559 = vmatpush1.msra.mxu0 0.0
        %560 = vmatprep.subr.mxu0 0.0
        %561 = vmatpush1.msra.mxu0 0.0
        %562 = vmatprep.subr.mxu0 0.0
        %563 = vmatpush1.msra.mxu0 0.0
        %564 = vmatprep.subr.mxu0 0.0
        %565 = vmatpush1.msra.mxu0 0.0
        %566 = vmatprep.subr.mxu0 0.0
        %567 = vmatpush1.msra.mxu0 0.0
        %568 = vmatprep.subr.mxu0 0.0
        %569 = vmatpush1.msra.mxu0 0.0
        %570 = vmatprep.subr.mxu0 0.0
        %571 = vmatpush1.msra.mxu0 0.0
        %572 = vmatprep.subr.mxu0 0.0
        %573 = vmatpush1.msra.mxu0 0.0
        %574 = vmatprep.subr.mxu0 0.0
        %575 = vmatpush1.msra.mxu0 0.0
        %576 = vmatprep.subr.mxu0 0.0
        %577 = vmatpush1.msra.mxu0 0.0
        %578 = vmatprep.subr.mxu0 0.0
        %579 = vmatpush1.msra.mxu0 0.0
        %580 = vmatprep.subr.mxu0 0.0
        %581 = vmatpush1.msra.mxu0 0.0
        %582 = vmatprep.subr.mxu0 0.0
        %583 = vmatpush1.msra.mxu0 0.0
        %584 = vmatprep.subr.mxu0 0.0
        %585 = vmatpush1.msra.mxu0 0.0
        %586 = vmatprep.subr.mxu0 0.0
        %587 = vmatpush1.msra.mxu0 0.0
        %588 = vmatprep.subr.mxu0 0.0
        %589 = vmatpush1.msra.mxu0 0.0
        %590 = vmatprep.subr.mxu0 0.0
        %591 = vmatpush1.msra.mxu0 0.0
        %592 = vmatprep.subr.mxu0 0.0
        %593 = vmatpush1.msra.mxu0 0.0
        %594 = vmatprep.subr.mxu0 0.0
        %595 = vmatpush1.msra.mxu0 0.0
        %596 = vmatprep.subr.mxu0 0.0
        %597 = vmatpush1.msra.mxu0 0.0
        %598 = vmatprep.subr.mxu0 0.0
        %599 = vmatpush1.msra.mxu0 0.0
        %600 = vmatprep.subr.mxu0 0.0
        %601 = vmatpush1.msra.mxu0 0.0
        %602 = vmatprep.subr.mxu0 0.0
        %603 = vmatpush1.msra.mxu0 0.0
        %604 = vmatprep.subr.mxu0 0.0
        %605 = vmatpush1.msra.mxu0 0.0
        %606 = vmatprep.subr.mxu0 0.0
        %607 = vmatpush1.msra.mxu0 0.0
        %608 = vmatprep.mubr.f32.mxu0 0.0
        %609 = vmatmul.mubr.f32.gmra.mrb[0].mxu0 %v521
        %v610 = vpop.f32.mrb[0].mxu0
        %v611 = vadd.f32 0.0, %v610
        %v612 = vpop.f32.mrb[0].mxu0
        %613 = vmatprep.mubr.f32.mxu0 0.0
        %614 = vmatmul.mubr.f32.gmra.mrb[0].mxu0 %v524
        %v615 = vpop.f32.mrb[0].mxu0
        %v616 = vadd.f32 0.0, %v615
        %v617 = vpop.f32.mrb[0].mxu0
        %618 = vmatprep.mubr.f32.mxu0 0.0
        %619 = vmatmul.mubr.f32.gmra.mrb[0].mxu0 %v527
        %v620 = vpop.f32.mrb[0].mxu0
        %v621 = vadd.f32 0.0, %v620
        %v622 = vpop.f32.mrb[0].mxu0
        %623 = vmatprep.mubr.f32.mxu0 0.0
        %624 = vmatmul.mubr.f32.gmra.mrb[0].mxu0 %v530
        %v625 = vpop.f32.mrb[0].mxu0
        %v626 = vadd.f32 0.0, %v625
        %v627 = vpop.f32.mrb[0].mxu0
        %628 = vmatprep.mubr.f32.mxu0 0.0
        %629 = vmatmul.mubr.f32.gmra.mrb[0].mxu0 %v533
        %v630 = vpop.f32.mrb[0].mxu0
        %v631 = vadd.f32 0.0, %v630
        %v632 = vpop.f32.mrb[0].mxu0
        %633 = vmatprep.mubr.f32.mxu0 0.0
        %634 = vmatmul.mubr.f32.gmra.mrb[0].mxu0 %v536
        %v635 = vpop.f32.mrb[0].mxu0
        %v636 = vadd.f32 0.0, %v635
        %v637 = vpop.f32.mrb[0].mxu0
        %638 = vmatprep.mubr.f32.mxu0 0.0
        %639 = vmatmul.mubr.f32.gmra.mrb[0].mxu0 %v539
        %v640 = vpop.f32.mrb[0].mxu0
        %v641 = vadd.f32 0.0, %v640
        %v642 = vpop.f32.mrb[0].mxu0
        %643 = vmatprep.mubr.f32.mxu0 0.0
        %644 = vmatmul.mubr.f32.gmra.mrb[0].mxu0 %v542
        %v645 = vpop.f32.mrb[0].mxu0
        %v646 = vadd.f32 0.0, %v645
        %v647 = vpop.f32.mrb[0].mxu0
        %648 = vdwg.mxu0
        %v650 = vsel %vm519, %v503, 0
        %v653 = vsel %vm519, %v504, 0
        %v656 = vsel %vm519, %v505, 0
        %v659 = vsel %vm519, %v506, 0
        %v662 = vsel %vm519, %v507, 0
        %v665 = vsel %vm519, %v508, 0
        %v668 = vsel %vm519, %v509, 0
        %v671 = vsel %vm519, %v510, 0
        %673 = vmatprep.subr.mxu0 0.0
        %674 = vmatpush1.msra.mxu0 %v499
        %675 = vmatprep.subr.mxu0 0.0
        %676 = vmatpush1.msra.mxu0 %v500
        %677 = vmatprep.subr.mxu0 0.0
        %678 = vmatpush1.msra.mxu0 %v501
        %679 = vmatprep.subr.mxu0 0.0
        %680 = vmatpush1.msra.mxu0 %v502
        %681 = vmatprep.subr.mxu0 0.0
        %682 = vmatpush1.msra.mxu0 0.0
        %683 = vmatprep.subr.mxu0 0.0
        %684 = vmatpush1.msra.mxu0 0.0
        %685 = vmatprep.subr.mxu0 0.0
        %686 = vmatpush1.msra.mxu0 0.0
        %687 = vmatprep.subr.mxu0 0.0
        %688 = vmatpush1.msra.mxu0 0.0
        %689 = vmatprep.subr.mxu0 0.0
        %690 = vmatpush1.msra.mxu0 0.0
        %691 = vmatprep.subr.mxu0 0.0
        %692 = vmatpush1.msra.mxu0 0.0
        %693 = vmatprep.subr.mxu0 0.0
        %694 = vmatpush1.msra.mxu0 0.0
        %695 = vmatprep.subr.mxu0 0.0
        %696 = vmatpush1.msra.mxu0 0.0
        %697 = vmatprep.subr.mxu0 0.0
        %698 = vmatpush1.msra.mxu0 0.0
        %699 = vmatprep.subr.mxu0 0.0
        %700 = vmatpush1.msra.mxu0 0.0
        %701 = vmatprep.subr.mxu0 0.0
        %702 = vmatpush1.msra.mxu0 0.0
        %703 = vmatprep.subr.mxu0 0.0
        %704 = vmatpush1.msra.mxu0 0.0
        %705 = vmatprep.subr.mxu0 0.0
        %706 = vmatpush1.msra.mxu0 0.0
        %707 = vmatprep.subr.mxu0 0.0
        %708 = vmatpush1.msra.mxu0 0.0
        %709 = vmatprep.subr.mxu0 0.0
        %710 = vmatpush1.msra.mxu0 0.0
        %711 = vmatprep.subr.mxu0 0.0
        %712 = vmatpush1.msra.mxu0 0.0
        %713 = vmatprep.subr.mxu0 0.0
        %714 = vmatpush1.msra.mxu0 0.0
        %715 = vmatprep.subr.mxu0 0.0
        %716 = vmatpush1.msra.mxu0 0.0
        %717 = vmatprep.subr.mxu0 0.0
        %718 = vmatpush1.msra.mxu0 0.0
        %719 = vmatprep.subr.mxu0 0.0
        %720 = vmatpush1.msra.mxu0 0.0
        %721 = vmatprep.subr.mxu0 0.0
        %722 = vmatpush1.msra.mxu0 0.0
        %723 = vmatprep.subr.mxu0 0.0
        %724 = vmatpush1.msra.mxu0 0.0
        %725 = vmatprep.subr.mxu0 0.0
        %726 = vmatpush1.msra.mxu0 0.0
        %727 = vmatprep.subr.mxu0 0.0
        %728 = vmatpush1.msra.mxu0 0.0
        %729 = vmatprep.subr.mxu0 0.0
        %730 = vmatpush1.msra.mxu0 0.0
        %731 = vmatprep.subr.mxu0 0.0
        %732 = vmatpush1.msra.mxu0 0.0
        %733 = vmatprep.subr.mxu0 0.0
        %734 = vmatpush1.msra.mxu0 0.0
        %735 = vmatprep.subr.mxu0 0.0
        %736 = vmatpush1.msra.mxu0 0.0
        %737 = vmatprep.mubr.f32.mxu0 0.0
        %738 = vmatmul.mubr.f32.gmra.mrb[0].mxu0 %v650
        %v739 = vpop.f32.mrb[0].mxu0
        %v740 = vadd.f32 %v611, %v739
        %v741 = vpop.f32.mrb[0].mxu0
        %742 = vmatprep.mubr.f32.mxu0 0.0
        %743 = vmatmul.mubr.f32.gmra.mrb[0].mxu0 %v653
        %v744 = vpop.f32.mrb[0].mxu0
        %v745 = vadd.f32 %v616, %v744
        %v746 = vpop.f32.mrb[0].mxu0
        %747 = vmatprep.mubr.f32.mxu0 0.0
        %748 = vmatmul.mubr.f32.gmra.mrb[0].mxu0 %v656
        %v749 = vpop.f32.mrb[0].mxu0
        %v750 = vadd.f32 %v621, %v749
        %v751 = vpop.f32.mrb[0].mxu0
        %752 = vmatprep.mubr.f32.mxu0 0.0
        %753 = vmatmul.mubr.f32.gmra.mrb[0].mxu0 %v659
        %v754 = vpop.f32.mrb[0].mxu0
        %v755 = vadd.f32 %v626, %v754
        %v756 = vpop.f32.mrb[0].mxu0
        %757 = vmatprep.mubr.f32.mxu0 0.0
        %758 = vmatmul.mubr.f32.gmra.mrb[0].mxu0 %v662
        %v759 = vpop.f32.mrb[0].mxu0
        %v760 = vadd.f32 %v631, %v759
        %v761 = vpop.f32.mrb[0].mxu0
        %762 = vmatprep.mubr.f32.mxu0 0.0
        %763 = vmatmul.mubr.f32.gmra.mrb[0].mxu0 %v665
        %v764 = vpop.f32.mrb[0].mxu0
        %v765 = vadd.f32 %v636, %v764
        %v766 = vpop.f32.mrb[0].mxu0
        %767 = vmatprep.mubr.f32.mxu0 0.0
        %768 = vmatmul.mubr.f32.gmra.mrb[0].mxu0 %v668
        %v769 = vpop.f32.mrb[0].mxu0
        %v770 = vadd.f32 %v641, %v769
        %v771 = vpop.f32.mrb[0].mxu0
        %772 = vmatprep.mubr.f32.mxu0 0.0
        %773 = vmatmul.mubr.f32.gmra.mrb[0].mxu0 %v671
        %v774 = vpop.f32.mrb[0].mxu0
        %v775 = vadd.f32 %v646, %v774
        %v776 = vpop.f32.mrb[0].mxu0
        %777 = vdwg.mxu0
        %v778 = vld [vmem:[%s5] sm:$0xff]
        %v779 = vld [vmem:[%s5 + $0x8] sm:$0xff]
        %v780 = vld [vmem:[%s5 + $0x10] sm:$0xff]
        %v781 = vld [vmem:[%s5 + $0x18] sm:$0xff]
        %v782 = vld [vmem:[%s5 + $0x20] sm:$0xff]
        %v783 = vld [vmem:[%s5 + $0x28] sm:$0xff]
        %v784 = vld [vmem:[%s5 + $0x30] sm:$0xff]
        %v785 = vld [vmem:[%s5 + $0x38] sm:$0xff]
        %787 = vset.pattern.permute.xlu0 0
        %788 = vperm.xlu0 %787, %v778
        %v789 = vpop.permute.xlu0 %788
        %792 = vset.pattern.permute.xlu0 0
        %793 = vperm.xlu0 %792, %v779
        %v794 = vpop.permute.xlu0 %793
        %797 = vset.pattern.permute.xlu0 0
        %798 = vperm.xlu0 %797, %v780
        %v799 = vpop.permute.xlu0 %798
        %802 = vset.pattern.permute.xlu0 0
        %803 = vperm.xlu0 %802, %v781
        %v804 = vpop.permute.xlu0 %803
        %807 = vset.pattern.permute.xlu0 0
        %808 = vperm.xlu0 %807, %v782
        %v809 = vpop.permute.xlu0 %808
        %812 = vset.pattern.permute.xlu0 0
        %813 = vperm.xlu0 %812, %v783
        %v814 = vpop.permute.xlu0 %813
        %817 = vset.pattern.permute.xlu0 0
        %818 = vperm.xlu0 %817, %v784
        %v819 = vpop.permute.xlu0 %818
        %822 = vset.pattern.permute.xlu0 0
        %823 = vperm.xlu0 %822, %v785
        %v824 = vpop.permute.xlu0 %823
        %v826 = vadd.f32 %v740, %v789
        %v827 = vadd.f32 %v745, %v794
        %v828 = vadd.f32 %v750, %v799
        %v829 = vadd.f32 %v755, %v804
        %v830 = vadd.f32 %v760, %v809
        %v831 = vadd.f32 %v765, %v814
        %v832 = vadd.f32 %v770, %v819
        %v833 = vadd.f32 %v775, %v824
        %v834 = vxor.u32 %v826, 2147483648
        %v835 = vxor.u32 %v827, 2147483648
        %v836 = vxor.u32 %v828, 2147483648
        %v837 = vxor.u32 %v829, 2147483648
        %v838 = vmul.f32 %v834, 1.442695
        %v839 = vpow.pop %v838
        %v840 = vmul.f32 %v835, 1.442695
        %v841 = vpow.pop %v840
        %v842 = vmul.f32 %v836, 1.442695
        %v843 = vpow.pop %v842
        %v844 = vmul.f32 %v837, 1.442695
        %v845 = vpow.pop %v844
        %v846 = vadd.f32 %v839, 1.0
        %v847 = vadd.f32 %v841, 1.0
        %v848 = vadd.f32 %v843, 1.0
        %v849 = vadd.f32 %v845, 1.0
        %v850 = vrcp.pop %v846
        %v851 = vmul.f32 1.0, %v850
        %v852 = vrcp.pop %v847
        %v853 = vmul.f32 1.0, %v852
        %v854 = vrcp.pop %v848
        %v855 = vmul.f32 1.0, %v854
        %v856 = vrcp.pop %v849
        %v857 = vmul.f32 1.0, %v856
        %v858 = vsub.f32 %v830, %v468
        %v859 = vsub.f32 %v831, %v473
        %v860 = vsub.f32 %v832, %v478
        %v861 = vsub.f32 %v833, %v483
        %v862 = vmul.f32 %v851, %v858
        %v863 = vmul.f32 %v853, %v859
        %v864 = vmul.f32 %v855, %v860
        %v865 = vmul.f32 %v857, %v861
        %v866 = vadd.f32 %v468, %v862
        %v867 = vadd.f32 %v473, %v863
        %v868 = vadd.f32 %v478, %v864
        %v869 = vadd.f32 %v483, %v865
        %870 = vrot.lane.b32.xlu0 %v866, 2
        %v871 = vpop.permute.xlu0 %870
        %872 = vrot.lane.b32.xlu0 %v867, 2
        %v873 = vpop.permute.xlu0 %872
        %874 = vrot.lane.b32.xlu0 %v868, 2
        %v875 = vpop.permute.xlu0 %874
        %876 = vrot.lane.b32.xlu0 %v869, 2
        %v877 = vpop.permute.xlu0 %876
        %vm878 = vcmp.lt.s32.totalorder %v487, 2
        %v879 = vsel %vm878, 1, 0
        %vm880 = vcmp.eq.s32.totalorder %v879, 1
        %v881 = vsel %vm880, 0.0, %v871
        %v882 = vsel %vm880, 0.0, %v873
        %v883 = vsel %vm880, 0.0, %v875
        %v884 = vsel %vm880, 0.0, %v877
        %s885 = scalar_lea.vmem %s3, 64
        %v886 = vld [vmem:[%s885] sm:$0xff]
        %v887 = vld [vmem:[%s885 + $0x8] sm:$0xff]
        %v888 = vld [vmem:[%s885 + $0x10] sm:$0xff]
        %v889 = vld [vmem:[%s885 + $0x18] sm:$0xff]
        %v890 = vld [vmem:[%s885 + $0x20] sm:$0xff]
        %v891 = vld [vmem:[%s885 + $0x28] sm:$0xff]
        %v892 = vld [vmem:[%s885 + $0x30] sm:$0xff]
        %v893 = vld [vmem:[%s885 + $0x38] sm:$0xff]
        %s894 = scalar_lea.vmem %s4, 64
        %v895 = vld [vmem:[%s894] sm:$0xff]
        %v896 = vld [vmem:[%s894 + $0x8] sm:$0xff]
        %v897 = vld [vmem:[%s894 + $0x10] sm:$0xff]
        %v898 = vld [vmem:[%s894 + $0x18] sm:$0xff]
        %v899 = vld [vmem:[%s894 + $0x20] sm:$0xff]
        %v900 = vld [vmem:[%s894 + $0x28] sm:$0xff]
        %v901 = vld [vmem:[%s894 + $0x30] sm:$0xff]
        %v902 = vld [vmem:[%s894 + $0x38] sm:$0xff]
        %v904 = vsel %vm519, %v895, 0
        %v907 = vsel %vm519, %v896, 0
        %v910 = vsel %vm519, %v897, 0
        %v913 = vsel %vm519, %v898, 0
        %v916 = vsel %vm519, %v899, 0
        %v919 = vsel %vm519, %v900, 0
        %v922 = vsel %vm519, %v901, 0
        %v925 = vsel %vm519, %v902, 0
        %927 = vmatprep.subr.mxu0 0.0
        %928 = vmatpush1.msra.mxu0 %v866
        %929 = vmatprep.subr.mxu0 0.0
        %930 = vmatpush1.msra.mxu0 %v867
        %931 = vmatprep.subr.mxu0 0.0
        %932 = vmatpush1.msra.mxu0 %v868
        %933 = vmatprep.subr.mxu0 0.0
        %934 = vmatpush1.msra.mxu0 %v869
        %935 = vmatprep.subr.mxu0 0.0
        %936 = vmatpush1.msra.mxu0 0.0
        %937 = vmatprep.subr.mxu0 0.0
        %938 = vmatpush1.msra.mxu0 0.0
        %939 = vmatprep.subr.mxu0 0.0
        %940 = vmatpush1.msra.mxu0 0.0
        %941 = vmatprep.subr.mxu0 0.0
        %942 = vmatpush1.msra.mxu0 0.0
        %943 = vmatprep.subr.mxu0 0.0
        %944 = vmatpush1.msra.mxu0 0.0
        %945 = vmatprep.subr.mxu0 0.0
        %946 = vmatpush1.msra.mxu0 0.0
        %947 = vmatprep.subr.mxu0 0.0
        %948 = vmatpush1.msra.mxu0 0.0
        %949 = vmatprep.subr.mxu0 0.0
        %950 = vmatpush1.msra.mxu0 0.0
        %951 = vmatprep.subr.mxu0 0.0
        %952 = vmatpush1.msra.mxu0 0.0
        %953 = vmatprep.subr.mxu0 0.0
        %954 = vmatpush1.msra.mxu0 0.0
        %955 = vmatprep.subr.mxu0 0.0
        %956 = vmatpush1.msra.mxu0 0.0
        %957 = vmatprep.subr.mxu0 0.0
        %958 = vmatpush1.msra.mxu0 0.0
        %959 = vmatprep.subr.mxu0 0.0
        %960 = vmatpush1.msra.mxu0 0.0
        %961 = vmatprep.subr.mxu0 0.0
        %962 = vmatpush1.msra.mxu0 0.0
        %963 = vmatprep.subr.mxu0 0.0
        %964 = vmatpush1.msra.mxu0 0.0
        %965 = vmatprep.subr.mxu0 0.0
        %966 = vmatpush1.msra.mxu0 0.0
        %967 = vmatprep.subr.mxu0 0.0
        %968 = vmatpush1.msra.mxu0 0.0
        %969 = vmatprep.subr.mxu0 0.0
        %970 = vmatpush1.msra.mxu0 0.0
        %971 = vmatprep.subr.mxu0 0.0
        %972 = vmatpush1.msra.mxu0 0.0
        %973 = vmatprep.subr.mxu0 0.0
        %974 = vmatpush1.msra.mxu0 0.0
        %975 = vmatprep.subr.mxu0 0.0
        %976 = vmatpush1.msra.mxu0 0.0
        %977 = vmatprep.subr.mxu0 0.0
        %978 = vmatpush1.msra.mxu0 0.0
        %979 = vmatprep.subr.mxu0 0.0
        %980 = vmatpush1.msra.mxu0 0.0
        %981 = vmatprep.subr.mxu0 0.0
        %982 = vmatpush1.msra.mxu0 0.0
        %983 = vmatprep.subr.mxu0 0.0
        %984 = vmatpush1.msra.mxu0 0.0
        %985 = vmatprep.subr.mxu0 0.0
        %986 = vmatpush1.msra.mxu0 0.0
        %987 = vmatprep.subr.mxu0 0.0
        %988 = vmatpush1.msra.mxu0 0.0
        %989 = vmatprep.subr.mxu0 0.0
        %990 = vmatpush1.msra.mxu0 0.0
        %991 = vmatprep.mubr.f32.mxu0 0.0
        %992 = vmatmul.mubr.f32.gmra.mrb[0].mxu0 %v904
        %v993 = vpop.f32.mrb[0].mxu0
        %v994 = vadd.f32 0.0, %v993
        %v995 = vpop.f32.mrb[0].mxu0
        %996 = vmatprep.mubr.f32.mxu0 0.0
        %997 = vmatmul.mubr.f32.gmra.mrb[0].mxu0 %v907
        %v998 = vpop.f32.mrb[0].mxu0
        %v999 = vadd.f32 0.0, %v998
        %v1000 = vpop.f32.mrb[0].mxu0
        %1001 = vmatprep.mubr.f32.mxu0 0.0
        %1002 = vmatmul.mubr.f32.gmra.mrb[0].mxu0 %v910
        %v1003 = vpop.f32.mrb[0].mxu0
        %v1004 = vadd.f32 0.0, %v1003
        %v1005 = vpop.f32.mrb[0].mxu0
        %1006 = vmatprep.mubr.f32.mxu0 0.0
        %1007 = vmatmul.mubr.f32.gmra.mrb[0].mxu0 %v913
        %v1008 = vpop.f32.mrb[0].mxu0
        %v1009 = vadd.f32 0.0, %v1008
        %v1010 = vpop.f32.mrb[0].mxu0
        %1011 = vmatprep.mubr.f32.mxu0 0.0
        %1012 = vmatmul.mubr.f32.gmra.mrb[0].mxu0 %v916
        %v1013 = vpop.f32.mrb[0].mxu0
        %v1014 = vadd.f32 0.0, %v1013
        %v1015 = vpop.f32.mrb[0].mxu0
        %1016 = vmatprep.mubr.f32.mxu0 0.0
        %1017 = vmatmul.mubr.f32.gmra.mrb[0].mxu0 %v919
        %v1018 = vpop.f32.mrb[0].mxu0
        %v1019 = vadd.f32 0.0, %v1018
        %v1020 = vpop.f32.mrb[0].mxu0
        %1021 = vmatprep.mubr.f32.mxu0 0.0
        %1022 = vmatmul.mubr.f32.gmra.mrb[0].mxu0 %v922
        %v1023 = vpop.f32.mrb[0].mxu0
        %v1024 = vadd.f32 0.0, %v1023
        %v1025 = vpop.f32.mrb[0].mxu0
        %1026 = vmatprep.mubr.f32.mxu0 0.0
        %1027 = vmatmul.mubr.f32.gmra.mrb[0].mxu0 %v925
        %v1028 = vpop.f32.mrb[0].mxu0
        %v1029 = vadd.f32 0.0, %v1028
        %v1030 = vpop.f32.mrb[0].mxu0
        %1031 = vdwg.mxu0
        %v1033 = vsel %vm519, %v886, 0
        %v1036 = vsel %vm519, %v887, 0
        %v1039 = vsel %vm519, %v888, 0
        %v1042 = vsel %vm519, %v889, 0
        %v1045 = vsel %vm519, %v890, 0
        %v1048 = vsel %vm519, %v891, 0
        %v1051 = vsel %vm519, %v892, 0
        %v1054 = vsel %vm519, %v893, 0
        %1056 = vmatprep.subr.mxu0 0.0
        %1057 = vmatpush1.msra.mxu0 %v881
        %1058 = vmatprep.subr.mxu0 0.0
        %1059 = vmatpush1.msra.mxu0 %v882
        %1060 = vmatprep.subr.mxu0 0.0
        %1061 = vmatpush1.msra.mxu0 %v883
        %1062 = vmatprep.subr.mxu0 0.0
        %1063 = vmatpush1.msra.mxu0 %v884
        %1064 = vmatprep.subr.mxu0 0.0
        %1065 = vmatpush1.msra.mxu0 0.0
        %1066 = vmatprep.subr.mxu0 0.0
        %1067 = vmatpush1.msra.mxu0 0.0
        %1068 = vmatprep.subr.mxu0 0.0
        %1069 = vmatpush1.msra.mxu0 0.0
        %1070 = vmatprep.subr.mxu0 0.0
        %1071 = vmatpush1.msra.mxu0 0.0
        %1072 = vmatprep.subr.mxu0 0.0
        %1073 = vmatpush1.msra.mxu0 0.0
        %1074 = vmatprep.subr.mxu0 0.0
        %1075 = vmatpush1.msra.mxu0 0.0
        %1076 = vmatprep.subr.mxu0 0.0
        %1077 = vmatpush1.msra.mxu0 0.0
        %1078 = vmatprep.subr.mxu0 0.0
        %1079 = vmatpush1.msra.mxu0 0.0
        %1080 = vmatprep.subr.mxu0 0.0
        %1081 = vmatpush1.msra.mxu0 0.0
        %1082 = vmatprep.subr.mxu0 0.0
        %1083 = vmatpush1.msra.mxu0 0.0
        %1084 = vmatprep.subr.mxu0 0.0
        %1085 = vmatpush1.msra.mxu0 0.0
        %1086 = vmatprep.subr.mxu0 0.0
        %1087 = vmatpush1.msra.mxu0 0.0
        %1088 = vmatprep.subr.mxu0 0.0
        %1089 = vmatpush1.msra.mxu0 0.0
        %1090 = vmatprep.subr.mxu0 0.0
        %1091 = vmatpush1.msra.mxu0 0.0
        %1092 = vmatprep.subr.mxu0 0.0
        %1093 = vmatpush1.msra.mxu0 0.0
        %1094 = vmatprep.subr.mxu0 0.0
        %1095 = vmatpush1.msra.mxu0 0.0
        %1096 = vmatprep.subr.mxu0 0.0
        %1097 = vmatpush1.msra.mxu0 0.0
        %1098 = vmatprep.subr.mxu0 0.0
        %1099 = vmatpush1.msra.mxu0 0.0
        %1100 = vmatprep.subr.mxu0 0.0
        %1101 = vmatpush1.msra.mxu0 0.0
        %1102 = vmatprep.subr.mxu0 0.0
        %1103 = vmatpush1.msra.mxu0 0.0
        %1104 = vmatprep.subr.mxu0 0.0
        %1105 = vmatpush1.msra.mxu0 0.0
        %1106 = vmatprep.subr.mxu0 0.0
        %1107 = vmatpush1.msra.mxu0 0.0
        %1108 = vmatprep.subr.mxu0 0.0
        %1109 = vmatpush1.msra.mxu0 0.0
        %1110 = vmatprep.subr.mxu0 0.0
        %1111 = vmatpush1.msra.mxu0 0.0
        %1112 = vmatprep.subr.mxu0 0.0
        %1113 = vmatpush1.msra.mxu0 0.0
        %1114 = vmatprep.subr.mxu0 0.0
        %1115 = vmatpush1.msra.mxu0 0.0
        %1116 = vmatprep.subr.mxu0 0.0
        %1117 = vmatpush1.msra.mxu0 0.0
        %1118 = vmatprep.subr.mxu0 0.0
        %1119 = vmatpush1.msra.mxu0 0.0
        %1120 = vmatprep.mubr.f32.mxu0 0.0
        %1121 = vmatmul.mubr.f32.gmra.mrb[0].mxu0 %v1033
        %v1122 = vpop.f32.mrb[0].mxu0
        %v1123 = vadd.f32 %v994, %v1122
        %v1124 = vpop.f32.mrb[0].mxu0
        %1125 = vmatprep.mubr.f32.mxu0 0.0
        %1126 = vmatmul.mubr.f32.gmra.mrb[0].mxu0 %v1036
        %v1127 = vpop.f32.mrb[0].mxu0
        %v1128 = vadd.f32 %v999, %v1127
        %v1129 = vpop.f32.mrb[0].mxu0
        %1130 = vmatprep.mubr.f32.mxu0 0.0
        %1131 = vmatmul.mubr.f32.gmra.mrb[0].mxu0 %v1039
        %v1132 = vpop.f32.mrb[0].mxu0
        %v1133 = vadd.f32 %v1004, %v1132
        %v1134 = vpop.f32.mrb[0].mxu0
        %1135 = vmatprep.mubr.f32.mxu0 0.0
        %1136 = vmatmul.mubr.f32.gmra.mrb[0].mxu0 %v1042
        %v1137 = vpop.f32.mrb[0].mxu0
        %v1138 = vadd.f32 %v1009, %v1137
        %v1139 = vpop.f32.mrb[0].mxu0
        %1140 = vmatprep.mubr.f32.mxu0 0.0
        %1141 = vmatmul.mubr.f32.gmra.mrb[0].mxu0 %v1045
        %v1142 = vpop.f32.mrb[0].mxu0
        %v1143 = vadd.f32 %v1014, %v1142
        %v1144 = vpop.f32.mrb[0].mxu0
        %1145 = vmatprep.mubr.f32.mxu0 0.0
        %1146 = vmatmul.mubr.f32.gmra.mrb[0].mxu0 %v1048
        %v1147 = vpop.f32.mrb[0].mxu0
        %v1148 = vadd.f32 %v1019, %v1147
        %v1149 = vpop.f32.mrb[0].mxu0
        %1150 = vmatprep.mubr.f32.mxu0 0.0
        %1151 = vmatmul.mubr.f32.gmra.mrb[0].mxu0 %v1051
        %v1152 = vpop.f32.mrb[0].mxu0
        %v1153 = vadd.f32 %v1024, %v1152
        %v1154 = vpop.f32.mrb[0].mxu0
        %1155 = vmatprep.mubr.f32.mxu0 0.0
        %1156 = vmatmul.mubr.f32.gmra.mrb[0].mxu0 %v1054
        %v1157 = vpop.f32.mrb[0].mxu0
        %v1158 = vadd.f32 %v1029, %v1157
        %v1159 = vpop.f32.mrb[0].mxu0
        %1160 = vdwg.mxu0
        %s1161 = scalar_lea.vmem %s5, 64
        %v1162 = vld [vmem:[%s1161] sm:$0xff]
        %v1163 = vld [vmem:[%s1161 + $0x8] sm:$0xff]
        %v1164 = vld [vmem:[%s1161 + $0x10] sm:$0xff]
        %v1165 = vld [vmem:[%s1161 + $0x18] sm:$0xff]
        %v1166 = vld [vmem:[%s1161 + $0x20] sm:$0xff]
        %v1167 = vld [vmem:[%s1161 + $0x28] sm:$0xff]
        %v1168 = vld [vmem:[%s1161 + $0x30] sm:$0xff]
        %v1169 = vld [vmem:[%s1161 + $0x38] sm:$0xff]
        %1171 = vset.pattern.permute.xlu0 0
        %1172 = vperm.xlu0 %1171, %v1162
        %v1173 = vpop.permute.xlu0 %1172
        %1176 = vset.pattern.permute.xlu0 0
        %1177 = vperm.xlu0 %1176, %v1163
        %v1178 = vpop.permute.xlu0 %1177
        %1181 = vset.pattern.permute.xlu0 0
        %1182 = vperm.xlu0 %1181, %v1164
        %v1183 = vpop.permute.xlu0 %1182
        %1186 = vset.pattern.permute.xlu0 0
        %1187 = vperm.xlu0 %1186, %v1165
        %v1188 = vpop.permute.xlu0 %1187
        %1191 = vset.pattern.permute.xlu0 0
        %1192 = vperm.xlu0 %1191, %v1166
        %v1193 = vpop.permute.xlu0 %1192
        %1196 = vset.pattern.permute.xlu0 0
        %1197 = vperm.xlu0 %1196, %v1167
        %v1198 = vpop.permute.xlu0 %1197
        %1201 = vset.pattern.permute.xlu0 0
        %1202 = vperm.xlu0 %1201, %v1168
        %v1203 = vpop.permute.xlu0 %1202
        %1206 = vset.pattern.permute.xlu0 0
        %1207 = vperm.xlu0 %1206, %v1169
        %v1208 = vpop.permute.xlu0 %1207
        %v1210 = vadd.f32 %v1123, %v1173
        %v1211 = vadd.f32 %v1128, %v1178
        %v1212 = vadd.f32 %v1133, %v1183
        %v1213 = vadd.f32 %v1138, %v1188
        %v1214 = vadd.f32 %v1143, %v1193
        %v1215 = vadd.f32 %v1148, %v1198
        %v1216 = vadd.f32 %v1153, %v1203
        %v1217 = vadd.f32 %v1158, %v1208
        %v1218 = vxor.u32 %v1210, 2147483648
        %v1219 = vxor.u32 %v1211, 2147483648
        %v1220 = vxor.u32 %v1212, 2147483648
        %v1221 = vxor.u32 %v1213, 2147483648
        %v1222 = vmul.f32 %v1218, 1.442695
        %v1223 = vpow.pop %v1222
        %v1224 = vmul.f32 %v1219, 1.442695
        %v1225 = vpow.pop %v1224
        %v1226 = vmul.f32 %v1220, 1.442695
        %v1227 = vpow.pop %v1226
        %v1228 = vmul.f32 %v1221, 1.442695
        %v1229 = vpow.pop %v1228
        %v1230 = vadd.f32 %v1223, 1.0
        %v1231 = vadd.f32 %v1225, 1.0
        %v1232 = vadd.f32 %v1227, 1.0
        %v1233 = vadd.f32 %v1229, 1.0
        %v1234 = vrcp.pop %v1230
        %v1235 = vmul.f32 1.0, %v1234
        %v1236 = vrcp.pop %v1231
        %v1237 = vmul.f32 1.0, %v1236
        %v1238 = vrcp.pop %v1232
        %v1239 = vmul.f32 1.0, %v1238
        %v1240 = vrcp.pop %v1233
        %v1241 = vmul.f32 1.0, %v1240
        %v1242 = vsub.f32 %v1214, %v866
        %v1243 = vsub.f32 %v1215, %v867
        %v1244 = vsub.f32 %v1216, %v868
        %v1245 = vsub.f32 %v1217, %v869
        %v1246 = vmul.f32 %v1235, %v1242
        %v1247 = vmul.f32 %v1237, %v1243
        %v1248 = vmul.f32 %v1239, %v1244
        %v1249 = vmul.f32 %v1241, %v1245
        %v1250 = vadd.f32 %v866, %v1246
        %v1251 = vadd.f32 %v867, %v1247
        %v1252 = vadd.f32 %v868, %v1248
        %v1253 = vadd.f32 %v869, %v1249
        %1254 = vrot.lane.b32.xlu0 %v1250, 4
        %v1255 = vpop.permute.xlu0 %1254
        %1256 = vrot.lane.b32.xlu0 %v1251, 4
        %v1257 = vpop.permute.xlu0 %1256
        %1258 = vrot.lane.b32.xlu0 %v1252, 4
        %v1259 = vpop.permute.xlu0 %1258
        %1260 = vrot.lane.b32.xlu0 %v1253, 4
        %v1261 = vpop.permute.xlu0 %1260
        %vm1262 = vcmp.lt.s32.totalorder %v487, 4
        %v1263 = vsel %vm1262, 1, 0
        %vm1264 = vcmp.eq.s32.totalorder %v1263, 1
        %v1265 = vsel %vm1264, 0.0, %v1255
        %v1266 = vsel %vm1264, 0.0, %v1257
        %v1267 = vsel %vm1264, 0.0, %v1259
        %v1268 = vsel %vm1264, 0.0, %v1261
        %s1269 = scalar_lea.vmem %s3, 128
        %v1270 = vld [vmem:[%s1269] sm:$0xff]
        %v1271 = vld [vmem:[%s1269 + $0x8] sm:$0xff]
        %v1272 = vld [vmem:[%s1269 + $0x10] sm:$0xff]
        %v1273 = vld [vmem:[%s1269 + $0x18] sm:$0xff]
        %v1274 = vld [vmem:[%s1269 + $0x20] sm:$0xff]
        %v1275 = vld [vmem:[%s1269 + $0x28] sm:$0xff]
        %v1276 = vld [vmem:[%s1269 + $0x30] sm:$0xff]
        %v1277 = vld [vmem:[%s1269 + $0x38] sm:$0xff]
        %s1278 = scalar_lea.vmem %s4, 128
        %v1279 = vld [vmem:[%s1278] sm:$0xff]
        %v1280 = vld [vmem:[%s1278 + $0x8] sm:$0xff]
        %v1281 = vld [vmem:[%s1278 + $0x10] sm:$0xff]
        %v1282 = vld [vmem:[%s1278 + $0x18] sm:$0xff]
        %v1283 = vld [vmem:[%s1278 + $0x20] sm:$0xff]
        %v1284 = vld [vmem:[%s1278 + $0x28] sm:$0xff]
        %v1285 = vld [vmem:[%s1278 + $0x30] sm:$0xff]
        %v1286 = vld [vmem:[%s1278 + $0x38] sm:$0xff]
        %v1288 = vsel %vm519, %v1279, 0
        %v1291 = vsel %vm519, %v1280, 0
        %v1294 = vsel %vm519, %v1281, 0
        %v1297 = vsel %vm519, %v1282, 0
        %v1300 = vsel %vm519, %v1283, 0
        %v1303 = vsel %vm519, %v1284, 0
        %v1306 = vsel %vm519, %v1285, 0
        %v1309 = vsel %vm519, %v1286, 0
        %1311 = vmatprep.subr.mxu0 0.0
        %1312 = vmatpush1.msra.mxu0 %v1250
        %1313 = vmatprep.subr.mxu0 0.0
        %1314 = vmatpush1.msra.mxu0 %v1251
        %1315 = vmatprep.subr.mxu0 0.0
        %1316 = vmatpush1.msra.mxu0 %v1252
        %1317 = vmatprep.subr.mxu0 0.0
        %1318 = vmatpush1.msra.mxu0 %v1253
        %1319 = vmatprep.subr.mxu0 0.0
        %1320 = vmatpush1.msra.mxu0 0.0
        %1321 = vmatprep.subr.mxu0 0.0
        %1322 = vmatpush1.msra.mxu0 0.0
        %1323 = vmatprep.subr.mxu0 0.0
        %1324 = vmatpush1.msra.mxu0 0.0
        %1325 = vmatprep.subr.mxu0 0.0
        %1326 = vmatpush1.msra.mxu0 0.0
        %1327 = vmatprep.subr.mxu0 0.0
        %1328 = vmatpush1.msra.mxu0 0.0
        %1329 = vmatprep.subr.mxu0 0.0
        %1330 = vmatpush1.msra.mxu0 0.0
        %1331 = vmatprep.subr.mxu0 0.0
        %1332 = vmatpush1.msra.mxu0 0.0
        %1333 = vmatprep.subr.mxu0 0.0
        %1334 = vmatpush1.msra.mxu0 0.0
        %1335 = vmatprep.subr.mxu0 0.0
        %1336 = vmatpush1.msra.mxu0 0.0
        %1337 = vmatprep.subr.mxu0 0.0
        %1338 = vmatpush1.msra.mxu0 0.0
        %1339 = vmatprep.subr.mxu0 0.0
        %1340 = vmatpush1.msra.mxu0 0.0
        %1341 = vmatprep.subr.mxu0 0.0
        %1342 = vmatpush1.msra.mxu0 0.0
        %1343 = vmatprep.subr.mxu0 0.0
        %1344 = vmatpush1.msra.mxu0 0.0
        %1345 = vmatprep.subr.mxu0 0.0
        %1346 = vmatpush1.msra.mxu0 0.0
        %1347 = vmatprep.subr.mxu0 0.0
        %1348 = vmatpush1.msra.mxu0 0.0
        %1349 = vmatprep.subr.mxu0 0.0
        %1350 = vmatpush1.msra.mxu0 0.0
        %1351 = vmatprep.subr.mxu0 0.0
        %1352 = vmatpush1.msra.mxu0 0.0
        %1353 = vmatprep.subr.mxu0 0.0
        %1354 = vmatpush1.msra.mxu0 0.0
        %1355 = vmatprep.subr.mxu0 0.0
        %1356 = vmatpush1.msra.mxu0 0.0
        %1357 = vmatprep.subr.mxu0 0.0
        %1358 = vmatpush1.msra.mxu0 0.0
        %1359 = vmatprep.subr.mxu0 0.0
        %1360 = vmatpush1.msra.mxu0 0.0
        %1361 = vmatprep.subr.mxu0 0.0
        %1362 = vmatpush1.msra.mxu0 0.0
        %1363 = vmatprep.subr.mxu0 0.0
        %1364 = vmatpush1.msra.mxu0 0.0
        %1365 = vmatprep.subr.mxu0 0.0
        %1366 = vmatpush1.msra.mxu0 0.0
        %1367 = vmatprep.subr.mxu0 0.0
        %1368 = vmatpush1.msra.mxu0 0.0
        %1369 = vmatprep.subr.mxu0 0.0
        %1370 = vmatpush1.msra.mxu0 0.0
        %1371 = vmatprep.subr.mxu0 0.0
        %1372 = vmatpush1.msra.mxu0 0.0
        %1373 = vmatprep.subr.mxu0 0.0
        %1374 = vmatpush1.msra.mxu0 0.0
        %1375 = vmatprep.mubr.f32.mxu0 0.0
        %1376 = vmatmul.mubr.f32.gmra.mrb[0].mxu0 %v1288
        %v1377 = vpop.f32.mrb[0].mxu0
        %v1378 = vadd.f32 0.0, %v1377
        %v1379 = vpop.f32.mrb[0].mxu0
        %1380 = vmatprep.mubr.f32.mxu0 0.0
        %1381 = vmatmul.mubr.f32.gmra.mrb[0].mxu0 %v1291
        %v1382 = vpop.f32.mrb[0].mxu0
        %v1383 = vadd.f32 0.0, %v1382
        %v1384 = vpop.f32.mrb[0].mxu0
        %1385 = vmatprep.mubr.f32.mxu0 0.0
        %1386 = vmatmul.mubr.f32.gmra.mrb[0].mxu0 %v1294
        %v1387 = vpop.f32.mrb[0].mxu0
        %v1388 = vadd.f32 0.0, %v1387
        %v1389 = vpop.f32.mrb[0].mxu0
        %1390 = vmatprep.mubr.f32.mxu0 0.0
        %1391 = vmatmul.mubr.f32.gmra.mrb[0].mxu0 %v1297
        %v1392 = vpop.f32.mrb[0].mxu0
        %v1393 = vadd.f32 0.0, %v1392
        %v1394 = vpop.f32.mrb[0].mxu0
        %1395 = vmatprep.mubr.f32.mxu0 0.0
        %1396 = vmatmul.mubr.f32.gmra.mrb[0].mxu0 %v1300
        %v1397 = vpop.f32.mrb[0].mxu0
        %v1398 = vadd.f32 0.0, %v1397
        %v1399 = vpop.f32.mrb[0].mxu0
        %1400 = vmatprep.mubr.f32.mxu0 0.0
        %1401 = vmatmul.mubr.f32.gmra.mrb[0].mxu0 %v1303
        %v1402 = vpop.f32.mrb[0].mxu0
        %v1403 = vadd.f32 0.0, %v1402
        %v1404 = vpop.f32.mrb[0].mxu0
        %1405 = vmatprep.mubr.f32.mxu0 0.0
        %1406 = vmatmul.mubr.f32.gmra.mrb[0].mxu0 %v1306
        %v1407 = vpop.f32.mrb[0].mxu0
        %v1408 = vadd.f32 0.0, %v1407
        %v1409 = vpop.f32.mrb[0].mxu0
        %1410 = vmatprep.mubr.f32.mxu0 0.0
        %1411 = vmatmul.mubr.f32.gmra.mrb[0].mxu0 %v1309
        %v1412 = vpop.f32.mrb[0].mxu0
        %v1413 = vadd.f32 0.0, %v1412
        %v1414 = vpop.f32.mrb[0].mxu0
        %1415 = vdwg.mxu0
        %v1417 = vsel %vm519, %v1270, 0
        %v1420 = vsel %vm519, %v1271, 0
        %v1423 = vsel %vm519, %v1272, 0
        %v1426 = vsel %vm519, %v1273, 0
        %v1429 = vsel %vm519, %v1274, 0
        %v1432 = vsel %vm519, %v1275, 0
        %v1435 = vsel %vm519, %v1276, 0
        %v1438 = vsel %vm519, %v1277, 0
        %1440 = vmatprep.subr.mxu0 0.0
        %1441 = vmatpush1.msra.mxu0 %v1265
        %1442 = vmatprep.subr.mxu0 0.0
        %1443 = vmatpush1.msra.mxu0 %v1266
        %1444 = vmatprep.subr.mxu0 0.0
        %1445 = vmatpush1.msra.mxu0 %v1267
        %1446 = vmatprep.subr.mxu0 0.0
        %1447 = vmatpush1.msra.mxu0 %v1268
        %1448 = vmatprep.subr.mxu0 0.0
        %1449 = vmatpush1.msra.mxu0 0.0
        %1450 = vmatprep.subr.mxu0 0.0
        %1451 = vmatpush1.msra.mxu0 0.0
        %1452 = vmatprep.subr.mxu0 0.0
        %1453 = vmatpush1.msra.mxu0 0.0
        %1454 = vmatprep.subr.mxu0 0.0
        %1455 = vmatpush1.msra.mxu0 0.0
        %1456 = vmatprep.subr.mxu0 0.0
        %1457 = vmatpush1.msra.mxu0 0.0
        %1458 = vmatprep.subr.mxu0 0.0
        %1459 = vmatpush1.msra.mxu0 0.0
        %1460 = vmatprep.subr.mxu0 0.0
        %1461 = vmatpush1.msra.mxu0 0.0
        %1462 = vmatprep.subr.mxu0 0.0
        %1463 = vmatpush1.msra.mxu0 0.0
        %1464 = vmatprep.subr.mxu0 0.0
        %1465 = vmatpush1.msra.mxu0 0.0
        %1466 = vmatprep.subr.mxu0 0.0
        %1467 = vmatpush1.msra.mxu0 0.0
        %1468 = vmatprep.subr.mxu0 0.0
        %1469 = vmatpush1.msra.mxu0 0.0
        %1470 = vmatprep.subr.mxu0 0.0
        %1471 = vmatpush1.msra.mxu0 0.0
        %1472 = vmatprep.subr.mxu0 0.0
        %1473 = vmatpush1.msra.mxu0 0.0
        %1474 = vmatprep.subr.mxu0 0.0
        %1475 = vmatpush1.msra.mxu0 0.0
        %1476 = vmatprep.subr.mxu0 0.0
        %1477 = vmatpush1.msra.mxu0 0.0
        %1478 = vmatprep.subr.mxu0 0.0
        %1479 = vmatpush1.msra.mxu0 0.0
        %1480 = vmatprep.subr.mxu0 0.0
        %1481 = vmatpush1.msra.mxu0 0.0
        %1482 = vmatprep.subr.mxu0 0.0
        %1483 = vmatpush1.msra.mxu0 0.0
        %1484 = vmatprep.subr.mxu0 0.0
        %1485 = vmatpush1.msra.mxu0 0.0
        %1486 = vmatprep.subr.mxu0 0.0
        %1487 = vmatpush1.msra.mxu0 0.0
        %1488 = vmatprep.subr.mxu0 0.0
        %1489 = vmatpush1.msra.mxu0 0.0
        %1490 = vmatprep.subr.mxu0 0.0
        %1491 = vmatpush1.msra.mxu0 0.0
        %1492 = vmatprep.subr.mxu0 0.0
        %1493 = vmatpush1.msra.mxu0 0.0
        %1494 = vmatprep.subr.mxu0 0.0
        %1495 = vmatpush1.msra.mxu0 0.0
        %1496 = vmatprep.subr.mxu0 0.0
        %1497 = vmatpush1.msra.mxu0 0.0
        %1498 = vmatprep.subr.mxu0 0.0
        %1499 = vmatpush1.msra.mxu0 0.0
        %1500 = vmatprep.subr.mxu0 0.0
        %1501 = vmatpush1.msra.mxu0 0.0
        %1502 = vmatprep.subr.mxu0 0.0
        %1503 = vmatpush1.msra.mxu0 0.0
        %1504 = vmatprep.mubr.f32.mxu0 0.0
        %1505 = vmatmul.mubr.f32.gmra.mrb[0].mxu0 %v1417
        %v1506 = vpop.f32.mrb[0].mxu0
        %v1507 = vadd.f32 %v1378, %v1506
        %v1508 = vpop.f32.mrb[0].mxu0
        %1509 = vmatprep.mubr.f32.mxu0 0.0
        %1510 = vmatmul.mubr.f32.gmra.mrb[0].mxu0 %v1420
        %v1511 = vpop.f32.mrb[0].mxu0
        %v1512 = vadd.f32 %v1383, %v1511
        %v1513 = vpop.f32.mrb[0].mxu0
        %1514 = vmatprep.mubr.f32.mxu0 0.0
        %1515 = vmatmul.mubr.f32.gmra.mrb[0].mxu0 %v1423
        %v1516 = vpop.f32.mrb[0].mxu0
        %v1517 = vadd.f32 %v1388, %v1516
        %v1518 = vpop.f32.mrb[0].mxu0
        %1519 = vmatprep.mubr.f32.mxu0 0.0
        %1520 = vmatmul.mubr.f32.gmra.mrb[0].mxu0 %v1426
        %v1521 = vpop.f32.mrb[0].mxu0
        %v1522 = vadd.f32 %v1393, %v1521
        %v1523 = vpop.f32.mrb[0].mxu0
        %1524 = vmatprep.mubr.f32.mxu0 0.0
        %1525 = vmatmul.mubr.f32.gmra.mrb[0].mxu0 %v1429
        %v1526 = vpop.f32.mrb[0].mxu0
        %v1527 = vadd.f32 %v1398, %v1526
        %v1528 = vpop.f32.mrb[0].mxu0
        %1529 = vmatprep.mubr.f32.mxu0 0.0
        %1530 = vmatmul.mubr.f32.gmra.mrb[0].mxu0 %v1432
        %v1531 = vpop.f32.mrb[0].mxu0
        %v1532 = vadd.f32 %v1403, %v1531
        %v1533 = vpop.f32.mrb[0].mxu0
        %1534 = vmatprep.mubr.f32.mxu0 0.0
        %1535 = vmatmul.mubr.f32.gmra.mrb[0].mxu0 %v1435
        %v1536 = vpop.f32.mrb[0].mxu0
        %v1537 = vadd.f32 %v1408, %v1536
        %v1538 = vpop.f32.mrb[0].mxu0
        %1539 = vmatprep.mubr.f32.mxu0 0.0
        %1540 = vmatmul.mubr.f32.gmra.mrb[0].mxu0 %v1438
        %v1541 = vpop.f32.mrb[0].mxu0
        %v1542 = vadd.f32 %v1413, %v1541
        %v1543 = vpop.f32.mrb[0].mxu0
        %1544 = vdwg.mxu0
        %s1545 = scalar_lea.vmem %s5, 128
        %v1546 = vld [vmem:[%s1545] sm:$0xff]
        %v1547 = vld [vmem:[%s1545 + $0x8] sm:$0xff]
        %v1548 = vld [vmem:[%s1545 + $0x10] sm:$0xff]
        %v1549 = vld [vmem:[%s1545 + $0x18] sm:$0xff]
        %v1550 = vld [vmem:[%s1545 + $0x20] sm:$0xff]
        %v1551 = vld [vmem:[%s1545 + $0x28] sm:$0xff]
        %v1552 = vld [vmem:[%s1545 + $0x30] sm:$0xff]
        %v1553 = vld [vmem:[%s1545 + $0x38] sm:$0xff]
        %1555 = vset.pattern.permute.xlu0 0
        %1556 = vperm.xlu0 %1555, %v1546
        %v1557 = vpop.permute.xlu0 %1556
        %1560 = vset.pattern.permute.xlu0 0
        %1561 = vperm.xlu0 %1560, %v1547
        %v1562 = vpop.permute.xlu0 %1561
        %1565 = vset.pattern.permute.xlu0 0
        %1566 = vperm.xlu0 %1565, %v1548
        %v1567 = vpop.permute.xlu0 %1566
        %1570 = vset.pattern.permute.xlu0 0
        %1571 = vperm.xlu0 %1570, %v1549
        %v1572 = vpop.permute.xlu0 %1571
        %1575 = vset.pattern.permute.xlu0 0
        %1576 = vperm.xlu0 %1575, %v1550
        %v1577 = vpop.permute.xlu0 %1576
        %1580 = vset.pattern.permute.xlu0 0
        %1581 = vperm.xlu0 %1580, %v1551
        %v1582 = vpop.permute.xlu0 %1581
        %1585 = vset.pattern.permute.xlu0 0
        %1586 = vperm.xlu0 %1585, %v1552
        %v1587 = vpop.permute.xlu0 %1586
        %1590 = vset.pattern.permute.xlu0 0
        %1591 = vperm.xlu0 %1590, %v1553
        %v1592 = vpop.permute.xlu0 %1591
        %v1594 = vadd.f32 %v1507, %v1557
        %v1595 = vadd.f32 %v1512, %v1562
        %v1596 = vadd.f32 %v1517, %v1567
        %v1597 = vadd.f32 %v1522, %v1572
        %v1598 = vadd.f32 %v1527, %v1577
        %v1599 = vadd.f32 %v1532, %v1582
        %v1600 = vadd.f32 %v1537, %v1587
        %v1601 = vadd.f32 %v1542, %v1592
        %v1602 = vxor.u32 %v1594, 2147483648
        %v1603 = vxor.u32 %v1595, 2147483648
        %v1604 = vxor.u32 %v1596, 2147483648
        %v1605 = vxor.u32 %v1597, 2147483648
        %v1606 = vmul.f32 %v1602, 1.442695
        %v1607 = vpow.pop %v1606
        %v1608 = vmul.f32 %v1603, 1.442695
        %v1609 = vpow.pop %v1608
        %v1610 = vmul.f32 %v1604, 1.442695
        %v1611 = vpow.pop %v1610
        %v1612 = vmul.f32 %v1605, 1.442695
        %v1613 = vpow.pop %v1612
        %v1614 = vadd.f32 %v1607, 1.0
        %v1615 = vadd.f32 %v1609, 1.0
        %v1616 = vadd.f32 %v1611, 1.0
        %v1617 = vadd.f32 %v1613, 1.0
        %v1618 = vrcp.pop %v1614
        %v1619 = vmul.f32 1.0, %v1618
        %v1620 = vrcp.pop %v1615
        %v1621 = vmul.f32 1.0, %v1620
        %v1622 = vrcp.pop %v1616
        %v1623 = vmul.f32 1.0, %v1622
        %v1624 = vrcp.pop %v1617
        %v1625 = vmul.f32 1.0, %v1624
        %v1626 = vsub.f32 %v1598, %v1250
        %v1627 = vsub.f32 %v1599, %v1251
        %v1628 = vsub.f32 %v1600, %v1252
        %v1629 = vsub.f32 %v1601, %v1253
        %v1630 = vmul.f32 %v1619, %v1626
        %v1631 = vmul.f32 %v1621, %v1627
        %v1632 = vmul.f32 %v1623, %v1628
        %v1633 = vmul.f32 %v1625, %v1629
        %v1634 = vadd.f32 %v1250, %v1630
        %v1635 = vadd.f32 %v1251, %v1631
        %v1636 = vadd.f32 %v1252, %v1632
        %v1637 = vadd.f32 %v1253, %v1633
        %1638 = vrot.lane.b32.xlu0 %v1634, 8
        %v1639 = vpop.permute.xlu0 %1638
        %1640 = vrot.lane.b32.xlu0 %v1635, 8
        %v1641 = vpop.permute.xlu0 %1640
        %1642 = vrot.lane.b32.xlu0 %v1636, 8
        %v1643 = vpop.permute.xlu0 %1642
        %1644 = vrot.lane.b32.xlu0 %v1637, 8
        %v1645 = vpop.permute.xlu0 %1644
        %vm1646 = vcmp.lt.s32.totalorder %v487, 8
        %v1647 = vsel %vm1646, 1, 0
        %vm1648 = vcmp.eq.s32.totalorder %v1647, 1
        %v1649 = vsel %vm1648, 0.0, %v1639
        %v1650 = vsel %vm1648, 0.0, %v1641
        %v1651 = vsel %vm1648, 0.0, %v1643
        %v1652 = vsel %vm1648, 0.0, %v1645
        %s1653 = scalar_lea.vmem %s3, 192
        %v1654 = vld [vmem:[%s1653] sm:$0xff]
        %v1655 = vld [vmem:[%s1653 + $0x8] sm:$0xff]
        %v1656 = vld [vmem:[%s1653 + $0x10] sm:$0xff]
        %v1657 = vld [vmem:[%s1653 + $0x18] sm:$0xff]
        %v1658 = vld [vmem:[%s1653 + $0x20] sm:$0xff]
        %v1659 = vld [vmem:[%s1653 + $0x28] sm:$0xff]
        %v1660 = vld [vmem:[%s1653 + $0x30] sm:$0xff]
        %v1661 = vld [vmem:[%s1653 + $0x38] sm:$0xff]
        %s1662 = scalar_lea.vmem %s4, 192
        %v1663 = vld [vmem:[%s1662] sm:$0xff]
        %v1664 = vld [vmem:[%s1662 + $0x8] sm:$0xff]
        %v1665 = vld [vmem:[%s1662 + $0x10] sm:$0xff]
        %v1666 = vld [vmem:[%s1662 + $0x18] sm:$0xff]
        %v1667 = vld [vmem:[%s1662 + $0x20] sm:$0xff]
        %v1668 = vld [vmem:[%s1662 + $0x28] sm:$0xff]
        %v1669 = vld [vmem:[%s1662 + $0x30] sm:$0xff]
        %v1670 = vld [vmem:[%s1662 + $0x38] sm:$0xff]
        %v1672 = vsel %vm519, %v1663, 0
        %v1675 = vsel %vm519, %v1664, 0
        %v1678 = vsel %vm519, %v1665, 0
        %v1681 = vsel %vm519, %v1666, 0
        %v1684 = vsel %vm519, %v1667, 0
        %v1687 = vsel %vm519, %v1668, 0
        %v1690 = vsel %vm519, %v1669, 0
        %v1693 = vsel %vm519, %v1670, 0
        %1695 = vmatprep.subr.mxu0 0.0
        %1696 = vmatpush1.msra.mxu0 %v1634
        %1697 = vmatprep.subr.mxu0 0.0
        %1698 = vmatpush1.msra.mxu0 %v1635
        %1699 = vmatprep.subr.mxu0 0.0
        %1700 = vmatpush1.msra.mxu0 %v1636
        %1701 = vmatprep.subr.mxu0 0.0
        %1702 = vmatpush1.msra.mxu0 %v1637
        %1703 = vmatprep.subr.mxu0 0.0
        %1704 = vmatpush1.msra.mxu0 0.0
        %1705 = vmatprep.subr.mxu0 0.0
        %1706 = vmatpush1.msra.mxu0 0.0
        %1707 = vmatprep.subr.mxu0 0.0
        %1708 = vmatpush1.msra.mxu0 0.0
        %1709 = vmatprep.subr.mxu0 0.0
        %1710 = vmatpush1.msra.mxu0 0.0
        %1711 = vmatprep.subr.mxu0 0.0
        %1712 = vmatpush1.msra.mxu0 0.0
        %1713 = vmatprep.subr.mxu0 0.0
        %1714 = vmatpush1.msra.mxu0 0.0
        %1715 = vmatprep.subr.mxu0 0.0
        %1716 = vmatpush1.msra.mxu0 0.0
        %1717 = vmatprep.subr.mxu0 0.0
        %1718 = vmatpush1.msra.mxu0 0.0
        %1719 = vmatprep.subr.mxu0 0.0
        %1720 = vmatpush1.msra.mxu0 0.0
        %1721 = vmatprep.subr.mxu0 0.0
        %1722 = vmatpush1.msra.mxu0 0.0
        %1723 = vmatprep.subr.mxu0 0.0
        %1724 = vmatpush1.msra.mxu0 0.0
        %1725 = vmatprep.subr.mxu0 0.0
        %1726 = vmatpush1.msra.mxu0 0.0
        %1727 = vmatprep.subr.mxu0 0.0
        %1728 = vmatpush1.msra.mxu0 0.0
        %1729 = vmatprep.subr.mxu0 0.0
        %1730 = vmatpush1.msra.mxu0 0.0
        %1731 = vmatprep.subr.mxu0 0.0
        %1732 = vmatpush1.msra.mxu0 0.0
        %1733 = vmatprep.subr.mxu0 0.0
        %1734 = vmatpush1.msra.mxu0 0.0
        %1735 = vmatprep.subr.mxu0 0.0
        %1736 = vmatpush1.msra.mxu0 0.0
        %1737 = vmatprep.subr.mxu0 0.0
        %1738 = vmatpush1.msra.mxu0 0.0
        %1739 = vmatprep.subr.mxu0 0.0
        %1740 = vmatpush1.msra.mxu0 0.0
        %1741 = vmatprep.subr.mxu0 0.0
        %1742 = vmatpush1.msra.mxu0 0.0
        %1743 = vmatprep.subr.mxu0 0.0
        %1744 = vmatpush1.msra.mxu0 0.0
        %1745 = vmatprep.subr.mxu0 0.0
        %1746 = vmatpush1.msra.mxu0 0.0
        %1747 = vmatprep.subr.mxu0 0.0
        %1748 = vmatpush1.msra.mxu0 0.0
        %1749 = vmatprep.subr.mxu0 0.0
        %1750 = vmatpush1.msra.mxu0 0.0
        %1751 = vmatprep.subr.mxu0 0.0
        %1752 = vmatpush1.msra.mxu0 0.0
        %1753 = vmatprep.subr.mxu0 0.0
        %1754 = vmatpush1.msra.mxu0 0.0
        %1755 = vmatprep.subr.mxu0 0.0
        %1756 = vmatpush1.msra.mxu0 0.0
        %1757 = vmatprep.subr.mxu0 0.0
        %1758 = vmatpush1.msra.mxu0 0.0
        %1759 = vmatprep.mubr.f32.mxu0 0.0
        %1760 = vmatmul.mubr.f32.gmra.mrb[0].mxu0 %v1672
        %v1761 = vpop.f32.mrb[0].mxu0
        %v1762 = vadd.f32 0.0, %v1761
        %v1763 = vpop.f32.mrb[0].mxu0
        %1764 = vmatprep.mubr.f32.mxu0 0.0
        %1765 = vmatmul.mubr.f32.gmra.mrb[0].mxu0 %v1675
        %v1766 = vpop.f32.mrb[0].mxu0
        %v1767 = vadd.f32 0.0, %v1766
        %v1768 = vpop.f32.mrb[0].mxu0
        %1769 = vmatprep.mubr.f32.mxu0 0.0
        %1770 = vmatmul.mubr.f32.gmra.mrb[0].mxu0 %v1678
        %v1771 = vpop.f32.mrb[0].mxu0
        %v1772 = vadd.f32 0.0, %v1771
        %v1773 = vpop.f32.mrb[0].mxu0
        %1774 = vmatprep.mubr.f32.mxu0 0.0
        %1775 = vmatmul.mubr.f32.gmra.mrb[0].mxu0 %v1681
        %v1776 = vpop.f32.mrb[0].mxu0
        %v1777 = vadd.f32 0.0, %v1776
        %v1778 = vpop.f32.mrb[0].mxu0
        %1779 = vmatprep.mubr.f32.mxu0 0.0
        %1780 = vmatmul.mubr.f32.gmra.mrb[0].mxu0 %v1684
        %v1781 = vpop.f32.mrb[0].mxu0
        %v1782 = vadd.f32 0.0, %v1781
        %v1783 = vpop.f32.mrb[0].mxu0
        %1784 = vmatprep.mubr.f32.mxu0 0.0
        %1785 = vmatmul.mubr.f32.gmra.mrb[0].mxu0 %v1687
        %v1786 = vpop.f32.mrb[0].mxu0
        %v1787 = vadd.f32 0.0, %v1786
        %v1788 = vpop.f32.mrb[0].mxu0
        %1789 = vmatprep.mubr.f32.mxu0 0.0
        %1790 = vmatmul.mubr.f32.gmra.mrb[0].mxu0 %v1690
        %v1791 = vpop.f32.mrb[0].mxu0
        %v1792 = vadd.f32 0.0, %v1791
        %v1793 = vpop.f32.mrb[0].mxu0
        %1794 = vmatprep.mubr.f32.mxu0 0.0
        %1795 = vmatmul.mubr.f32.gmra.mrb[0].mxu0 %v1693
        %v1796 = vpop.f32.mrb[0].mxu0
        %v1797 = vadd.f32 0.0, %v1796
        %v1798 = vpop.f32.mrb[0].mxu0
        %1799 = vdwg.mxu0
        %v1801 = vsel %vm519, %v1654, 0
        %v1804 = vsel %vm519, %v1655, 0
        %v1807 = vsel %vm519, %v1656, 0
        %v1810 = vsel %vm519, %v1657, 0
        %v1813 = vsel %vm519, %v1658, 0
        %v1816 = vsel %vm519, %v1659, 0
        %v1819 = vsel %vm519, %v1660, 0
        %v1822 = vsel %vm519, %v1661, 0
        %1824 = vmatprep.subr.mxu0 0.0
        %1825 = vmatpush1.msra.mxu0 %v1649
        %1826 = vmatprep.subr.mxu0 0.0
        %1827 = vmatpush1.msra.mxu0 %v1650
        %1828 = vmatprep.subr.mxu0 0.0
        %1829 = vmatpush1.msra.mxu0 %v1651
        %1830 = vmatprep.subr.mxu0 0.0
        %1831 = vmatpush1.msra.mxu0 %v1652
        %1832 = vmatprep.subr.mxu0 0.0
        %1833 = vmatpush1.msra.mxu0 0.0
        %1834 = vmatprep.subr.mxu0 0.0
        %1835 = vmatpush1.msra.mxu0 0.0
        %1836 = vmatprep.subr.mxu0 0.0
        %1837 = vmatpush1.msra.mxu0 0.0
        %1838 = vmatprep.subr.mxu0 0.0
        %1839 = vmatpush1.msra.mxu0 0.0
        %1840 = vmatprep.subr.mxu0 0.0
        %1841 = vmatpush1.msra.mxu0 0.0
        %1842 = vmatprep.subr.mxu0 0.0
        %1843 = vmatpush1.msra.mxu0 0.0
        %1844 = vmatprep.subr.mxu0 0.0
        %1845 = vmatpush1.msra.mxu0 0.0
        %1846 = vmatprep.subr.mxu0 0.0
        %1847 = vmatpush1.msra.mxu0 0.0
        %1848 = vmatprep.subr.mxu0 0.0
        %1849 = vmatpush1.msra.mxu0 0.0
        %1850 = vmatprep.subr.mxu0 0.0
        %1851 = vmatpush1.msra.mxu0 0.0
        %1852 = vmatprep.subr.mxu0 0.0
        %1853 = vmatpush1.msra.mxu0 0.0
        %1854 = vmatprep.subr.mxu0 0.0
        %1855 = vmatpush1.msra.mxu0 0.0
        %1856 = vmatprep.subr.mxu0 0.0
        %1857 = vmatpush1.msra.mxu0 0.0
        %1858 = vmatprep.subr.mxu0 0.0
        %1859 = vmatpush1.msra.mxu0 0.0
        %1860 = vmatprep.subr.mxu0 0.0
        %1861 = vmatpush1.msra.mxu0 0.0
        %1862 = vmatprep.subr.mxu0 0.0
        %1863 = vmatpush1.msra.mxu0 0.0
        %1864 = vmatprep.subr.mxu0 0.0
        %1865 = vmatpush1.msra.mxu0 0.0
        %1866 = vmatprep.subr.mxu0 0.0
        %1867 = vmatpush1.msra.mxu0 0.0
        %1868 = vmatprep.subr.mxu0 0.0
        %1869 = vmatpush1.msra.mxu0 0.0
        %1870 = vmatprep.subr.mxu0 0.0
        %1871 = vmatpush1.msra.mxu0 0.0
        %1872 = vmatprep.subr.mxu0 0.0
        %1873 = vmatpush1.msra.mxu0 0.0
        %1874 = vmatprep.subr.mxu0 0.0
        %1875 = vmatpush1.msra.mxu0 0.0
        %1876 = vmatprep.subr.mxu0 0.0
        %1877 = vmatpush1.msra.mxu0 0.0
        %1878 = vmatprep.subr.mxu0 0.0
        %1879 = vmatpush1.msra.mxu0 0.0
        %1880 = vmatprep.subr.mxu0 0.0
        %1881 = vmatpush1.msra.mxu0 0.0
        %1882 = vmatprep.subr.mxu0 0.0
        %1883 = vmatpush1.msra.mxu0 0.0
        %1884 = vmatprep.subr.mxu0 0.0
        %1885 = vmatpush1.msra.mxu0 0.0
        %1886 = vmatprep.subr.mxu0 0.0
        %1887 = vmatpush1.msra.mxu0 0.0
        %1888 = vmatprep.mubr.f32.mxu0 0.0
        %1889 = vmatmul.mubr.f32.gmra.mrb[0].mxu0 %v1801
        %v1890 = vpop.f32.mrb[0].mxu0
        %v1891 = vadd.f32 %v1762, %v1890
        %v1892 = vpop.f32.mrb[0].mxu0
        %1893 = vmatprep.mubr.f32.mxu0 0.0
        %1894 = vmatmul.mubr.f32.gmra.mrb[0].mxu0 %v1804
        %v1895 = vpop.f32.mrb[0].mxu0
        %v1896 = vadd.f32 %v1767, %v1895
        %v1897 = vpop.f32.mrb[0].mxu0
        %1898 = vmatprep.mubr.f32.mxu0 0.0
        %1899 = vmatmul.mubr.f32.gmra.mrb[0].mxu0 %v1807
        %v1900 = vpop.f32.mrb[0].mxu0
        %v1901 = vadd.f32 %v1772, %v1900
        %v1902 = vpop.f32.mrb[0].mxu0
        %1903 = vmatprep.mubr.f32.mxu0 0.0
        %1904 = vmatmul.mubr.f32.gmra.mrb[0].mxu0 %v1810
        %v1905 = vpop.f32.mrb[0].mxu0
        %v1906 = vadd.f32 %v1777, %v1905
        %v1907 = vpop.f32.mrb[0].mxu0
        %1908 = vmatprep.mubr.f32.mxu0 0.0
        %1909 = vmatmul.mubr.f32.gmra.mrb[0].mxu0 %v1813
        %v1910 = vpop.f32.mrb[0].mxu0
        %v1911 = vadd.f32 %v1782, %v1910
        %v1912 = vpop.f32.mrb[0].mxu0
        %1913 = vmatprep.mubr.f32.mxu0 0.0
        %1914 = vmatmul.mubr.f32.gmra.mrb[0].mxu0 %v1816
        %v1915 = vpop.f32.mrb[0].mxu0
        %v1916 = vadd.f32 %v1787, %v1915
        %v1917 = vpop.f32.mrb[0].mxu0
        %1918 = vmatprep.mubr.f32.mxu0 0.0
        %1919 = vmatmul.mubr.f32.gmra.mrb[0].mxu0 %v1819
        %v1920 = vpop.f32.mrb[0].mxu0
        %v1921 = vadd.f32 %v1792, %v1920
        %v1922 = vpop.f32.mrb[0].mxu0
        %1923 = vmatprep.mubr.f32.mxu0 0.0
        %1924 = vmatmul.mubr.f32.gmra.mrb[0].mxu0 %v1822
        %v1925 = vpop.f32.mrb[0].mxu0
        %v1926 = vadd.f32 %v1797, %v1925
        %v1927 = vpop.f32.mrb[0].mxu0
        %1928 = vdwg.mxu0
        %s1929 = scalar_lea.vmem %s5, 192
        %v1930 = vld [vmem:[%s1929] sm:$0xff]
        %v1931 = vld [vmem:[%s1929 + $0x8] sm:$0xff]
        %v1932 = vld [vmem:[%s1929 + $0x10] sm:$0xff]
        %v1933 = vld [vmem:[%s1929 + $0x18] sm:$0xff]
        %v1934 = vld [vmem:[%s1929 + $0x20] sm:$0xff]
        %v1935 = vld [vmem:[%s1929 + $0x28] sm:$0xff]
        %v1936 = vld [vmem:[%s1929 + $0x30] sm:$0xff]
        %v1937 = vld [vmem:[%s1929 + $0x38] sm:$0xff]
        %1939 = vset.pattern.permute.xlu0 0
        %1940 = vperm.xlu0 %1939, %v1930
        %v1941 = vpop.permute.xlu0 %1940
        %1944 = vset.pattern.permute.xlu0 0
        %1945 = vperm.xlu0 %1944, %v1931
        %v1946 = vpop.permute.xlu0 %1945
        %1949 = vset.pattern.permute.xlu0 0
        %1950 = vperm.xlu0 %1949, %v1932
        %v1951 = vpop.permute.xlu0 %1950
        %1954 = vset.pattern.permute.xlu0 0
        %1955 = vperm.xlu0 %1954, %v1933
        %v1956 = vpop.permute.xlu0 %1955
        %1959 = vset.pattern.permute.xlu0 0
        %1960 = vperm.xlu0 %1959, %v1934
        %v1961 = vpop.permute.xlu0 %1960
        %1964 = vset.pattern.permute.xlu0 0
        %1965 = vperm.xlu0 %1964, %v1935
        %v1966 = vpop.permute.xlu0 %1965
        %1969 = vset.pattern.permute.xlu0 0
        %1970 = vperm.xlu0 %1969, %v1936
        %v1971 = vpop.permute.xlu0 %1970
        %1974 = vset.pattern.permute.xlu0 0
        %1975 = vperm.xlu0 %1974, %v1937
        %v1976 = vpop.permute.xlu0 %1975
        %v1978 = vadd.f32 %v1891, %v1941
        %v1979 = vadd.f32 %v1896, %v1946
        %v1980 = vadd.f32 %v1901, %v1951
        %v1981 = vadd.f32 %v1906, %v1956
        %v1982 = vadd.f32 %v1911, %v1961
        %v1983 = vadd.f32 %v1916, %v1966
        %v1984 = vadd.f32 %v1921, %v1971
        %v1985 = vadd.f32 %v1926, %v1976
        %v1986 = vxor.u32 %v1978, 2147483648
        %v1987 = vxor.u32 %v1979, 2147483648
        %v1988 = vxor.u32 %v1980, 2147483648
        %v1989 = vxor.u32 %v1981, 2147483648
        %v1990 = vmul.f32 %v1986, 1.442695
        %v1991 = vpow.pop %v1990
        %v1992 = vmul.f32 %v1987, 1.442695
        %v1993 = vpow.pop %v1992
        %v1994 = vmul.f32 %v1988, 1.442695
        %v1995 = vpow.pop %v1994
        %v1996 = vmul.f32 %v1989, 1.442695
        %v1997 = vpow.pop %v1996
        %v1998 = vadd.f32 %v1991, 1.0
        %v1999 = vadd.f32 %v1993, 1.0
        %v2000 = vadd.f32 %v1995, 1.0
        %v2001 = vadd.f32 %v1997, 1.0
        %v2002 = vrcp.pop %v1998
        %v2003 = vmul.f32 1.0, %v2002
        %v2004 = vrcp.pop %v1999
        %v2005 = vmul.f32 1.0, %v2004
        %v2006 = vrcp.pop %v2000
        %v2007 = vmul.f32 1.0, %v2006
        %v2008 = vrcp.pop %v2001
        %v2009 = vmul.f32 1.0, %v2008
        %v2010 = vsub.f32 %v1982, %v1634
        %v2011 = vsub.f32 %v1983, %v1635
        %v2012 = vsub.f32 %v1984, %v1636
        %v2013 = vsub.f32 %v1985, %v1637
        %v2014 = vmul.f32 %v2003, %v2010
        %v2015 = vmul.f32 %v2005, %v2011
        %v2016 = vmul.f32 %v2007, %v2012
        %v2017 = vmul.f32 %v2009, %v2013
        %v2018 = vadd.f32 %v1634, %v2014
        %v2019 = vadd.f32 %v1635, %v2015
        %v2020 = vadd.f32 %v1636, %v2016
        %v2021 = vadd.f32 %v1637, %v2017
        %2022 = vrot.lane.b32.xlu0 %v2018, 16
        %v2023 = vpop.permute.xlu0 %2022
        %2024 = vrot.lane.b32.xlu0 %v2019, 16
        %v2025 = vpop.permute.xlu0 %2024
        %2026 = vrot.lane.b32.xlu0 %v2020, 16
        %v2027 = vpop.permute.xlu0 %2026
        %2028 = vrot.lane.b32.xlu0 %v2021, 16
        %v2029 = vpop.permute.xlu0 %2028
        %vm2030 = vcmp.lt.s32.totalorder %v487, 16
        %v2031 = vsel %vm2030, 1, 0
        %vm2032 = vcmp.eq.s32.totalorder %v2031, 1
        %v2033 = vsel %vm2032, 0.0, %v2023
        %v2034 = vsel %vm2032, 0.0, %v2025
        %v2035 = vsel %vm2032, 0.0, %v2027
        %v2036 = vsel %vm2032, 0.0, %v2029
        %s2037 = scalar_lea.vmem %s3, 256
        %v2038 = vld [vmem:[%s2037] sm:$0xff]
        %v2039 = vld [vmem:[%s2037 + $0x8] sm:$0xff]
        %v2040 = vld [vmem:[%s2037 + $0x10] sm:$0xff]
        %v2041 = vld [vmem:[%s2037 + $0x18] sm:$0xff]
        %v2042 = vld [vmem:[%s2037 + $0x20] sm:$0xff]
        %v2043 = vld [vmem:[%s2037 + $0x28] sm:$0xff]
        %v2044 = vld [vmem:[%s2037 + $0x30] sm:$0xff]
        %v2045 = vld [vmem:[%s2037 + $0x38] sm:$0xff]
        %s2046 = scalar_lea.vmem %s4, 256
        %v2047 = vld [vmem:[%s2046] sm:$0xff]
        %v2048 = vld [vmem:[%s2046 + $0x8] sm:$0xff]
        %v2049 = vld [vmem:[%s2046 + $0x10] sm:$0xff]
        %v2050 = vld [vmem:[%s2046 + $0x18] sm:$0xff]
        %v2051 = vld [vmem:[%s2046 + $0x20] sm:$0xff]
        %v2052 = vld [vmem:[%s2046 + $0x28] sm:$0xff]
        %v2053 = vld [vmem:[%s2046 + $0x30] sm:$0xff]
        %v2054 = vld [vmem:[%s2046 + $0x38] sm:$0xff]
        %v2056 = vsel %vm519, %v2047, 0
        %v2059 = vsel %vm519, %v2048, 0
        %v2062 = vsel %vm519, %v2049, 0
        %v2065 = vsel %vm519, %v2050, 0
        %v2068 = vsel %vm519, %v2051, 0
        %v2071 = vsel %vm519, %v2052, 0
        %v2074 = vsel %vm519, %v2053, 0
        %v2077 = vsel %vm519, %v2054, 0
        %2079 = vmatprep.subr.mxu0 0.0
        %2080 = vmatpush1.msra.mxu0 %v2018
        %2081 = vmatprep.subr.mxu0 0.0
        %2082 = vmatpush1.msra.mxu0 %v2019
        %2083 = vmatprep.subr.mxu0 0.0
        %2084 = vmatpush1.msra.mxu0 %v2020
        %2085 = vmatprep.subr.mxu0 0.0
        %2086 = vmatpush1.msra.mxu0 %v2021
        %2087 = vmatprep.subr.mxu0 0.0
        %2088 = vmatpush1.msra.mxu0 0.0
        %2089 = vmatprep.subr.mxu0 0.0
        %2090 = vmatpush1.msra.mxu0 0.0
        %2091 = vmatprep.subr.mxu0 0.0
        %2092 = vmatpush1.msra.mxu0 0.0
        %2093 = vmatprep.subr.mxu0 0.0
        %2094 = vmatpush1.msra.mxu0 0.0
        %2095 = vmatprep.subr.mxu0 0.0
        %2096 = vmatpush1.msra.mxu0 0.0
        %2097 = vmatprep.subr.mxu0 0.0
        %2098 = vmatpush1.msra.mxu0 0.0
        %2099 = vmatprep.subr.mxu0 0.0
        %2100 = vmatpush1.msra.mxu0 0.0
        %2101 = vmatprep.subr.mxu0 0.0
        %2102 = vmatpush1.msra.mxu0 0.0
        %2103 = vmatprep.subr.mxu0 0.0
        %2104 = vmatpush1.msra.mxu0 0.0
        %2105 = vmatprep.subr.mxu0 0.0
        %2106 = vmatpush1.msra.mxu0 0.0
        %2107 = vmatprep.subr.mxu0 0.0
        %2108 = vmatpush1.msra.mxu0 0.0
        %2109 = vmatprep.subr.mxu0 0.0
        %2110 = vmatpush1.msra.mxu0 0.0
        %2111 = vmatprep.subr.mxu0 0.0
        %2112 = vmatpush1.msra.mxu0 0.0
        %2113 = vmatprep.subr.mxu0 0.0
        %2114 = vmatpush1.msra.mxu0 0.0
        %2115 = vmatprep.subr.mxu0 0.0
        %2116 = vmatpush1.msra.mxu0 0.0
        %2117 = vmatprep.subr.mxu0 0.0
        %2118 = vmatpush1.msra.mxu0 0.0
        %2119 = vmatprep.subr.mxu0 0.0
        %2120 = vmatpush1.msra.mxu0 0.0
        %2121 = vmatprep.subr.mxu0 0.0
        %2122 = vmatpush1.msra.mxu0 0.0
        %2123 = vmatprep.subr.mxu0 0.0
        %2124 = vmatpush1.msra.mxu0 0.0
        %2125 = vmatprep.subr.mxu0 0.0
        %2126 = vmatpush1.msra.mxu0 0.0
        %2127 = vmatprep.subr.mxu0 0.0
        %2128 = vmatpush1.msra.mxu0 0.0
        %2129 = vmatprep.subr.mxu0 0.0
        %2130 = vmatpush1.msra.mxu0 0.0
        %2131 = vmatprep.subr.mxu0 0.0
        %2132 = vmatpush1.msra.mxu0 0.0
        %2133 = vmatprep.subr.mxu0 0.0
        %2134 = vmatpush1.msra.mxu0 0.0
        %2135 = vmatprep.subr.mxu0 0.0
        %2136 = vmatpush1.msra.mxu0 0.0
        %2137 = vmatprep.subr.mxu0 0.0
        %2138 = vmatpush1.msra.mxu0 0.0
        %2139 = vmatprep.subr.mxu0 0.0
        %2140 = vmatpush1.msra.mxu0 0.0
        %2141 = vmatprep.subr.mxu0 0.0
        %2142 = vmatpush1.msra.mxu0 0.0
        %2143 = vmatprep.mubr.f32.mxu0 0.0
        %2144 = vmatmul.mubr.f32.gmra.mrb[0].mxu0 %v2056
        %v2145 = vpop.f32.mrb[0].mxu0
        %v2146 = vadd.f32 0.0, %v2145
        %v2147 = vpop.f32.mrb[0].mxu0
        %2148 = vmatprep.mubr.f32.mxu0 0.0
        %2149 = vmatmul.mubr.f32.gmra.mrb[0].mxu0 %v2059
        %v2150 = vpop.f32.mrb[0].mxu0
        %v2151 = vadd.f32 0.0, %v2150
        %v2152 = vpop.f32.mrb[0].mxu0
        %2153 = vmatprep.mubr.f32.mxu0 0.0
        %2154 = vmatmul.mubr.f32.gmra.mrb[0].mxu0 %v2062
        %v2155 = vpop.f32.mrb[0].mxu0
        %v2156 = vadd.f32 0.0, %v2155
        %v2157 = vpop.f32.mrb[0].mxu0
        %2158 = vmatprep.mubr.f32.mxu0 0.0
        %2159 = vmatmul.mubr.f32.gmra.mrb[0].mxu0 %v2065
        %v2160 = vpop.f32.mrb[0].mxu0
        %v2161 = vadd.f32 0.0, %v2160
        %v2162 = vpop.f32.mrb[0].mxu0
        %2163 = vmatprep.mubr.f32.mxu0 0.0
        %2164 = vmatmul.mubr.f32.gmra.mrb[0].mxu0 %v2068
        %v2165 = vpop.f32.mrb[0].mxu0
        %v2166 = vadd.f32 0.0, %v2165
        %v2167 = vpop.f32.mrb[0].mxu0
        %2168 = vmatprep.mubr.f32.mxu0 0.0
        %2169 = vmatmul.mubr.f32.gmra.mrb[0].mxu0 %v2071
        %v2170 = vpop.f32.mrb[0].mxu0
        %v2171 = vadd.f32 0.0, %v2170
        %v2172 = vpop.f32.mrb[0].mxu0
        %2173 = vmatprep.mubr.f32.mxu0 0.0
        %2174 = vmatmul.mubr.f32.gmra.mrb[0].mxu0 %v2074
        %v2175 = vpop.f32.mrb[0].mxu0
        %v2176 = vadd.f32 0.0, %v2175
        %v2177 = vpop.f32.mrb[0].mxu0
        %2178 = vmatprep.mubr.f32.mxu0 0.0
        %2179 = vmatmul.mubr.f32.gmra.mrb[0].mxu0 %v2077
        %v2180 = vpop.f32.mrb[0].mxu0
        %v2181 = vadd.f32 0.0, %v2180
        %v2182 = vpop.f32.mrb[0].mxu0
        %2183 = vdwg.mxu0
        %v2185 = vsel %vm519, %v2038, 0
        %v2188 = vsel %vm519, %v2039, 0
        %v2191 = vsel %vm519, %v2040, 0
        %v2194 = vsel %vm519, %v2041, 0
        %v2197 = vsel %vm519, %v2042, 0
        %v2200 = vsel %vm519, %v2043, 0
        %v2203 = vsel %vm519, %v2044, 0
        %v2206 = vsel %vm519, %v2045, 0
        %2208 = vmatprep.subr.mxu0 0.0
        %2209 = vmatpush1.msra.mxu0 %v2033
        %2210 = vmatprep.subr.mxu0 0.0
        %2211 = vmatpush1.msra.mxu0 %v2034
        %2212 = vmatprep.subr.mxu0 0.0
        %2213 = vmatpush1.msra.mxu0 %v2035
        %2214 = vmatprep.subr.mxu0 0.0
        %2215 = vmatpush1.msra.mxu0 %v2036
        %2216 = vmatprep.subr.mxu0 0.0
        %2217 = vmatpush1.msra.mxu0 0.0
        %2218 = vmatprep.subr.mxu0 0.0
        %2219 = vmatpush1.msra.mxu0 0.0
        %2220 = vmatprep.subr.mxu0 0.0
        %2221 = vmatpush1.msra.mxu0 0.0
        %2222 = vmatprep.subr.mxu0 0.0
        %2223 = vmatpush1.msra.mxu0 0.0
        %2224 = vmatprep.subr.mxu0 0.0
        %2225 = vmatpush1.msra.mxu0 0.0
        %2226 = vmatprep.subr.mxu0 0.0
        %2227 = vmatpush1.msra.mxu0 0.0
        %2228 = vmatprep.subr.mxu0 0.0
        %2229 = vmatpush1.msra.mxu0 0.0
        %2230 = vmatprep.subr.mxu0 0.0
        %2231 = vmatpush1.msra.mxu0 0.0
        %2232 = vmatprep.subr.mxu0 0.0
        %2233 = vmatpush1.msra.mxu0 0.0
        %2234 = vmatprep.subr.mxu0 0.0
        %2235 = vmatpush1.msra.mxu0 0.0
        %2236 = vmatprep.subr.mxu0 0.0
        %2237 = vmatpush1.msra.mxu0 0.0
        %2238 = vmatprep.subr.mxu0 0.0
        %2239 = vmatpush1.msra.mxu0 0.0
        %2240 = vmatprep.subr.mxu0 0.0
        %2241 = vmatpush1.msra.mxu0 0.0
        %2242 = vmatprep.subr.mxu0 0.0
        %2243 = vmatpush1.msra.mxu0 0.0
        %2244 = vmatprep.subr.mxu0 0.0
        %2245 = vmatpush1.msra.mxu0 0.0
        %2246 = vmatprep.subr.mxu0 0.0
        %2247 = vmatpush1.msra.mxu0 0.0
        %2248 = vmatprep.subr.mxu0 0.0
        %2249 = vmatpush1.msra.mxu0 0.0
        %2250 = vmatprep.subr.mxu0 0.0
        %2251 = vmatpush1.msra.mxu0 0.0
        %2252 = vmatprep.subr.mxu0 0.0
        %2253 = vmatpush1.msra.mxu0 0.0
        %2254 = vmatprep.subr.mxu0 0.0
        %2255 = vmatpush1.msra.mxu0 0.0
        %2256 = vmatprep.subr.mxu0 0.0
        %2257 = vmatpush1.msra.mxu0 0.0
        %2258 = vmatprep.subr.mxu0 0.0
        %2259 = vmatpush1.msra.mxu0 0.0
        %2260 = vmatprep.subr.mxu0 0.0
        %2261 = vmatpush1.msra.mxu0 0.0
        %2262 = vmatprep.subr.mxu0 0.0
        %2263 = vmatpush1.msra.mxu0 0.0
        %2264 = vmatprep.subr.mxu0 0.0
        %2265 = vmatpush1.msra.mxu0 0.0
        %2266 = vmatprep.subr.mxu0 0.0
        %2267 = vmatpush1.msra.mxu0 0.0
        %2268 = vmatprep.subr.mxu0 0.0
        %2269 = vmatpush1.msra.mxu0 0.0
        %2270 = vmatprep.subr.mxu0 0.0
        %2271 = vmatpush1.msra.mxu0 0.0
        %2272 = vmatprep.mubr.f32.mxu0 0.0
        %2273 = vmatmul.mubr.f32.gmra.mrb[0].mxu0 %v2185
        %v2274 = vpop.f32.mrb[0].mxu0
        %v2275 = vadd.f32 %v2146, %v2274
        %v2276 = vpop.f32.mrb[0].mxu0
        %2277 = vmatprep.mubr.f32.mxu0 0.0
        %2278 = vmatmul.mubr.f32.gmra.mrb[0].mxu0 %v2188
        %v2279 = vpop.f32.mrb[0].mxu0
        %v2280 = vadd.f32 %v2151, %v2279
        %v2281 = vpop.f32.mrb[0].mxu0
        %2282 = vmatprep.mubr.f32.mxu0 0.0
        %2283 = vmatmul.mubr.f32.gmra.mrb[0].mxu0 %v2191
        %v2284 = vpop.f32.mrb[0].mxu0
        %v2285 = vadd.f32 %v2156, %v2284
        %v2286 = vpop.f32.mrb[0].mxu0
        %2287 = vmatprep.mubr.f32.mxu0 0.0
        %2288 = vmatmul.mubr.f32.gmra.mrb[0].mxu0 %v2194
        %v2289 = vpop.f32.mrb[0].mxu0
        %v2290 = vadd.f32 %v2161, %v2289
        %v2291 = vpop.f32.mrb[0].mxu0
        %2292 = vmatprep.mubr.f32.mxu0 0.0
        %2293 = vmatmul.mubr.f32.gmra.mrb[0].mxu0 %v2197
        %v2294 = vpop.f32.mrb[0].mxu0
        %v2295 = vadd.f32 %v2166, %v2294
        %v2296 = vpop.f32.mrb[0].mxu0
        %2297 = vmatprep.mubr.f32.mxu0 0.0
        %2298 = vmatmul.mubr.f32.gmra.mrb[0].mxu0 %v2200
        %v2299 = vpop.f32.mrb[0].mxu0
        %v2300 = vadd.f32 %v2171, %v2299
        %v2301 = vpop.f32.mrb[0].mxu0
        %2302 = vmatprep.mubr.f32.mxu0 0.0
        %2303 = vmatmul.mubr.f32.gmra.mrb[0].mxu0 %v2203
        %v2304 = vpop.f32.mrb[0].mxu0
        %v2305 = vadd.f32 %v2176, %v2304
        %v2306 = vpop.f32.mrb[0].mxu0
        %2307 = vmatprep.mubr.f32.mxu0 0.0
        %2308 = vmatmul.mubr.f32.gmra.mrb[0].mxu0 %v2206
        %v2309 = vpop.f32.mrb[0].mxu0
        %v2310 = vadd.f32 %v2181, %v2309
        %v2311 = vpop.f32.mrb[0].mxu0
        %2312 = vdwg.mxu0
        %s2313 = scalar_lea.vmem %s5, 256
        %v2314 = vld [vmem:[%s2313] sm:$0xff]
        %v2315 = vld [vmem:[%s2313 + $0x8] sm:$0xff]
        %v2316 = vld [vmem:[%s2313 + $0x10] sm:$0xff]
        %v2317 = vld [vmem:[%s2313 + $0x18] sm:$0xff]
        %v2318 = vld [vmem:[%s2313 + $0x20] sm:$0xff]
        %v2319 = vld [vmem:[%s2313 + $0x28] sm:$0xff]
        %v2320 = vld [vmem:[%s2313 + $0x30] sm:$0xff]
        %v2321 = vld [vmem:[%s2313 + $0x38] sm:$0xff]
        %2323 = vset.pattern.permute.xlu0 0
        %2324 = vperm.xlu0 %2323, %v2314
        %v2325 = vpop.permute.xlu0 %2324
        %2328 = vset.pattern.permute.xlu0 0
        %2329 = vperm.xlu0 %2328, %v2315
        %v2330 = vpop.permute.xlu0 %2329
        %2333 = vset.pattern.permute.xlu0 0
        %2334 = vperm.xlu0 %2333, %v2316
        %v2335 = vpop.permute.xlu0 %2334
        %2338 = vset.pattern.permute.xlu0 0
        %2339 = vperm.xlu0 %2338, %v2317
        %v2340 = vpop.permute.xlu0 %2339
        %2343 = vset.pattern.permute.xlu0 0
        %2344 = vperm.xlu0 %2343, %v2318
        %v2345 = vpop.permute.xlu0 %2344
        %2348 = vset.pattern.permute.xlu0 0
        %2349 = vperm.xlu0 %2348, %v2319
        %v2350 = vpop.permute.xlu0 %2349
        %2353 = vset.pattern.permute.xlu0 0
        %2354 = vperm.xlu0 %2353, %v2320
        %v2355 = vpop.permute.xlu0 %2354
        %2358 = vset.pattern.permute.xlu0 0
        %2359 = vperm.xlu0 %2358, %v2321
        %v2360 = vpop.permute.xlu0 %2359
        %v2362 = vadd.f32 %v2275, %v2325
        %v2363 = vadd.f32 %v2280, %v2330
        %v2364 = vadd.f32 %v2285, %v2335
        %v2365 = vadd.f32 %v2290, %v2340
        %v2366 = vadd.f32 %v2295, %v2345
        %v2367 = vadd.f32 %v2300, %v2350
        %v2368 = vadd.f32 %v2305, %v2355
        %v2369 = vadd.f32 %v2310, %v2360
        %v2370 = vxor.u32 %v2362, 2147483648
        %v2371 = vxor.u32 %v2363, 2147483648
        %v2372 = vxor.u32 %v2364, 2147483648
        %v2373 = vxor.u32 %v2365, 2147483648
        %v2374 = vmul.f32 %v2370, 1.442695
        %v2375 = vpow.pop %v2374
        %v2376 = vmul.f32 %v2371, 1.442695
        %v2377 = vpow.pop %v2376
        %v2378 = vmul.f32 %v2372, 1.442695
        %v2379 = vpow.pop %v2378
        %v2380 = vmul.f32 %v2373, 1.442695
        %v2381 = vpow.pop %v2380
        %v2382 = vadd.f32 %v2375, 1.0
        %v2383 = vadd.f32 %v2377, 1.0
        %v2384 = vadd.f32 %v2379, 1.0
        %v2385 = vadd.f32 %v2381, 1.0
        %v2386 = vrcp.pop %v2382
        %v2387 = vmul.f32 1.0, %v2386
        %v2388 = vrcp.pop %v2383
        %v2389 = vmul.f32 1.0, %v2388
        %v2390 = vrcp.pop %v2384
        %v2391 = vmul.f32 1.0, %v2390
        %v2392 = vrcp.pop %v2385
        %v2393 = vmul.f32 1.0, %v2392
        %v2394 = vsub.f32 %v2366, %v2018
        %v2395 = vsub.f32 %v2367, %v2019
        %v2396 = vsub.f32 %v2368, %v2020
        %v2397 = vsub.f32 %v2369, %v2021
        %v2398 = vmul.f32 %v2387, %v2394
        %v2399 = vmul.f32 %v2389, %v2395
        %v2400 = vmul.f32 %v2391, %v2396
        %v2401 = vmul.f32 %v2393, %v2397
        %v2402 = vadd.f32 %v2018, %v2398
        %v2403 = vadd.f32 %v2019, %v2399
        %v2404 = vadd.f32 %v2020, %v2400
        %v2405 = vadd.f32 %v2021, %v2401
        %v2406 = vld [vmem:[%s6] sm:$0xff]
        %v2407 = vld [vmem:[%s6 + $0x8] sm:$0xff]
        %v2408 = vld [vmem:[%s6 + $0x10] sm:$0xff]
        %v2409 = vld [vmem:[%s6 + $0x18] sm:$0xff]
        %v2410 = vld [vmem:[%s6 + $0x20] sm:$0xff]
        %v2411 = vld [vmem:[%s6 + $0x28] sm:$0xff]
        %v2412 = vld [vmem:[%s6 + $0x30] sm:$0xff]
        %v2413 = vld [vmem:[%s6 + $0x38] sm:$0xff]
        %v2414 = vld [vmem:[%s7] sm:$0xff]
        %v2415 = vld [vmem:[%s7 + $0x8] sm:$0xff]
        %v2416 = vld [vmem:[%s7 + $0x10] sm:$0xff]
        %v2417 = vld [vmem:[%s7 + $0x18] sm:$0xff]
        %v2418 = vld [vmem:[%s7 + $0x20] sm:$0xff]
        %v2419 = vld [vmem:[%s7 + $0x28] sm:$0xff]
        %v2420 = vld [vmem:[%s7 + $0x30] sm:$0xff]
        %v2421 = vld [vmem:[%s7 + $0x38] sm:$0xff]
        %2423 = vset.pattern.permute.xlu0 0
        %2424 = vperm.xlu0 %2423, %v2414
        %v2425 = vpop.permute.xlu0 %2424
        %2428 = vset.pattern.permute.xlu0 0
        %2429 = vperm.xlu0 %2428, %v2415
        %v2430 = vpop.permute.xlu0 %2429
        %2433 = vset.pattern.permute.xlu0 0
        %2434 = vperm.xlu0 %2433, %v2416
        %v2435 = vpop.permute.xlu0 %2434
        %2438 = vset.pattern.permute.xlu0 0
        %2439 = vperm.xlu0 %2438, %v2417
        %v2440 = vpop.permute.xlu0 %2439
        %2443 = vset.pattern.permute.xlu0 0
        %2444 = vperm.xlu0 %2443, %v2418
        %v2445 = vpop.permute.xlu0 %2444
        %2448 = vset.pattern.permute.xlu0 0
        %2449 = vperm.xlu0 %2448, %v2419
        %v2450 = vpop.permute.xlu0 %2449
        %2453 = vset.pattern.permute.xlu0 0
        %2454 = vperm.xlu0 %2453, %v2420
        %v2455 = vpop.permute.xlu0 %2454
        %2458 = vset.pattern.permute.xlu0 0
        %2459 = vperm.xlu0 %2458, %v2421
        %v2460 = vpop.permute.xlu0 %2459
        %v2463 = vsel %vm519, %v2406, 0
        %v2466 = vsel %vm519, %v2407, 0
        %v2469 = vsel %vm519, %v2408, 0
        %v2472 = vsel %vm519, %v2409, 0
        %v2475 = vsel %vm519, %v2410, 0
        %v2478 = vsel %vm519, %v2411, 0
        %v2481 = vsel %vm519, %v2412, 0
        %v2484 = vsel %vm519, %v2413, 0
        %2486 = vmatprep.subr.mxu0 0.0
        %2487 = vmatpush1.msra.mxu0 %v2402
        %2488 = vmatprep.subr.mxu0 0.0
        %2489 = vmatpush1.msra.mxu0 %v2403
        %2490 = vmatprep.subr.mxu0 0.0
        %2491 = vmatpush1.msra.mxu0 %v2404
        %2492 = vmatprep.subr.mxu0 0.0
        %2493 = vmatpush1.msra.mxu0 %v2405
        %2494 = vmatprep.subr.mxu0 0.0
        %2495 = vmatpush1.msra.mxu0 0.0
        %2496 = vmatprep.subr.mxu0 0.0
        %2497 = vmatpush1.msra.mxu0 0.0
        %2498 = vmatprep.subr.mxu0 0.0
        %2499 = vmatpush1.msra.mxu0 0.0
        %2500 = vmatprep.subr.mxu0 0.0
        %2501 = vmatpush1.msra.mxu0 0.0
        %2502 = vmatprep.subr.mxu0 0.0
        %2503 = vmatpush1.msra.mxu0 0.0
        %2504 = vmatprep.subr.mxu0 0.0
        %2505 = vmatpush1.msra.mxu0 0.0
        %2506 = vmatprep.subr.mxu0 0.0
        %2507 = vmatpush1.msra.mxu0 0.0
        %2508 = vmatprep.subr.mxu0 0.0
        %2509 = vmatpush1.msra.mxu0 0.0
        %2510 = vmatprep.subr.mxu0 0.0
        %2511 = vmatpush1.msra.mxu0 0.0
        %2512 = vmatprep.subr.mxu0 0.0
        %2513 = vmatpush1.msra.mxu0 0.0
        %2514 = vmatprep.subr.mxu0 0.0
        %2515 = vmatpush1.msra.mxu0 0.0
        %2516 = vmatprep.subr.mxu0 0.0
        %2517 = vmatpush1.msra.mxu0 0.0
        %2518 = vmatprep.subr.mxu0 0.0
        %2519 = vmatpush1.msra.mxu0 0.0
        %2520 = vmatprep.subr.mxu0 0.0
        %2521 = vmatpush1.msra.mxu0 0.0
        %2522 = vmatprep.subr.mxu0 0.0
        %2523 = vmatpush1.msra.mxu0 0.0
        %2524 = vmatprep.subr.mxu0 0.0
        %2525 = vmatpush1.msra.mxu0 0.0
        %2526 = vmatprep.subr.mxu0 0.0
        %2527 = vmatpush1.msra.mxu0 0.0
        %2528 = vmatprep.subr.mxu0 0.0
        %2529 = vmatpush1.msra.mxu0 0.0
        %2530 = vmatprep.subr.mxu0 0.0
        %2531 = vmatpush1.msra.mxu0 0.0
        %2532 = vmatprep.subr.mxu0 0.0
        %2533 = vmatpush1.msra.mxu0 0.0
        %2534 = vmatprep.subr.mxu0 0.0
        %2535 = vmatpush1.msra.mxu0 0.0
        %2536 = vmatprep.subr.mxu0 0.0
        %2537 = vmatpush1.msra.mxu0 0.0
        %2538 = vmatprep.subr.mxu0 0.0
        %2539 = vmatpush1.msra.mxu0 0.0
        %2540 = vmatprep.subr.mxu0 0.0
        %2541 = vmatpush1.msra.mxu0 0.0
        %2542 = vmatprep.subr.mxu0 0.0
        %2543 = vmatpush1.msra.mxu0 0.0
        %2544 = vmatprep.subr.mxu0 0.0
        %2545 = vmatpush1.msra.mxu0 0.0
        %2546 = vmatprep.subr.mxu0 0.0
        %2547 = vmatpush1.msra.mxu0 0.0
        %2548 = vmatprep.subr.mxu0 0.0
        %2549 = vmatpush1.msra.mxu0 0.0
        %2550 = vmatprep.mubr.f32.mxu0 0.0
        %2551 = vmatmul.mubr.f32.gmra.mrb[0].mxu0 %v2463
        %v2552 = vpop.f32.mrb[0].mxu0
        %v2553 = vadd.f32 %v2425, %v2552
        %v2554 = vpop.f32.mrb[0].mxu0
        %2555 = vmatprep.mubr.f32.mxu0 0.0
        %2556 = vmatmul.mubr.f32.gmra.mrb[0].mxu0 %v2466
        %v2557 = vpop.f32.mrb[0].mxu0
        %v2558 = vadd.f32 %v2430, %v2557
        %v2559 = vpop.f32.mrb[0].mxu0
        %2560 = vmatprep.mubr.f32.mxu0 0.0
        %2561 = vmatmul.mubr.f32.gmra.mrb[0].mxu0 %v2469
        %v2562 = vpop.f32.mrb[0].mxu0
        %v2563 = vadd.f32 %v2435, %v2562
        %v2564 = vpop.f32.mrb[0].mxu0
        %2565 = vmatprep.mubr.f32.mxu0 0.0
        %2566 = vmatmul.mubr.f32.gmra.mrb[0].mxu0 %v2472
        %v2567 = vpop.f32.mrb[0].mxu0
        %v2568 = vadd.f32 %v2440, %v2567
        %v2569 = vpop.f32.mrb[0].mxu0
        %2570 = vmatprep.mubr.f32.mxu0 0.0
        %2571 = vmatmul.mubr.f32.gmra.mrb[0].mxu0 %v2475
        %v2572 = vpop.f32.mrb[0].mxu0
        %v2573 = vadd.f32 %v2445, %v2572
        %v2574 = vpop.f32.mrb[0].mxu0
        %2575 = vmatprep.mubr.f32.mxu0 0.0
        %2576 = vmatmul.mubr.f32.gmra.mrb[0].mxu0 %v2478
        %v2577 = vpop.f32.mrb[0].mxu0
        %v2578 = vadd.f32 %v2450, %v2577
        %v2579 = vpop.f32.mrb[0].mxu0
        %2580 = vmatprep.mubr.f32.mxu0 0.0
        %2581 = vmatmul.mubr.f32.gmra.mrb[0].mxu0 %v2481
        %v2582 = vpop.f32.mrb[0].mxu0
        %v2583 = vadd.f32 %v2455, %v2582
        %v2584 = vpop.f32.mrb[0].mxu0
        %2585 = vmatprep.mubr.f32.mxu0 0.0
        %2586 = vmatmul.mubr.f32.gmra.mrb[0].mxu0 %v2484
        %v2587 = vpop.f32.mrb[0].mxu0
        %v2588 = vadd.f32 %v2460, %v2587
        %v2589 = vpop.f32.mrb[0].mxu0
        %2590 = vdwg.mxu0
        %v2591 = vxor.u32 %v2553, 2147483648
        %v2592 = vxor.u32 %v2558, 2147483648
        %v2593 = vxor.u32 %v2563, 2147483648
        %v2594 = vxor.u32 %v2568, 2147483648
        %v2595 = vmul.f32 %v2591, 1.442695
        %v2596 = vpow.pop %v2595
        %v2597 = vmul.f32 %v2592, 1.442695
        %v2598 = vpow.pop %v2597
        %v2599 = vmul.f32 %v2593, 1.442695
        %v2600 = vpow.pop %v2599
        %v2601 = vmul.f32 %v2594, 1.442695
        %v2602 = vpow.pop %v2601
        %v2603 = vadd.f32 %v2596, 1.0
        %v2604 = vadd.f32 %v2598, 1.0
        %v2605 = vadd.f32 %v2600, 1.0
        %v2606 = vadd.f32 %v2602, 1.0
        %v2607 = vrcp.pop %v2603
        %v2608 = vmul.f32 1.0, %v2607
        %v2609 = vrcp.pop %v2604
        %v2610 = vmul.f32 1.0, %v2609
        %v2611 = vrcp.pop %v2605
        %v2612 = vmul.f32 1.0, %v2611
        %v2613 = vrcp.pop %v2606
        %v2614 = vmul.f32 1.0, %v2613
        %v2615 = vsub.f32 %v2573, %v2402
        %v2616 = vsub.f32 %v2578, %v2403
        %v2617 = vsub.f32 %v2583, %v2404
        %v2618 = vsub.f32 %v2588, %v2405
        %v2619 = vmul.f32 %v2608, %v2615
        %v2620 = vmul.f32 %v2610, %v2616
        %v2621 = vmul.f32 %v2612, %v2617
        %v2622 = vmul.f32 %v2614, %v2618
        %v2623 = vadd.f32 %v2402, %v2619
        %v2624 = vadd.f32 %v2403, %v2620
        %v2625 = vadd.f32 %v2404, %v2621
        %v2626 = vadd.f32 %v2405, %v2622
        %s2627 = scalar_lea.vmem %s6, 64
        %v2628 = vld [vmem:[%s2627] sm:$0xff]
        %v2629 = vld [vmem:[%s2627 + $0x8] sm:$0xff]
        %v2630 = vld [vmem:[%s2627 + $0x10] sm:$0xff]
        %v2631 = vld [vmem:[%s2627 + $0x18] sm:$0xff]
        %v2632 = vld [vmem:[%s2627 + $0x20] sm:$0xff]
        %v2633 = vld [vmem:[%s2627 + $0x28] sm:$0xff]
        %v2634 = vld [vmem:[%s2627 + $0x30] sm:$0xff]
        %v2635 = vld [vmem:[%s2627 + $0x38] sm:$0xff]
        %s2636 = scalar_lea.vmem %s7, 64
        %v2637 = vld [vmem:[%s2636] sm:$0xff]
        %v2638 = vld [vmem:[%s2636 + $0x8] sm:$0xff]
        %v2639 = vld [vmem:[%s2636 + $0x10] sm:$0xff]
        %v2640 = vld [vmem:[%s2636 + $0x18] sm:$0xff]
        %v2641 = vld [vmem:[%s2636 + $0x20] sm:$0xff]
        %v2642 = vld [vmem:[%s2636 + $0x28] sm:$0xff]
        %v2643 = vld [vmem:[%s2636 + $0x30] sm:$0xff]
        %v2644 = vld [vmem:[%s2636 + $0x38] sm:$0xff]
        %2646 = vset.pattern.permute.xlu0 0
        %2647 = vperm.xlu0 %2646, %v2637
        %v2648 = vpop.permute.xlu0 %2647
        %2651 = vset.pattern.permute.xlu0 0
        %2652 = vperm.xlu0 %2651, %v2638
        %v2653 = vpop.permute.xlu0 %2652
        %2656 = vset.pattern.permute.xlu0 0
        %2657 = vperm.xlu0 %2656, %v2639
        %v2658 = vpop.permute.xlu0 %2657
        %2661 = vset.pattern.permute.xlu0 0
        %2662 = vperm.xlu0 %2661, %v2640
        %v2663 = vpop.permute.xlu0 %2662
        %2666 = vset.pattern.permute.xlu0 0
        %2667 = vperm.xlu0 %2666, %v2641
        %v2668 = vpop.permute.xlu0 %2667
        %2671 = vset.pattern.permute.xlu0 0
        %2672 = vperm.xlu0 %2671, %v2642
        %v2673 = vpop.permute.xlu0 %2672
        %2676 = vset.pattern.permute.xlu0 0
        %2677 = vperm.xlu0 %2676, %v2643
        %v2678 = vpop.permute.xlu0 %2677
        %2681 = vset.pattern.permute.xlu0 0
        %2682 = vperm.xlu0 %2681, %v2644
        %v2683 = vpop.permute.xlu0 %2682
        %v2686 = vsel %vm519, %v2628, 0
        %v2689 = vsel %vm519, %v2629, 0
        %v2692 = vsel %vm519, %v2630, 0
        %v2695 = vsel %vm519, %v2631, 0
        %v2698 = vsel %vm519, %v2632, 0
        %v2701 = vsel %vm519, %v2633, 0
        %v2704 = vsel %vm519, %v2634, 0
        %v2707 = vsel %vm519, %v2635, 0
        %2709 = vmatprep.subr.mxu0 0.0
        %2710 = vmatpush1.msra.mxu0 %v2623
        %2711 = vmatprep.subr.mxu0 0.0
        %2712 = vmatpush1.msra.mxu0 %v2624
        %2713 = vmatprep.subr.mxu0 0.0
        %2714 = vmatpush1.msra.mxu0 %v2625
        %2715 = vmatprep.subr.mxu0 0.0
        %2716 = vmatpush1.msra.mxu0 %v2626
        %2717 = vmatprep.subr.mxu0 0.0
        %2718 = vmatpush1.msra.mxu0 0.0
        %2719 = vmatprep.subr.mxu0 0.0
        %2720 = vmatpush1.msra.mxu0 0.0
        %2721 = vmatprep.subr.mxu0 0.0
        %2722 = vmatpush1.msra.mxu0 0.0
        %2723 = vmatprep.subr.mxu0 0.0
        %2724 = vmatpush1.msra.mxu0 0.0
        %2725 = vmatprep.subr.mxu0 0.0
        %2726 = vmatpush1.msra.mxu0 0.0
        %2727 = vmatprep.subr.mxu0 0.0
        %2728 = vmatpush1.msra.mxu0 0.0
        %2729 = vmatprep.subr.mxu0 0.0
        %2730 = vmatpush1.msra.mxu0 0.0
        %2731 = vmatprep.subr.mxu0 0.0
        %2732 = vmatpush1.msra.mxu0 0.0
        %2733 = vmatprep.subr.mxu0 0.0
        %2734 = vmatpush1.msra.mxu0 0.0
        %2735 = vmatprep.subr.mxu0 0.0
        %2736 = vmatpush1.msra.mxu0 0.0
        %2737 = vmatprep.subr.mxu0 0.0
        %2738 = vmatpush1.msra.mxu0 0.0
        %2739 = vmatprep.subr.mxu0 0.0
        %2740 = vmatpush1.msra.mxu0 0.0
        %2741 = vmatprep.subr.mxu0 0.0
        %2742 = vmatpush1.msra.mxu0 0.0
        %2743 = vmatprep.subr.mxu0 0.0
        %2744 = vmatpush1.msra.mxu0 0.0
        %2745 = vmatprep.subr.mxu0 0.0
        %2746 = vmatpush1.msra.mxu0 0.0
        %2747 = vmatprep.subr.mxu0 0.0
        %2748 = vmatpush1.msra.mxu0 0.0
        %2749 = vmatprep.subr.mxu0 0.0
        %2750 = vmatpush1.msra.mxu0 0.0
        %2751 = vmatprep.subr.mxu0 0.0
        %2752 = vmatpush1.msra.mxu0 0.0
        %2753 = vmatprep.subr.mxu0 0.0
        %2754 = vmatpush1.msra.mxu0 0.0
        %2755 = vmatprep.subr.mxu0 0.0
        %2756 = vmatpush1.msra.mxu0 0.0
        %2757 = vmatprep.subr.mxu0 0.0
        %2758 = vmatpush1.msra.mxu0 0.0
        %2759 = vmatprep.subr.mxu0 0.0
        %2760 = vmatpush1.msra.mxu0 0.0
        %2761 = vmatprep.subr.mxu0 0.0
        %2762 = vmatpush1.msra.mxu0 0.0
        %2763 = vmatprep.subr.mxu0 0.0
        %2764 = vmatpush1.msra.mxu0 0.0
        %2765 = vmatprep.subr.mxu0 0.0
        %2766 = vmatpush1.msra.mxu0 0.0
        %2767 = vmatprep.subr.mxu0 0.0
        %2768 = vmatpush1.msra.mxu0 0.0
        %2769 = vmatprep.subr.mxu0 0.0
        %2770 = vmatpush1.msra.mxu0 0.0
        %2771 = vmatprep.subr.mxu0 0.0
        %2772 = vmatpush1.msra.mxu0 0.0
        %2773 = vmatprep.mubr.f32.mxu0 0.0
        %2774 = vmatmul.mubr.f32.gmra.mrb[0].mxu0 %v2686
        %v2775 = vpop.f32.mrb[0].mxu0
        %v2776 = vadd.f32 %v2648, %v2775
        %v2777 = vpop.f32.mrb[0].mxu0
        %2778 = vmatprep.mubr.f32.mxu0 0.0
        %2779 = vmatmul.mubr.f32.gmra.mrb[0].mxu0 %v2689
        %v2780 = vpop.f32.mrb[0].mxu0
        %v2781 = vadd.f32 %v2653, %v2780
        %v2782 = vpop.f32.mrb[0].mxu0
        %2783 = vmatprep.mubr.f32.mxu0 0.0
        %2784 = vmatmul.mubr.f32.gmra.mrb[0].mxu0 %v2692
        %v2785 = vpop.f32.mrb[0].mxu0
        %v2786 = vadd.f32 %v2658, %v2785
        %v2787 = vpop.f32.mrb[0].mxu0
        %2788 = vmatprep.mubr.f32.mxu0 0.0
        %2789 = vmatmul.mubr.f32.gmra.mrb[0].mxu0 %v2695
        %v2790 = vpop.f32.mrb[0].mxu0
        %v2791 = vadd.f32 %v2663, %v2790
        %v2792 = vpop.f32.mrb[0].mxu0
        %2793 = vmatprep.mubr.f32.mxu0 0.0
        %2794 = vmatmul.mubr.f32.gmra.mrb[0].mxu0 %v2698
        %v2795 = vpop.f32.mrb[0].mxu0
        %v2796 = vadd.f32 %v2668, %v2795
        %v2797 = vpop.f32.mrb[0].mxu0
        %2798 = vmatprep.mubr.f32.mxu0 0.0
        %2799 = vmatmul.mubr.f32.gmra.mrb[0].mxu0 %v2701
        %v2800 = vpop.f32.mrb[0].mxu0
        %v2801 = vadd.f32 %v2673, %v2800
        %v2802 = vpop.f32.mrb[0].mxu0
        %2803 = vmatprep.mubr.f32.mxu0 0.0
        %2804 = vmatmul.mubr.f32.gmra.mrb[0].mxu0 %v2704
        %v2805 = vpop.f32.mrb[0].mxu0
        %v2806 = vadd.f32 %v2678, %v2805
        %v2807 = vpop.f32.mrb[0].mxu0
        %2808 = vmatprep.mubr.f32.mxu0 0.0
        %2809 = vmatmul.mubr.f32.gmra.mrb[0].mxu0 %v2707
        %v2810 = vpop.f32.mrb[0].mxu0
        %v2811 = vadd.f32 %v2683, %v2810
        %v2812 = vpop.f32.mrb[0].mxu0
        %2813 = vdwg.mxu0
        %v2814 = vxor.u32 %v2776, 2147483648
        %v2815 = vxor.u32 %v2781, 2147483648
        %v2816 = vxor.u32 %v2786, 2147483648
        %v2817 = vxor.u32 %v2791, 2147483648
        %v2818 = vmul.f32 %v2814, 1.442695
        %v2819 = vpow.pop %v2818
        %v2820 = vmul.f32 %v2815, 1.442695
        %v2821 = vpow.pop %v2820
        %v2822 = vmul.f32 %v2816, 1.442695
        %v2823 = vpow.pop %v2822
        %v2824 = vmul.f32 %v2817, 1.442695
        %v2825 = vpow.pop %v2824
        %v2826 = vadd.f32 %v2819, 1.0
        %v2827 = vadd.f32 %v2821, 1.0
        %v2828 = vadd.f32 %v2823, 1.0
        %v2829 = vadd.f32 %v2825, 1.0
        %v2830 = vrcp.pop %v2826
        %v2831 = vmul.f32 1.0, %v2830
        %v2832 = vrcp.pop %v2827
        %v2833 = vmul.f32 1.0, %v2832
        %v2834 = vrcp.pop %v2828
        %v2835 = vmul.f32 1.0, %v2834
        %v2836 = vrcp.pop %v2829
        %v2837 = vmul.f32 1.0, %v2836
        %v2838 = vsub.f32 %v2796, %v2623
        %v2839 = vsub.f32 %v2801, %v2624
        %v2840 = vsub.f32 %v2806, %v2625
        %v2841 = vsub.f32 %v2811, %v2626
        %v2842 = vmul.f32 %v2831, %v2838
        %v2843 = vmul.f32 %v2833, %v2839
        %v2844 = vmul.f32 %v2835, %v2840
        %v2845 = vmul.f32 %v2837, %v2841
        %v2846 = vadd.f32 %v2623, %v2842
        %v2847 = vadd.f32 %v2624, %v2843
        %v2848 = vadd.f32 %v2625, %v2844
        %v2849 = vadd.f32 %v2626, %v2845
        %v2850 = vld [vmem:[%s8] sm:$0xff]
        %v2851 = vld [vmem:[%s8 + $0x8] sm:$0xff]
        %v2852 = vld [vmem:[%s8 + $0x10] sm:$0xff]
        %v2853 = vld [vmem:[%s8 + $0x18] sm:$0xff]
        %v2854 = vld [vmem:[%s9] sm:$0xff]
        %v2855 = vld [vmem:[%s9 + $0x8] sm:$0xff]
        %v2856 = vld [vmem:[%s9 + $0x10] sm:$0xff]
        %v2857 = vld [vmem:[%s9 + $0x18] sm:$0xff]
        %2859 = vset.pattern.permute.xlu0 0
        %2860 = vperm.xlu0 %2859, %v2854
        %v2861 = vpop.permute.xlu0 %2860
        %2864 = vset.pattern.permute.xlu0 0
        %2865 = vperm.xlu0 %2864, %v2855
        %v2866 = vpop.permute.xlu0 %2865
        %2869 = vset.pattern.permute.xlu0 0
        %2870 = vperm.xlu0 %2869, %v2856
        %v2871 = vpop.permute.xlu0 %2870
        %2874 = vset.pattern.permute.xlu0 0
        %2875 = vperm.xlu0 %2874, %v2857
        %v2876 = vpop.permute.xlu0 %2875
        %v2879 = vsel %vm519, %v2850, 0
        %v2882 = vsel %vm519, %v2851, 0
        %v2885 = vsel %vm519, %v2852, 0
        %v2888 = vsel %vm519, %v2853, 0
        %2890 = vmatprep.subr.mxu0 0.0
        %2891 = vmatpush1.msra.mxu0 %v2846
        %2892 = vmatprep.subr.mxu0 0.0
        %2893 = vmatpush1.msra.mxu0 %v2847
        %2894 = vmatprep.subr.mxu0 0.0
        %2895 = vmatpush1.msra.mxu0 %v2848
        %2896 = vmatprep.subr.mxu0 0.0
        %2897 = vmatpush1.msra.mxu0 %v2849
        %2898 = vmatprep.subr.mxu0 0.0
        %2899 = vmatpush1.msra.mxu0 0.0
        %2900 = vmatprep.subr.mxu0 0.0
        %2901 = vmatpush1.msra.mxu0 0.0
        %2902 = vmatprep.subr.mxu0 0.0
        %2903 = vmatpush1.msra.mxu0 0.0
        %2904 = vmatprep.subr.mxu0 0.0
        %2905 = vmatpush1.msra.mxu0 0.0
        %2906 = vmatprep.subr.mxu0 0.0
        %2907 = vmatpush1.msra.mxu0 0.0
        %2908 = vmatprep.subr.mxu0 0.0
        %2909 = vmatpush1.msra.mxu0 0.0
        %2910 = vmatprep.subr.mxu0 0.0
        %2911 = vmatpush1.msra.mxu0 0.0
        %2912 = vmatprep.subr.mxu0 0.0
        %2913 = vmatpush1.msra.mxu0 0.0
        %2914 = vmatprep.subr.mxu0 0.0
        %2915 = vmatpush1.msra.mxu0 0.0
        %2916 = vmatprep.subr.mxu0 0.0
        %2917 = vmatpush1.msra.mxu0 0.0
        %2918 = vmatprep.subr.mxu0 0.0
        %2919 = vmatpush1.msra.mxu0 0.0
        %2920 = vmatprep.subr.mxu0 0.0
        %2921 = vmatpush1.msra.mxu0 0.0
        %2922 = vmatprep.subr.mxu0 0.0
        %2923 = vmatpush1.msra.mxu0 0.0
        %2924 = vmatprep.subr.mxu0 0.0
        %2925 = vmatpush1.msra.mxu0 0.0
        %2926 = vmatprep.subr.mxu0 0.0
        %2927 = vmatpush1.msra.mxu0 0.0
        %2928 = vmatprep.subr.mxu0 0.0
        %2929 = vmatpush1.msra.mxu0 0.0
        %2930 = vmatprep.subr.mxu0 0.0
        %2931 = vmatpush1.msra.mxu0 0.0
        %2932 = vmatprep.subr.mxu0 0.0
        %2933 = vmatpush1.msra.mxu0 0.0
        %2934 = vmatprep.subr.mxu0 0.0
        %2935 = vmatpush1.msra.mxu0 0.0
        %2936 = vmatprep.subr.mxu0 0.0
        %2937 = vmatpush1.msra.mxu0 0.0
        %2938 = vmatprep.subr.mxu0 0.0
        %2939 = vmatpush1.msra.mxu0 0.0
        %2940 = vmatprep.subr.mxu0 0.0
        %2941 = vmatpush1.msra.mxu0 0.0
        %2942 = vmatprep.subr.mxu0 0.0
        %2943 = vmatpush1.msra.mxu0 0.0
        %2944 = vmatprep.subr.mxu0 0.0
        %2945 = vmatpush1.msra.mxu0 0.0
        %2946 = vmatprep.subr.mxu0 0.0
        %2947 = vmatpush1.msra.mxu0 0.0
        %2948 = vmatprep.subr.mxu0 0.0
        %2949 = vmatpush1.msra.mxu0 0.0
        %2950 = vmatprep.subr.mxu0 0.0
        %2951 = vmatpush1.msra.mxu0 0.0
        %2952 = vmatprep.subr.mxu0 0.0
        %2953 = vmatpush1.msra.mxu0 0.0
        %2954 = vmatprep.mubr.f32.mxu0 0.0
        %2955 = vmatmul.mubr.f32.gmra.mrb[0].mxu0 %v2879
        %v2956 = vpop.f32.mrb[0].mxu0
        %v2957 = vadd.f32 %v2861, %v2956
        %v2958 = vpop.f32.mrb[0].mxu0
        %2959 = vmatprep.mubr.f32.mxu0 0.0
        %2960 = vmatmul.mubr.f32.gmra.mrb[0].mxu0 %v2882
        %v2961 = vpop.f32.mrb[0].mxu0
        %v2962 = vadd.f32 %v2866, %v2961
        %v2963 = vpop.f32.mrb[0].mxu0
        %2964 = vmatprep.mubr.f32.mxu0 0.0
        %2965 = vmatmul.mubr.f32.gmra.mrb[0].mxu0 %v2885
        %v2966 = vpop.f32.mrb[0].mxu0
        %v2967 = vadd.f32 %v2871, %v2966
        %v2968 = vpop.f32.mrb[0].mxu0
        %2969 = vmatprep.mubr.f32.mxu0 0.0
        %2970 = vmatmul.mubr.f32.gmra.mrb[0].mxu0 %v2888
        %v2971 = vpop.f32.mrb[0].mxu0
        %v2972 = vadd.f32 %v2876, %v2971
        %v2973 = vpop.f32.mrb[0].mxu0
        %2974 = vdwg.mxu0
        %v2975 = vmax.f32 %v2957, 0.0
        %v2976 = vmax.f32 %v2962, 0.0
        %v2977 = vmax.f32 %v2967, 0.0
        %v2978 = vmax.f32 %v2972, 0.0
        %s2979 = scalar_lea.vmem %s8, 32
        %v2980 = vld [vmem:[%s2979] sm:$0xff]
        %v2981 = vld [vmem:[%s2979 + $0x8] sm:$0xff]
        %v2982 = vld [vmem:[%s2979 + $0x10] sm:$0xff]
        %v2983 = vld [vmem:[%s2979 + $0x18] sm:$0xff]
        %s2984 = scalar_lea.vmem %s9, 32
        %v2985 = vld [vmem:[%s2984] sm:$0xff]
        %v2986 = vld [vmem:[%s2984 + $0x8] sm:$0xff]
        %v2987 = vld [vmem:[%s2984 + $0x10] sm:$0xff]
        %v2988 = vld [vmem:[%s2984 + $0x18] sm:$0xff]
        %2990 = vset.pattern.permute.xlu0 0
        %2991 = vperm.xlu0 %2990, %v2985
        %v2992 = vpop.permute.xlu0 %2991
        %2995 = vset.pattern.permute.xlu0 0
        %2996 = vperm.xlu0 %2995, %v2986
        %v2997 = vpop.permute.xlu0 %2996
        %3000 = vset.pattern.permute.xlu0 0
        %3001 = vperm.xlu0 %3000, %v2987
        %v3002 = vpop.permute.xlu0 %3001
        %3005 = vset.pattern.permute.xlu0 0
        %3006 = vperm.xlu0 %3005, %v2988
        %v3007 = vpop.permute.xlu0 %3006
        %v3010 = vsel %vm519, %v2980, 0
        %v3013 = vsel %vm519, %v2981, 0
        %v3016 = vsel %vm519, %v2982, 0
        %v3019 = vsel %vm519, %v2983, 0
        %3021 = vmatprep.subr.mxu0 0.0
        %3022 = vmatpush1.msra.mxu0 %v2975
        %3023 = vmatprep.subr.mxu0 0.0
        %3024 = vmatpush1.msra.mxu0 %v2976
        %3025 = vmatprep.subr.mxu0 0.0
        %3026 = vmatpush1.msra.mxu0 %v2977
        %3027 = vmatprep.subr.mxu0 0.0
        %3028 = vmatpush1.msra.mxu0 %v2978
        %3029 = vmatprep.subr.mxu0 0.0
        %3030 = vmatpush1.msra.mxu0 0.0
        %3031 = vmatprep.subr.mxu0 0.0
        %3032 = vmatpush1.msra.mxu0 0.0
        %3033 = vmatprep.subr.mxu0 0.0
        %3034 = vmatpush1.msra.mxu0 0.0
        %3035 = vmatprep.subr.mxu0 0.0
        %3036 = vmatpush1.msra.mxu0 0.0
        %3037 = vmatprep.subr.mxu0 0.0
        %3038 = vmatpush1.msra.mxu0 0.0
        %3039 = vmatprep.subr.mxu0 0.0
        %3040 = vmatpush1.msra.mxu0 0.0
        %3041 = vmatprep.subr.mxu0 0.0
        %3042 = vmatpush1.msra.mxu0 0.0
        %3043 = vmatprep.subr.mxu0 0.0
        %3044 = vmatpush1.msra.mxu0 0.0
        %3045 = vmatprep.subr.mxu0 0.0
        %3046 = vmatpush1.msra.mxu0 0.0
        %3047 = vmatprep.subr.mxu0 0.0
        %3048 = vmatpush1.msra.mxu0 0.0
        %3049 = vmatprep.subr.mxu0 0.0
        %3050 = vmatpush1.msra.mxu0 0.0
        %3051 = vmatprep.subr.mxu0 0.0
        %3052 = vmatpush1.msra.mxu0 0.0
        %3053 = vmatprep.subr.mxu0 0.0
        %3054 = vmatpush1.msra.mxu0 0.0
        %3055 = vmatprep.subr.mxu0 0.0
        %3056 = vmatpush1.msra.mxu0 0.0
        %3057 = vmatprep.subr.mxu0 0.0
        %3058 = vmatpush1.msra.mxu0 0.0
        %3059 = vmatprep.subr.mxu0 0.0
        %3060 = vmatpush1.msra.mxu0 0.0
        %3061 = vmatprep.subr.mxu0 0.0
        %3062 = vmatpush1.msra.mxu0 0.0
        %3063 = vmatprep.subr.mxu0 0.0
        %3064 = vmatpush1.msra.mxu0 0.0
        %3065 = vmatprep.subr.mxu0 0.0
        %3066 = vmatpush1.msra.mxu0 0.0
        %3067 = vmatprep.subr.mxu0 0.0
        %3068 = vmatpush1.msra.mxu0 0.0
        %3069 = vmatprep.subr.mxu0 0.0
        %3070 = vmatpush1.msra.mxu0 0.0
        %3071 = vmatprep.subr.mxu0 0.0
        %3072 = vmatpush1.msra.mxu0 0.0
        %3073 = vmatprep.subr.mxu0 0.0
        %3074 = vmatpush1.msra.mxu0 0.0
        %3075 = vmatprep.subr.mxu0 0.0
        %3076 = vmatpush1.msra.mxu0 0.0
        %3077 = vmatprep.subr.mxu0 0.0
        %3078 = vmatpush1.msra.mxu0 0.0
        %3079 = vmatprep.subr.mxu0 0.0
        %3080 = vmatpush1.msra.mxu0 0.0
        %3081 = vmatprep.subr.mxu0 0.0
        %3082 = vmatpush1.msra.mxu0 0.0
        %3083 = vmatprep.subr.mxu0 0.0
        %3084 = vmatpush1.msra.mxu0 0.0
        %3085 = vmatprep.mubr.f32.mxu0 0.0
        %3086 = vmatmul.mubr.f32.gmra.mrb[0].mxu0 %v3010
        %v3087 = vpop.f32.mrb[0].mxu0
        %v3088 = vadd.f32 %v2992, %v3087
        %v3089 = vpop.f32.mrb[0].mxu0
        %3090 = vmatprep.mubr.f32.mxu0 0.0
        %3091 = vmatmul.mubr.f32.gmra.mrb[0].mxu0 %v3013
        %v3092 = vpop.f32.mrb[0].mxu0
        %v3093 = vadd.f32 %v2997, %v3092
        %v3094 = vpop.f32.mrb[0].mxu0
        %3095 = vmatprep.mubr.f32.mxu0 0.0
        %3096 = vmatmul.mubr.f32.gmra.mrb[0].mxu0 %v3016
        %v3097 = vpop.f32.mrb[0].mxu0
        %v3098 = vadd.f32 %v3002, %v3097
        %v3099 = vpop.f32.mrb[0].mxu0
        %3100 = vmatprep.mubr.f32.mxu0 0.0
        %3101 = vmatmul.mubr.f32.gmra.mrb[0].mxu0 %v3019
        %v3102 = vpop.f32.mrb[0].mxu0
        %v3103 = vadd.f32 %v3007, %v3102
        %v3104 = vpop.f32.mrb[0].mxu0
        %3105 = vdwg.mxu0
        %v3106 = vmax.f32 %v3088, 0.0
        %v3107 = vmax.f32 %v3093, 0.0
        %v3108 = vmax.f32 %v3098, 0.0
        %v3109 = vmax.f32 %v3103, 0.0
        %s3110 = scalar_lea.vmem %s8, 64
        %v3111 = vld [vmem:[%s3110] sm:$0xff]
        %v3112 = vld [vmem:[%s3110 + $0x8] sm:$0xff]
        %v3113 = vld [vmem:[%s3110 + $0x10] sm:$0xff]
        %v3114 = vld [vmem:[%s3110 + $0x18] sm:$0xff]
        %s3115 = scalar_lea.vmem %s9, 64
        %v3116 = vld [vmem:[%s3115] sm:$0xff]
        %v3117 = vld [vmem:[%s3115 + $0x8] sm:$0xff]
        %v3118 = vld [vmem:[%s3115 + $0x10] sm:$0xff]
        %v3119 = vld [vmem:[%s3115 + $0x18] sm:$0xff]
        %3121 = vset.pattern.permute.xlu0 0
        %3122 = vperm.xlu0 %3121, %v3116
        %v3123 = vpop.permute.xlu0 %3122
        %3126 = vset.pattern.permute.xlu0 0
        %3127 = vperm.xlu0 %3126, %v3117
        %v3128 = vpop.permute.xlu0 %3127
        %3131 = vset.pattern.permute.xlu0 0
        %3132 = vperm.xlu0 %3131, %v3118
        %v3133 = vpop.permute.xlu0 %3132
        %3136 = vset.pattern.permute.xlu0 0
        %3137 = vperm.xlu0 %3136, %v3119
        %v3138 = vpop.permute.xlu0 %3137
        %v3141 = vsel %vm519, %v3111, 0
        %v3144 = vsel %vm519, %v3112, 0
        %v3147 = vsel %vm519, %v3113, 0
        %v3150 = vsel %vm519, %v3114, 0
        %3152 = vmatprep.subr.mxu0 0.0
        %3153 = vmatpush1.msra.mxu0 %v3106
        %3154 = vmatprep.subr.mxu0 0.0
        %3155 = vmatpush1.msra.mxu0 %v3107
        %3156 = vmatprep.subr.mxu0 0.0
        %3157 = vmatpush1.msra.mxu0 %v3108
        %3158 = vmatprep.subr.mxu0 0.0
        %3159 = vmatpush1.msra.mxu0 %v3109
        %3160 = vmatprep.subr.mxu0 0.0
        %3161 = vmatpush1.msra.mxu0 0.0
        %3162 = vmatprep.subr.mxu0 0.0
        %3163 = vmatpush1.msra.mxu0 0.0
        %3164 = vmatprep.subr.mxu0 0.0
        %3165 = vmatpush1.msra.mxu0 0.0
        %3166 = vmatprep.subr.mxu0 0.0
        %3167 = vmatpush1.msra.mxu0 0.0
        %3168 = vmatprep.subr.mxu0 0.0
        %3169 = vmatpush1.msra.mxu0 0.0
        %3170 = vmatprep.subr.mxu0 0.0
        %3171 = vmatpush1.msra.mxu0 0.0
        %3172 = vmatprep.subr.mxu0 0.0
        %3173 = vmatpush1.msra.mxu0 0.0
        %3174 = vmatprep.subr.mxu0 0.0
        %3175 = vmatpush1.msra.mxu0 0.0
        %3176 = vmatprep.subr.mxu0 0.0
        %3177 = vmatpush1.msra.mxu0 0.0
        %3178 = vmatprep.subr.mxu0 0.0
        %3179 = vmatpush1.msra.mxu0 0.0
        %3180 = vmatprep.subr.mxu0 0.0
        %3181 = vmatpush1.msra.mxu0 0.0
        %3182 = vmatprep.subr.mxu0 0.0
        %3183 = vmatpush1.msra.mxu0 0.0
        %3184 = vmatprep.subr.mxu0 0.0
        %3185 = vmatpush1.msra.mxu0 0.0
        %3186 = vmatprep.subr.mxu0 0.0
        %3187 = vmatpush1.msra.mxu0 0.0
        %3188 = vmatprep.subr.mxu0 0.0
        %3189 = vmatpush1.msra.mxu0 0.0
        %3190 = vmatprep.subr.mxu0 0.0
        %3191 = vmatpush1.msra.mxu0 0.0
        %3192 = vmatprep.subr.mxu0 0.0
        %3193 = vmatpush1.msra.mxu0 0.0
        %3194 = vmatprep.subr.mxu0 0.0
        %3195 = vmatpush1.msra.mxu0 0.0
        %3196 = vmatprep.subr.mxu0 0.0
        %3197 = vmatpush1.msra.mxu0 0.0
        %3198 = vmatprep.subr.mxu0 0.0
        %3199 = vmatpush1.msra.mxu0 0.0
        %3200 = vmatprep.subr.mxu0 0.0
        %3201 = vmatpush1.msra.mxu0 0.0
        %3202 = vmatprep.subr.mxu0 0.0
        %3203 = vmatpush1.msra.mxu0 0.0
        %3204 = vmatprep.subr.mxu0 0.0
        %3205 = vmatpush1.msra.mxu0 0.0
        %3206 = vmatprep.subr.mxu0 0.0
        %3207 = vmatpush1.msra.mxu0 0.0
        %3208 = vmatprep.subr.mxu0 0.0
        %3209 = vmatpush1.msra.mxu0 0.0
        %3210 = vmatprep.subr.mxu0 0.0
        %3211 = vmatpush1.msra.mxu0 0.0
        %3212 = vmatprep.subr.mxu0 0.0
        %3213 = vmatpush1.msra.mxu0 0.0
        %3214 = vmatprep.subr.mxu0 0.0
        %3215 = vmatpush1.msra.mxu0 0.0
        %3216 = vmatprep.mubr.f32.mxu0 0.0
        %3217 = vmatmul.mubr.f32.gmra.mrb[0].mxu0 %v3141
        %v3218 = vpop.f32.mrb[0].mxu0
        %v3219 = vadd.f32 %v3123, %v3218
        %v3220 = vpop.f32.mrb[0].mxu0
        %3221 = vmatprep.mubr.f32.mxu0 0.0
        %3222 = vmatmul.mubr.f32.gmra.mrb[0].mxu0 %v3144
        %v3223 = vpop.f32.mrb[0].mxu0
        %v3224 = vadd.f32 %v3128, %v3223
        %v3225 = vpop.f32.mrb[0].mxu0
        %3226 = vmatprep.mubr.f32.mxu0 0.0
        %3227 = vmatmul.mubr.f32.gmra.mrb[0].mxu0 %v3147
        %v3228 = vpop.f32.mrb[0].mxu0
        %v3229 = vadd.f32 %v3133, %v3228
        %v3230 = vpop.f32.mrb[0].mxu0
        %3231 = vmatprep.mubr.f32.mxu0 0.0
        %3232 = vmatmul.mubr.f32.gmra.mrb[0].mxu0 %v3150
        %v3233 = vpop.f32.mrb[0].mxu0
        %v3234 = vadd.f32 %v3138, %v3233
        %v3235 = vpop.f32.mrb[0].mxu0
        %3236 = vdwg.mxu0
        %v3237 = vmax.f32 %v3219, 0.0
        %v3238 = vmax.f32 %v3224, 0.0
        %v3239 = vmax.f32 %v3229, 0.0
        %v3240 = vmax.f32 %v3234, 0.0
        %s3241 = scalar_lea.vmem %s8, 96
        %v3242 = vld [vmem:[%s3241] sm:$0xff]
        %v3243 = vld [vmem:[%s3241 + $0x8] sm:$0xff]
        %v3244 = vld [vmem:[%s3241 + $0x10] sm:$0xff]
        %v3245 = vld [vmem:[%s3241 + $0x18] sm:$0xff]
        %s3246 = scalar_lea.vmem %s9, 96
        %v3247 = vld [vmem:[%s3246] sm:$0xff]
        %v3248 = vld [vmem:[%s3246 + $0x8] sm:$0xff]
        %v3249 = vld [vmem:[%s3246 + $0x10] sm:$0xff]
        %v3250 = vld [vmem:[%s3246 + $0x18] sm:$0xff]
        %3252 = vset.pattern.permute.xlu0 0
        %3253 = vperm.xlu0 %3252, %v3247
        %v3254 = vpop.permute.xlu0 %3253
        %3257 = vset.pattern.permute.xlu0 0
        %3258 = vperm.xlu0 %3257, %v3248
        %v3259 = vpop.permute.xlu0 %3258
        %3262 = vset.pattern.permute.xlu0 0
        %3263 = vperm.xlu0 %3262, %v3249
        %v3264 = vpop.permute.xlu0 %3263
        %3267 = vset.pattern.permute.xlu0 0
        %3268 = vperm.xlu0 %3267, %v3250
        %v3269 = vpop.permute.xlu0 %3268
        %v3272 = vsel %vm519, %v3242, 0
        %v3275 = vsel %vm519, %v3243, 0
        %v3278 = vsel %vm519, %v3244, 0
        %v3281 = vsel %vm519, %v3245, 0
        %3283 = vmatprep.subr.mxu0 0.0
        %3284 = vmatpush1.msra.mxu0 %v3237
        %3285 = vmatprep.subr.mxu0 0.0
        %3286 = vmatpush1.msra.mxu0 %v3238
        %3287 = vmatprep.subr.mxu0 0.0
        %3288 = vmatpush1.msra.mxu0 %v3239
        %3289 = vmatprep.subr.mxu0 0.0
        %3290 = vmatpush1.msra.mxu0 %v3240
        %3291 = vmatprep.subr.mxu0 0.0
        %3292 = vmatpush1.msra.mxu0 0.0
        %3293 = vmatprep.subr.mxu0 0.0
        %3294 = vmatpush1.msra.mxu0 0.0
        %3295 = vmatprep.subr.mxu0 0.0
        %3296 = vmatpush1.msra.mxu0 0.0
        %3297 = vmatprep.subr.mxu0 0.0
        %3298 = vmatpush1.msra.mxu0 0.0
        %3299 = vmatprep.subr.mxu0 0.0
        %3300 = vmatpush1.msra.mxu0 0.0
        %3301 = vmatprep.subr.mxu0 0.0
        %3302 = vmatpush1.msra.mxu0 0.0
        %3303 = vmatprep.subr.mxu0 0.0
        %3304 = vmatpush1.msra.mxu0 0.0
        %3305 = vmatprep.subr.mxu0 0.0
        %3306 = vmatpush1.msra.mxu0 0.0
        %3307 = vmatprep.subr.mxu0 0.0
        %3308 = vmatpush1.msra.mxu0 0.0
        %3309 = vmatprep.subr.mxu0 0.0
        %3310 = vmatpush1.msra.mxu0 0.0
        %3311 = vmatprep.subr.mxu0 0.0
        %3312 = vmatpush1.msra.mxu0 0.0
        %3313 = vmatprep.subr.mxu0 0.0
        %3314 = vmatpush1.msra.mxu0 0.0
        %3315 = vmatprep.subr.mxu0 0.0
        %3316 = vmatpush1.msra.mxu0 0.0
        %3317 = vmatprep.subr.mxu0 0.0
        %3318 = vmatpush1.msra.mxu0 0.0
        %3319 = vmatprep.subr.mxu0 0.0
        %3320 = vmatpush1.msra.mxu0 0.0
        %3321 = vmatprep.subr.mxu0 0.0
        %3322 = vmatpush1.msra.mxu0 0.0
        %3323 = vmatprep.subr.mxu0 0.0
        %3324 = vmatpush1.msra.mxu0 0.0
        %3325 = vmatprep.subr.mxu0 0.0
        %3326 = vmatpush1.msra.mxu0 0.0
        %3327 = vmatprep.subr.mxu0 0.0
        %3328 = vmatpush1.msra.mxu0 0.0
        %3329 = vmatprep.subr.mxu0 0.0
        %3330 = vmatpush1.msra.mxu0 0.0
        %3331 = vmatprep.subr.mxu0 0.0
        %3332 = vmatpush1.msra.mxu0 0.0
        %3333 = vmatprep.subr.mxu0 0.0
        %3334 = vmatpush1.msra.mxu0 0.0
        %3335 = vmatprep.subr.mxu0 0.0
        %3336 = vmatpush1.msra.mxu0 0.0
        %3337 = vmatprep.subr.mxu0 0.0
        %3338 = vmatpush1.msra.mxu0 0.0
        %3339 = vmatprep.subr.mxu0 0.0
        %3340 = vmatpush1.msra.mxu0 0.0
        %3341 = vmatprep.subr.mxu0 0.0
        %3342 = vmatpush1.msra.mxu0 0.0
        %3343 = vmatprep.subr.mxu0 0.0
        %3344 = vmatpush1.msra.mxu0 0.0
        %3345 = vmatprep.subr.mxu0 0.0
        %3346 = vmatpush1.msra.mxu0 0.0
        %3347 = vmatprep.mubr.f32.mxu0 0.0
        %3348 = vmatmul.mubr.f32.gmra.mrb[0].mxu0 %v3272
        %v3349 = vpop.f32.mrb[0].mxu0
        %v3350 = vadd.f32 %v3254, %v3349
        %v3351 = vpop.f32.mrb[0].mxu0
        %3352 = vmatprep.mubr.f32.mxu0 0.0
        %3353 = vmatmul.mubr.f32.gmra.mrb[0].mxu0 %v3275
        %v3354 = vpop.f32.mrb[0].mxu0
        %v3355 = vadd.f32 %v3259, %v3354
        %v3356 = vpop.f32.mrb[0].mxu0
        %3357 = vmatprep.mubr.f32.mxu0 0.0
        %3358 = vmatmul.mubr.f32.gmra.mrb[0].mxu0 %v3278
        %v3359 = vpop.f32.mrb[0].mxu0
        %v3360 = vadd.f32 %v3264, %v3359
        %v3361 = vpop.f32.mrb[0].mxu0
        %3362 = vmatprep.mubr.f32.mxu0 0.0
        %3363 = vmatmul.mubr.f32.gmra.mrb[0].mxu0 %v3281
        %v3364 = vpop.f32.mrb[0].mxu0
        %v3365 = vadd.f32 %v3269, %v3364
        %v3366 = vpop.f32.mrb[0].mxu0
        %3367 = vdwg.mxu0
        %3368 = vst [vmem:[%s350] sm:$0xff] %v3350
        %3369 = vst [vmem:[%s350 + $0x8] sm:$0xff] %v3355
        %3370 = vst [vmem:[%s350 + $0x10] sm:$0xff] %v3360
        %3371 = vst [vmem:[%s350 + $0x18] sm:$0xff] %v3365
        %s3372 = sand.u32 %s247, 1
        %s3373 = scalar_lea.sflag [#allocation3], %s3372
        %s3374 = sand.u32 %s247, 1
        %s3375 = smul.addr %s3374, 32
        %s3376 = scalar_lea.vmem [#allocation2], %s3375
        // Predicated region
        $region61: #{seq_classifier_forward.1} parent=59 // pred_check
          %p3377 = pneg %p257
        $region62: #{seq_classifier_forward.1} parent=59 // pred_check_branch
          %3379 = sbr.rel (%p3377) target = $region64
        $region63: #{seq_classifier_forward.1} parent=59 // pred_region
          %s3381 = ssub.s32 512, 512
          %3382 = vsyncadd %s3373, %s3381
          %s3383 = smul.addr %s24, 4
          %s3384 = smul.addr %s3383, 128
          %s3385 = scalar_lea.hbm %s10, %s3384
          %s3386 = sshll.u32 %s3376, 4
          %s3387 = int_to_ptr.vmem [resolvable:$true] %s3386
          %3392 = dma.vmem_to_hbm [thread:$0]  %s3387, 512, %s3385, %s3373, 128, 128, 8
        $region64: #{seq_classifier_forward.1} parent=59 // pred_fallthru
          _
      $region60: #{seq_classifier_forward.1} parent=5 // pred_fallthru
        _
      %p3393 = scmp.le.s32.totalorder 2, %s19
      // Predicated region
      $region65: #{seq_classifier_forward.1} parent=5 // pred_check
        %p3394 = pneg %p3393
      $region66: #{seq_classifier_forward.1} parent=5 // pred_check_branch
        %3396 = sbr.rel (%p3394) target = $region68
      $region67: #{seq_classifier_forward.1} parent=5 // pred_region
        %s3397 = ssub.s32 %s19, 2
        // Predicated region
        $region69: #{seq_classifier_forward.1} parent=67 // pred_check
          %p3398 = pneg %p263
        $region70: #{seq_classifier_forward.1} parent=67 // pred_check_branch
          %3400 = sbr.rel (%p3398) target = $region72
        $region71: #{seq_classifier_forward.1} parent=67 // pred_region
          %s3401 = sand.u32 %s248, 1
          %s3402 = scalar_lea.sflag [#allocation3], %s3401
          %s3403 = sand.u32 %s248, 1
          %s3404 = smul.addr %s3403, 32
          %s3405 = scalar_lea.vmem [#allocation2], %s3404
          %3406 = dma.done %s3402, 512
        $region72: #{seq_classifier_forward.1} parent=67 // pred_fallthru
          _
      $region68: #{seq_classifier_forward.1} parent=5 // pred_fallthru
        _
    $region6: #{seq_classifier_forward.1} parent=1 // loop_footer
      %s23 = sadd.s32 1, %s19
    $region7: #{seq_classifier_forward.1} parent=1 // loop_footer_branch
      %18 = sbr.rel target = $region3
    $region8: #{seq_classifier_forward.1} parent=1 // loop_exit
      _
    %3407 = vsyncpa [#allocation3], 1
    %s3408 = scalar_lea.sflag [#allocation3], 1
    %3409 = vsyncpa %s3408, 1

</llo_original>
